<compile_context>
chip_gen: v6e
topology: v6e:2x2x1
jax: 0.10.0
libtpu: 0.0.40
codegen_flags: <defaults>
</compile_context>

<pallas_src>
import functools

import jax
import jax.numpy as jnp
from jax import lax
from jax.experimental import pallas as pl
from jax.experimental.pallas import tpu as pltpu


# ----------------------------------------------------------------------------
# Small helpers
# ----------------------------------------------------------------------------
def _round_up(n, m):
  return ((n + m - 1) // m) * m


def _pick_tile(n, align, cap):
  """Return (padded_n, tile): padded_n % tile == 0, tile aligned, tile <= cap."""
  n_al = _round_up(n, align)
  if n_al <= cap:
    return n_al, n_al
  return _round_up(n_al, cap), cap


def _vmem_budget():
  """Usable scoped-VMEM budget, derived from the actual chip (v7x has 64 MiB)."""
  try:
    cap = int(pltpu.get_tpu_info().vmem_capacity_bytes)
  except Exception:
    cap = 64 << 20                      # conservative fallback (fits v7x)
  return int(min(max(cap - (16 << 20), 16 << 20), 112 << 20))


def _rnn_vmem_need(tt, b, e, h, num_layers, lr):
  stream = 2 * (tt * b * e * 2 + tt * b * h * 2)              # dbl-buffered x / y
  weights = 2 * (e * h * 2 + lr * h * h * 2 + num_layers * h * h * 2
                 + num_layers * h * 4 + num_layers * b * h * 4)
  outs = 2 * num_layers * b * h * 4                           # hT
  scratch = num_layers * b * h * 4 + tt * b * h * 2 + tt * b * h * 4
  return stream + weights + outs + scratch + (2 << 20)


def _rnn_vmem_limit(tt, b, e, h, num_layers, lr, budget):
  return int(min(max(_rnn_vmem_need(tt, b, e, h, num_layers, lr), 16 << 20),
                 budget))


def _pick_time_chunk(t, b, e, h, num_layers, lr, budget):
  """Largest time chunk (<=256) whose footprint fits the VMEM budget."""
  tt = min(t, 256)
  while tt > 8 and _rnn_vmem_need(tt, b, e, h, num_layers, lr) > budget:
    tt = max(tt // 2, 8)
  return max(tt, 1)


def _fc_vmem_limit(tn, h, tv, budget):
  need = 2 * (tn * h * 2 + h * tv * 2 + tv * 4 + tn * tv * 4) + (2 << 20)
  return int(min(max(need, 16 << 20), budget))


# ----------------------------------------------------------------------------
# Pallas kernels
# ----------------------------------------------------------------------------
def _fused_rnn_kernel(x_ref, wih0_ref, wihr_ref, whh_ref, b_ref, h0_ref,
                      y_ref, hT_ref, h_scr, act_scr, pre_scr, *, t_real):
  """All L vanilla-RNN (tanh) layers for one time chunk.

  x_ref   : (tt, B, E)        bf16  chunk of embeddings (pipelined over time)
  wih0_ref: (E, H)            bf16  layer-0 W_ih^T (padded)
  wihr_ref: (max(L-1,1),H,H)  bf16  layers 1..L-1 W_ih^T
  whh_ref : (L, H, H)         bf16  W_hh^T
  b_ref   : (L, 1, H)         f32   b_ih + b_hh
  h0_ref  : (L, B, H)         f32   initial hidden state
  y_ref   : (tt, B, H)        bf16  last-layer hidden states of this chunk
  hT_ref  : (L, B, H)         f32   final hidden states (written on last chunk)
  h_scr   : (L, B, H)         f32   carried hidden states across chunks
  act_scr : (tt, B, H)        bf16  inter-layer activations (stay in VMEM)
  pre_scr : (tt, B, H)        f32   hoisted input projection of current layer
  """
  tt, b, e = x_ref.shape
  num_layers, _, h_dim = whh_ref.shape
  chunk = pl.program_id(0)
  chunk_base = chunk * tt
  needs_mask = (t_real % tt) != 0       # static: only when T was padded

  @pl.when(chunk == 0)
  def _():
    h_scr[...] = h0_ref[...]

  unroll = True if tt <= 16 else 8

  for l in range(num_layers):
    is_last = (l == num_layers - 1)

    # Hoisted input projection: one MXU GEMM for the whole chunk.
    if l == 0:
      src2d = x_ref[...].reshape(tt * b, e)
      pre = jnp.dot(src2d, wih0_ref[...], preferred_element_type=jnp.float32)
    else:
      src2d = act_scr[...].reshape(tt * b, h_dim)
      pre = jnp.dot(src2d, wihr_ref[l - 1], preferred_element_type=jnp.float32)
    pre_scr[...] = pre.reshape(tt, b, h_dim) + b_ref[l]

    def step(t, carry, l=l, is_last=is_last):
      h_f32, h_bf = carry
      cand = jnp.tanh(pre_scr[t]
                      + jnp.dot(h_bf, whh_ref[l],
                                preferred_element_type=jnp.float32))
      if needs_mask:
        valid = (chunk_base + t) < t_real
        h_new = jnp.where(valid, cand, h_f32)   # freeze h on padded steps
      else:
        h_new = cand
      h_new_bf = h_new.astype(jnp.bfloat16)     # single cast, reused below
      if is_last:
        y_ref[t] = h_new_bf
      else:
        act_scr[t] = h_new_bf
      return (h_new, h_new_bf)

    h_init = h_scr[l]
    h_fin, _ = lax.fori_loop(0, tt, step,
                             (h_init, h_init.astype(jnp.bfloat16)),
                             unroll=unroll)
    h_scr[l] = h_fin

  @pl.when(chunk == pl.num_programs(0) - 1)
  def _():
    hT_ref[...] = h_scr[...]


def _fc_kernel(x_ref, w_ref, b_ref, o_ref):
  """One (tn, H) x (H, tv) tile of the output projection, lane-dense output."""
  o_ref[...] = (jnp.dot(x_ref[...], w_ref[...],
                        preferred_element_type=jnp.float32)
                + b_ref[...]).astype(o_ref.dtype)


# ----------------------------------------------------------------------------
# pallas_call wrappers
# ----------------------------------------------------------------------------
def _fused_rnn(x_tm, w_ih0, w_ih_rest, w_hh, bias, h0, *, tt, t_real, budget):
  t_pad, b, e = x_tm.shape
  num_layers, _, h = w_hh.shape
  lr = w_ih_rest.shape[0]
  kernel = functools.partial(_fused_rnn_kernel, t_real=t_real)
  return pl.pallas_call(
      kernel,
      grid_spec=pltpu.PrefetchScalarGridSpec(
          num_scalar_prefetch=0,
          grid=(t_pad // tt,),
          in_specs=[
              pl.BlockSpec((tt, b, e), lambda i: (i, 0, 0)),
              pl.BlockSpec((e, h), lambda i: (0, 0)),
              pl.BlockSpec((lr, h, h), lambda i: (0, 0, 0)),
              pl.BlockSpec((num_layers, h, h), lambda i: (0, 0, 0)),
              pl.BlockSpec((num_layers, 1, h), lambda i: (0, 0, 0)),
              pl.BlockSpec((num_layers, b, h), lambda i: (0, 0, 0)),
          ],
          out_specs=(
              pl.BlockSpec((tt, b, h), lambda i: (i, 0, 0)),
              pl.BlockSpec((num_layers, b, h), lambda i: (0, 0, 0)),
          ),
          scratch_shapes=[
              pltpu.VMEM((num_layers, b, h), jnp.float32),   # carried hidden
              pltpu.VMEM((tt, b, h), jnp.bfloat16),          # inter-layer acts
              pltpu.VMEM((tt, b, h), jnp.float32),           # hoisted projection
          ],
      ),
      out_shape=(jax.ShapeDtypeStruct((t_pad, b, h), jnp.bfloat16),
                 jax.ShapeDtypeStruct((num_layers, b, h), jnp.float32)),
      compiler_params=pltpu.CompilerParams(
          dimension_semantics=("arbitrary",),                # serial recurrence
          vmem_limit_bytes=_rnn_vmem_limit(tt, b, e, h, num_layers, lr, budget),
      ),
  )(x_tm, w_ih0, w_ih_rest, w_hh, bias, h0)


def _fc(x, w_t, b, tn, tv, budget):
  n, h = x.shape
  v = w_t.shape[1]
  # Vocab tiles on the OUTER grid axis: the (h, tv) weight tile stays resident
  # while the small (tn, h) activation tiles stream -> W is read once per tv
  # column stripe instead of N/tn times.
  # TODO(synk): tile the contraction (h) axis too for very large hidden dims.
  return pl.pallas_call(
      _fc_kernel,
      grid_spec=pltpu.PrefetchScalarGridSpec(
          num_scalar_prefetch=0,
          grid=(v // tv, n // tn),
          in_specs=[
              pl.BlockSpec((tn, h), lambda j, i: (i, 0)),
              pl.BlockSpec((h, tv), lambda j, i: (0, j)),
              pl.BlockSpec((1, tv), lambda j, i: (0, j)),
          ],
          out_specs=pl.BlockSpec((tn, tv), lambda j, i: (i, j)),
      ),
      out_shape=jax.ShapeDtypeStruct((n, v), jnp.float32),
      compiler_params=pltpu.CompilerParams(
          dimension_semantics=("parallel", "parallel"),
          vmem_limit_bytes=_fc_vmem_limit(tn, h, tv, budget),
      ),
  )(x, w_t, b)


# ----------------------------------------------------------------------------
# One-time parameter preparation: pad, transpose, stack, cast (OUTSIDE forward)
# ----------------------------------------------------------------------------
def prepare_params(raw, dims):
  V, E, H, L = dims
  bf = jnp.bfloat16
  E_pad = _round_up(E, 128)
  H_pad = _round_up(H, 128)
  V_pad, _ = _pick_tile(V, 128, 1024)

  emb = jnp.zeros((raw["embedding"].shape[0], E_pad), bf)
  emb = emb.at[:, :E].set(raw["embedding"].astype(bf))

  Lr = max(L - 1, 1)
  w_ih0 = jnp.zeros((E_pad, H_pad), bf).at[:E, :H].set(
      raw["rnn"][0]["w_ih"].T.astype(bf))
  w_ih_rest = jnp.zeros((Lr, H_pad, H_pad), bf)
  w_hh = jnp.zeros((L, H_pad, H_pad), bf)
  bias = jnp.zeros((L, 1, H_pad), jnp.float32)
  for l, lp in enumerate(raw["rnn"]):
    if l > 0:
      w_ih_rest = w_ih_rest.at[l - 1, :H, :H].set(lp["w_ih"].T.astype(bf))
    w_hh = w_hh.at[l, :H, :H].set(lp["w_hh"].T.astype(bf))
    bias = bias.at[l, 0, :H].set(lp["b_ih"] + lp["b_hh"])

  fc_w_t = jnp.zeros((H_pad, V_pad), bf).at[:H, :V].set(raw["fc_w"].T.astype(bf))
  fc_b = jnp.zeros((1, V_pad), jnp.float32).at[0, :V].set(raw["fc_b"])
  return dict(embedding=emb, w_ih0=w_ih0, w_ih_rest=w_ih_rest, w_hh=w_hh,
              bias=bias, fc_w_t=fc_w_t, fc_b=fc_b)


# ----------------------------------------------------------------------------
# Model forward (glue in plain JAX, hot path in Pallas)
# ----------------------------------------------------------------------------
@functools.partial(jax.jit, static_argnames=("dims",))
def rnn_lm_forward(params, input_ids, dims, hidden=None):
  V, E, H, L = dims
  B, T = input_ids.shape
  E_pad = params["w_ih0"].shape[0]
  H_pad = params["w_hh"].shape[2]
  V_pad = params["fc_w_t"].shape[1]
  Lr = params["w_ih_rest"].shape[0]
  B_pad = max(_round_up(B, 16), 16)          # bf16 native (16,128) tile

  budget = _vmem_budget()
  tt = _pick_time_chunk(T, B_pad, E_pad, H_pad, L, Lr, budget)
  T_pad = _round_up(T, tt)

  # Embedding lookup (gather); transpose folded into the gather -> (T, B, E).
  x_tm = jnp.take(params["embedding"], input_ids.T, axis=0)
  x_tm = jnp.pad(x_tm, ((0, T_pad - T), (0, B_pad - B), (0, 0)))

  if hidden is None:
    h0 = jnp.zeros((L, B_pad, H_pad), jnp.float32)
  else:
    h0 = jnp.zeros((L, B_pad, H_pad), jnp.float32).at[:, :B, :H].set(
        hidden.astype(jnp.float32))

  # Fused L-layer RNN: inter-layer activations never leave VMEM.
  y, hT = _fused_rnn(x_tm, params["w_ih0"], params["w_ih_rest"], params["w_hh"],
                     params["bias"], h0, tt=tt, t_real=T, budget=budget)
  hidden_out = hT[:, :B, :H]                                   # (L, B, H)
  # nn.RNN inter-layer dropout and self.dropout(x): identity in eval mode.

  # Transpose the SMALL (T,B,H) features so logits come out directly (B,T,V).
  feats = jnp.transpose(y[:T], (1, 0, 2)).reshape(B_pad * T, H_pad)   # bf16
  N = B_pad * T
  N_pad, tn = _pick_tile(N, 16, 512)
  tv = min(V_pad, 1024)
  if N_pad > N:
    feats = jnp.pad(feats, ((0, N_pad - N), (0, 0)))

  logits_pad = _fc(feats, params["fc_w_t"], params["fc_b"], tn, tv, budget)
  logits = logits_pad[:N].reshape(B_pad, T, V_pad)[:B, :, :V]   # (B, T, V) f32
  return logits, hidden_out


# ----------------------------------------------------------------------------
# Pure-JAX reference (mirrors the kernel's bf16-operand / f32-accumulate math)
# ----------------------------------------------------------------------------
def rnn_lm_reference(raw, input_ids, hidden=None):
  bf = jnp.bfloat16
  x = jnp.take(raw["embedding"].astype(bf), input_ids, axis=0)  # (B, T, E)
  B, T, _ = x.shape
  L = len(raw["rnn"])
  H = raw["rnn"][0]["w_hh"].shape[0]
  if hidden is None:
    hidden = jnp.zeros((L, B, H), jnp.float32)
  final_h = []
  layer_in = x
  for l, lp in enumerate(raw["rnn"]):
    w_ih_t = lp["w_ih"].T.astype(bf)
    w_hh_t = lp["w_hh"].T.astype(bf)
    bias = (lp["b_ih"] + lp["b_hh"]).astype(jnp.float32)
    h = hidden[l].astype(jnp.float32)
    outs = []
    for t in range(T):
      pre = (jnp.dot(layer_in[:, t, :], w_ih_t, preferred_element_type=jnp.float32)
             + jnp.dot(h.astype(bf), w_hh_t, preferred_element_type=jnp.float32)
             + bias)
      h = jnp.tanh(pre)
      outs.append(h.astype(bf))
    layer_in = jnp.stack(outs, axis=1)
    final_h.append(h)
  logits = (jnp.dot(layer_in.reshape(B * T, H), raw["fc_w"].T.astype(bf),
                    preferred_element_type=jnp.float32)
            + raw["fc_b"]).reshape(B, T, -1)
  return logits, jnp.stack(final_h, axis=0)


# ----------------------------------------------------------------------------
# Deterministic parameter init (shapes match the PyTorch module)
# ----------------------------------------------------------------------------
def init_params(key, vocab_size, embed_dim, hidden_dim, num_layers, pad_token_id):
  keys = jax.random.split(key, 3 + 4 * num_layers)
  k_emb, k_fcw, k_fcb = keys[0], keys[1], keys[2]
  emb = jax.random.normal(k_emb, (vocab_size, embed_dim), jnp.float32)
  emb = emb.at[pad_token_id].set(0.0)               # padding_idx row is zero

  scale = 1.0 / float(jnp.sqrt(hidden_dim))
  rnn_layers = []
  for l in range(num_layers):
    din = embed_dim if l == 0 else hidden_dim
    k = keys[3 + 4 * l: 3 + 4 * (l + 1)]
    rnn_layers.append(dict(
        w_ih=jax.random.uniform(k[0], (hidden_dim, din), jnp.float32, -scale, scale),
        w_hh=jax.random.uniform(k[1], (hidden_dim, hidden_dim), jnp.float32, -scale, scale),
        b_ih=jax.random.uniform(k[2], (hidden_dim,), jnp.float32, -scale, scale),
        b_hh=jax.random.uniform(k[3], (hidden_dim,), jnp.float32, -scale, scale),
    ))
  fc_w = jax.random.uniform(k_fcw, (vocab_size, hidden_dim), jnp.float32, -scale, scale)
  fc_b = jax.random.uniform(k_fcb, (vocab_size,), jnp.float32, -scale, scale)
  return dict(embedding=emb, rnn=rnn_layers, fc_w=fc_w, fc_b=fc_b)


# ----------------------------------------------------------------------------
if __name__ == "__main__":
  VOCAB, EMBED, HIDDEN, LAYERS, PAD = 64, 32, 32, 2, 0
  B, T = 2, 8
  DIMS = (VOCAB, EMBED, HIDDEN, LAYERS)

  key = jax.random.PRNGKey(0)
  k_params, k_ids = jax.random.split(key)
  raw = init_params(k_params, VOCAB, EMBED, HIDDEN, LAYERS, PAD)
  params = prepare_params(raw, DIMS)
  input_ids = jax.random.randint(k_ids, (B, T), 0, VOCAB, dtype=jnp.int32)

  # Fresh hidden state (first call of generate()).
  logits, hidden = rnn_lm_forward(params, input_ids, dims=DIMS)
  logits = jax.block_until_ready(logits)
  hidden = jax.block_until_ready(hidden)

  ref_logits, ref_hidden = rnn_lm_reference(raw, input_ids)
  assert logits.shape == (B, T, VOCAB)
  assert hidden.shape == (LAYERS, B, HIDDEN)
  assert jnp.allclose(logits, ref_logits, atol=5e-3, rtol=5e-3)
  assert jnp.allclose(hidden, ref_hidden, atol=5e-3, rtol=5e-3)

  # Carried hidden state (decode steps of generate() / predict_next_token).
  logits2, hidden2 = rnn_lm_forward(params, input_ids, dims=DIMS, hidden=hidden)
  logits2 = jax.block_until_ready(logits2)
  hidden2 = jax.block_until_ready(hidden2)
  ref_logits2, ref_hidden2 = rnn_lm_reference(raw, input_ids, hidden)
  assert jnp.allclose(logits2, ref_logits2, atol=5e-3, rtol=5e-3)
  assert jnp.allclose(hidden2, ref_hidden2, atol=5e-3, rtol=5e-3)

  print("KERNEL_OK")
</pallas_src>

<mosaic_0001>
module attributes {stable_mosaic.version = 11 : i64} {
  func.func @_fc_kernel(%arg0: i32, %arg1: i32, %arg2: memref<128x128xbf16, #tpu.memory_space<vmem>>, %arg3: memref<128x128xbf16, #tpu.memory_space<vmem>>, %arg4: memref<1x128xf32, #tpu.memory_space<vmem>>, %arg5: memref<128x128xf32, #tpu.memory_space<vmem>>) attributes {dimension_semantics = [#tpu.dimension_semantics<parallel>, #tpu.dimension_semantics<parallel>], iteration_bounds = array<i64: 1, 1>, scalar_prefetch = 0 : i64, scratch_operands = 0 : i64, tpu.core_type = #tpu.core_type<tc>, window_params = [{transform_indices = @transform_0, window_bounds = array<i64: 128, 128>}, {transform_indices = @transform_1, window_bounds = array<i64: 128, 128>}, {transform_indices = @transform_2, window_bounds = array<i64: 1, 128>}, {transform_indices = @transform_3, window_bounds = array<i64: 128, 128>}]} {
    %c0 = arith.constant 0 : index
    %c0_0 = arith.constant 0 : index
    %0 = vector.load %arg2[%c0, %c0_0] : memref<128x128xbf16, #tpu.memory_space<vmem>>, vector<128x128xbf16>
    %c0_1 = arith.constant 0 : index
    %c0_2 = arith.constant 0 : index
    %1 = vector.load %arg3[%c0_1, %c0_2] : memref<128x128xbf16, #tpu.memory_space<vmem>>, vector<128x128xbf16>
    %cst = arith.constant dense<0.000000e+00> : vector<128x128xf32>
    %2 = tpu.matmul %0, %1, %cst {dimension_numbers = #tpu.dot_dimension_numbers<[1], [0], [0], [1], [0, 0, 1, 1], [], []>} : vector<128x128xbf16>, vector<128x128xbf16>, vector<128x128xf32> -> vector<128x128xf32>
    %c0_3 = arith.constant 0 : index
    %c0_4 = arith.constant 0 : index
    %3 = vector.load %arg4[%c0_3, %c0_4] : memref<1x128xf32, #tpu.memory_space<vmem>>, vector<1x128xf32>
    %4 = vector.broadcast %3 : vector<1x128xf32> to vector<128x128xf32>
    %5 = arith.addf %2, %4 : vector<128x128xf32>
    %c0_5 = arith.constant 0 : index
    %c0_6 = arith.constant 0 : index
    %6 = vector.load %arg5[%c0_5, %c0_6] : memref<128x128xf32, #tpu.memory_space<vmem>>, vector<128x128xf32>
    tpu.vector_store %arg5[%c0_5, %c0_6], %5 {strides = array<i32>} : memref<128x128xf32, #tpu.memory_space<vmem>>, vector<128x128xf32>,
    return
  }
  func.func @transform_0(%arg0: i32, %arg1: i32) -> (i32, i32) {
    %c0_i32 = arith.constant 0 : i32
    %c0_i32_0 = arith.constant 0 : i32
    return %arg1, %c0_i32 : i32, i32
  }
  func.func @transform_1(%arg0: i32, %arg1: i32) -> (i32, i32) {
    %c0_i32 = arith.constant 0 : i32
    %c0_i32_0 = arith.constant 0 : i32
    return %c0_i32, %arg0 : i32, i32
  }
  func.func @transform_2(%arg0: i32, %arg1: i32) -> (i32, i32) {
    %c0_i32 = arith.constant 0 : i32
    %c0_i32_0 = arith.constant 0 : i32
    return %c0_i32, %arg0 : i32, i32
  }
  func.func @transform_3(%arg0: i32, %arg1: i32) -> (i32, i32) {
    %c0_i32 = arith.constant 0 : i32
    return %arg1, %arg0 : i32, i32
  }
}

module attributes {stable_mosaic.version = 11 : i64} {
  func.func @_fused_rnn_kernel(%arg0: i32, %arg1: memref<8x16x128xbf16, #tpu.memory_space<vmem>>, %arg2: memref<128x128xbf16, #tpu.memory_space<vmem>>, %arg3: memref<1x128x128xbf16, #tpu.memory_space<vmem>>, %arg4: memref<2x128x128xbf16, #tpu.memory_space<vmem>>, %arg5: memref<2x1x128xf32, #tpu.memory_space<vmem>>, %arg6: memref<2x16x128xf32, #tpu.memory_space<vmem>>, %arg7: memref<8x16x128xbf16, #tpu.memory_space<vmem>>, %arg8: memref<2x16x128xf32, #tpu.memory_space<vmem>>, %arg9: memref<2x16x128xf32, #tpu.memory_space<vmem>>, %arg10: memref<8x16x128xbf16, #tpu.memory_space<vmem>>, %arg11: memref<8x16x128xf32, #tpu.memory_space<vmem>>) attributes {dimension_semantics = [#tpu.dimension_semantics<arbitrary>], iteration_bounds = array<i64: 1>, scalar_prefetch = 0 : i64, scratch_operands = 3 : i64, tpu.core_type = #tpu.core_type<tc>, window_params = [{transform_indices = @transform_0, window_bounds = array<i64: 8, 16, 128>}, {pipeline_mode = #tpu.pipeline_mode<synchronous>, transform_indices = @transform_1, window_bounds = array<i64: 128, 128>}, {pipeline_mode = #tpu.pipeline_mode<synchronous>, transform_indices = @transform_2, window_bounds = array<i64: 1, 128, 128>}, {pipeline_mode = #tpu.pipeline_mode<synchronous>, transform_indices = @transform_3, window_bounds = array<i64: 2, 128, 128>}, {pipeline_mode = #tpu.pipeline_mode<synchronous>, transform_indices = @transform_4, window_bounds = array<i64: 2, 1, 128>}, {pipeline_mode = #tpu.pipeline_mode<synchronous>, transform_indices = @transform_5, window_bounds = array<i64: 2, 16, 128>}, {transform_indices = @transform_6, window_bounds = array<i64: 8, 16, 128>}, {pipeline_mode = #tpu.pipeline_mode<synchronous>, transform_indices = @transform_7, window_bounds = array<i64: 2, 16, 128>}]} {
    %c0_i32 = arith.constant 0 : i32
    %0 = arith.cmpi eq, %arg0, %c0_i32 : i32
    %1 = arith.extui %0 : i1 to i32
    %c0_i32_0 = arith.constant 0 : i32
    %2 = arith.cmpi ne, %1, %c0_i32_0 : i32
    scf.if %2 {
      %c0_175 = arith.constant 0 : index
      %c0_176 = arith.constant 0 : index
      %c0_177 = arith.constant 0 : index
      %249 = vector.load %arg6[%c0_175, %c0_176, %c0_177] : memref<2x16x128xf32, #tpu.memory_space<vmem>>, vector<2x16x128xf32>
      %c0_178 = arith.constant 0 : index
      %c0_179 = arith.constant 0 : index
      %c0_180 = arith.constant 0 : index
      %250 = vector.load %arg9[%c0_178, %c0_179, %c0_180] : memref<2x16x128xf32, #tpu.memory_space<vmem>>, vector<2x16x128xf32>
      tpu.vector_store %arg9[%c0_178, %c0_179, %c0_180], %249 {strides = array<i32>} : memref<2x16x128xf32, #tpu.memory_space<vmem>>, vector<2x16x128xf32>,
    } else {
    }
    %c0 = arith.constant 0 : index
    %c0_1 = arith.constant 0 : index
    %c0_2 = arith.constant 0 : index
    %3 = vector.load %arg1[%c0, %c0_1, %c0_2] : memref<8x16x128xbf16, #tpu.memory_space<vmem>>, vector<8x16x128xbf16>
    %4 = vector.shape_cast %3 : vector<8x16x128xbf16> to vector<128x128xbf16>
    %c0_3 = arith.constant 0 : index
    %c0_4 = arith.constant 0 : index
    %5 = vector.load %arg2[%c0_3, %c0_4] : memref<128x128xbf16, #tpu.memory_space<vmem>>, vector<128x128xbf16>
    %cst = arith.constant dense<0.000000e+00> : vector<128x128xf32>
    %6 = tpu.matmul %4, %5, %cst {dimension_numbers = #tpu.dot_dimension_numbers<[1], [0], [0], [1], [0, 0, 1, 1], [], []>} : vector<128x128xbf16>, vector<128x128xbf16>, vector<128x128xf32> -> vector<128x128xf32>
    %7 = vector.shape_cast %6 : vector<128x128xf32> to vector<8x16x128xf32>
    %c0_5 = arith.constant 0 : index
    %c0_6 = arith.constant 0 : index
    %c0_7 = arith.constant 0 : index
    %8 = vector.load %arg5[%c0_5, %c0_6, %c0_7] : memref<2x1x128xf32, #tpu.memory_space<vmem>>, vector<1x1x128xf32>
    %9 = vector.shape_cast %8 : vector<1x1x128xf32> to vector<1x128xf32>
    %10 = vector.shape_cast %9 : vector<1x128xf32> to vector<1x1x128xf32>
    %11 = vector.broadcast %10 : vector<1x1x128xf32> to vector<8x16x128xf32>
    %12 = arith.addf %7, %11 : vector<8x16x128xf32>
    %c0_8 = arith.constant 0 : index
    %c0_9 = arith.constant 0 : index
    %c0_10 = arith.constant 0 : index
    %13 = vector.load %arg11[%c0_8, %c0_9, %c0_10] : memref<8x16x128xf32, #tpu.memory_space<vmem>>, vector<8x16x128xf32>
    tpu.vector_store %arg11[%c0_8, %c0_9, %c0_10], %12 {strides = array<i32>} : memref<8x16x128xf32, #tpu.memory_space<vmem>>, vector<8x16x128xf32>,
    %c0_11 = arith.constant 0 : index
    %c0_12 = arith.constant 0 : index
    %c0_13 = arith.constant 0 : index
    %14 = vector.load %arg9[%c0_11, %c0_12, %c0_13] : memref<2x16x128xf32, #tpu.memory_space<vmem>>, vector<1x16x128xf32>
    %15 = vector.shape_cast %14 : vector<1x16x128xf32> to vector<16x128xf32>
    %16 = arith.truncf %15 : vector<16x128xf32> to vector<16x128xbf16>
    %c0_i32_14 = arith.constant 0 : i32
    %17 = arith.index_cast %c0_i32_14 : i32 to index
    %c0_15 = arith.constant 0 : index
    %c0_16 = arith.constant 0 : index
    %18 = vector.load %arg11[%17, %c0_15, %c0_16] : memref<8x16x128xf32, #tpu.memory_space<vmem>>, vector<1x16x128xf32>
    %19 = vector.shape_cast %18 : vector<1x16x128xf32> to vector<16x128xf32>
    %c0_17 = arith.constant 0 : index
    %c0_18 = arith.constant 0 : index
    %c0_19 = arith.constant 0 : index
    %20 = vector.load %arg4[%c0_17, %c0_18, %c0_19] : memref<2x128x128xbf16, #tpu.memory_space<vmem>>, vector<1x128x128xbf16>
    %21 = vector.shape_cast %20 : vector<1x128x128xbf16> to vector<128x128xbf16>
    %cst_20 = arith.constant dense<0.000000e+00> : vector<16x128xf32>
    %22 = tpu.matmul %16, %21, %cst_20 {dimension_numbers = #tpu.dot_dimension_numbers<[1], [0], [0], [1], [0, 0, 1, 1], [], []>} : vector<16x128xbf16>, vector<128x128xbf16>, vector<16x128xf32> -> vector<16x128xf32>
    %23 = arith.addf %19, %22 : vector<16x128xf32>
    %24 = math.tanh %23 : vector<16x128xf32>
    %25 = arith.truncf %24 : vector<16x128xf32> to vector<16x128xbf16>
    %26 = arith.index_cast %c0_i32_14 : i32 to index
    %c0_21 = arith.constant 0 : index
    %c0_22 = arith.constant 0 : index
    %27 = vector.load %arg10[%26, %c0_21, %c0_22] : memref<8x16x128xbf16, #tpu.memory_space<vmem>>, vector<1x16x128xbf16>
    %28 = vector.shape_cast %27 : vector<1x16x128xbf16> to vector<16x128xbf16>
    %29 = vector.shape_cast %25 : vector<16x128xbf16> to vector<1x16x128xbf16>
    tpu.vector_store %arg10[%26, %c0_21, %c0_22], %29 {strides = array<i32>} : memref<8x16x128xbf16, #tpu.memory_space<vmem>>, vector<1x16x128xbf16>,
    %c1_i32 = arith.constant 1 : i32
    %30 = arith.index_cast %c1_i32 : i32 to index
    %c0_23 = arith.constant 0 : index
    %c0_24 = arith.constant 0 : index
    %31 = vector.load %arg11[%30, %c0_23, %c0_24] : memref<8x16x128xf32, #tpu.memory_space<vmem>>, vector<1x16x128xf32>
    %32 = vector.shape_cast %31 : vector<1x16x128xf32> to vector<16x128xf32>
    %c0_25 = arith.constant 0 : index
    %c0_26 = arith.constant 0 : index
    %c0_27 = arith.constant 0 : index
    %33 = vector.load %arg4[%c0_25, %c0_26, %c0_27] : memref<2x128x128xbf16, #tpu.memory_space<vmem>>, vector<1x128x128xbf16>
    %34 = vector.shape_cast %33 : vector<1x128x128xbf16> to vector<128x128xbf16>
    %cst_28 = arith.constant dense<0.000000e+00> : vector<16x128xf32>
    %35 = tpu.matmul %25, %34, %cst_28 {dimension_numbers = #tpu.dot_dimension_numbers<[1], [0], [0], [1], [0, 0, 1, 1], [], []>} : vector<16x128xbf16>, vector<128x128xbf16>, vector<16x128xf32> -> vector<16x128xf32>
    %36 = arith.addf %32, %35 : vector<16x128xf32>
    %37 = math.tanh %36 : vector<16x128xf32>
    %38 = arith.truncf %37 : vector<16x128xf32> to vector<16x128xbf16>
    %39 = arith.index_cast %c1_i32 : i32 to index
    %c0_29 = arith.constant 0 : index
    %c0_30 = arith.constant 0 : index
    %40 = vector.load %arg10[%39, %c0_29, %c0_30] : memref<8x16x128xbf16, #tpu.memory_space<vmem>>, vector<1x16x128xbf16>
    %41 = vector.shape_cast %40 : vector<1x16x128xbf16> to vector<16x128xbf16>
    %42 = vector.shape_cast %38 : vector<16x128xbf16> to vector<1x16x128xbf16>
    tpu.vector_store %arg10[%39, %c0_29, %c0_30], %42 {strides = array<i32>} : memref<8x16x128xbf16, #tpu.memory_space<vmem>>, vector<1x16x128xbf16>,
    %c2_i32 = arith.constant 2 : i32
    %43 = arith.index_cast %c2_i32 : i32 to index
    %c0_31 = arith.constant 0 : index
    %c0_32 = arith.constant 0 : index
    %44 = vector.load %arg11[%43, %c0_31, %c0_32] : memref<8x16x128xf32, #tpu.memory_space<vmem>>, vector<1x16x128xf32>
    %45 = vector.shape_cast %44 : vector<1x16x128xf32> to vector<16x128xf32>
    %c0_33 = arith.constant 0 : index
    %c0_34 = arith.constant 0 : index
    %c0_35 = arith.constant 0 : index
    %46 = vector.load %arg4[%c0_33, %c0_34, %c0_35] : memref<2x128x128xbf16, #tpu.memory_space<vmem>>, vector<1x128x128xbf16>
    %47 = vector.shape_cast %46 : vector<1x128x128xbf16> to vector<128x128xbf16>
    %cst_36 = arith.constant dense<0.000000e+00> : vector<16x128xf32>
    %48 = tpu.matmul %38, %47, %cst_36 {dimension_numbers = #tpu.dot_dimension_numbers<[1], [0], [0], [1], [0, 0, 1, 1], [], []>} : vector<16x128xbf16>, vector<128x128xbf16>, vector<16x128xf32> -> vector<16x128xf32>
    %49 = arith.addf %45, %48 : vector<16x128xf32>
    %50 = math.tanh %49 : vector<16x128xf32>
    %51 = arith.truncf %50 : vector<16x128xf32> to vector<16x128xbf16>
    %52 = arith.index_cast %c2_i32 : i32 to index
    %c0_37 = arith.constant 0 : index
    %c0_38 = arith.constant 0 : index
    %53 = vector.load %arg10[%52, %c0_37, %c0_38] : memref<8x16x128xbf16, #tpu.memory_space<vmem>>, vector<1x16x128xbf16>
    %54 = vector.shape_cast %53 : vector<1x16x128xbf16> to vector<16x128xbf16>
    %55 = vector.shape_cast %51 : vector<16x128xbf16> to vector<1x16x128xbf16>
    tpu.vector_store %arg10[%52, %c0_37, %c0_38], %55 {strides = array<i32>} : memref<8x16x128xbf16, #tpu.memory_space<vmem>>, vector<1x16x128xbf16>,
    %c3_i32 = arith.constant 3 : i32
    %56 = arith.index_cast %c3_i32 : i32 to index
    %c0_39 = arith.constant 0 : index
    %c0_40 = arith.constant 0 : index
    %57 = vector.load %arg11[%56, %c0_39, %c0_40] : memref<8x16x128xf32, #tpu.memory_space<vmem>>, vector<1x16x128xf32>
    %58 = vector.shape_cast %57 : vector<1x16x128xf32> to vector<16x128xf32>
    %c0_41 = arith.constant 0 : index
    %c0_42 = arith.constant 0 : index
    %c0_43 = arith.constant 0 : index
    %59 = vector.load %arg4[%c0_41, %c0_42, %c0_43] : memref<2x128x128xbf16, #tpu.memory_space<vmem>>, vector<1x128x128xbf16>
    %60 = vector.shape_cast %59 : vector<1x128x128xbf16> to vector<128x128xbf16>
    %cst_44 = arith.constant dense<0.000000e+00> : vector<16x128xf32>
    %61 = tpu.matmul %51, %60, %cst_44 {dimension_numbers = #tpu.dot_dimension_numbers<[1], [0], [0], [1], [0, 0, 1, 1], [], []>} : vector<16x128xbf16>, vector<128x128xbf16>, vector<16x128xf32> -> vector<16x128xf32>
    %62 = arith.addf %58, %61 : vector<16x128xf32>
    %63 = math.tanh %62 : vector<16x128xf32>
    %64 = arith.truncf %63 : vector<16x128xf32> to vector<16x128xbf16>
    %65 = arith.index_cast %c3_i32 : i32 to index
    %c0_45 = arith.constant 0 : index
    %c0_46 = arith.constant 0 : index
    %66 = vector.load %arg10[%65, %c0_45, %c0_46] : memref<8x16x128xbf16, #tpu.memory_space<vmem>>, vector<1x16x128xbf16>
    %67 = vector.shape_cast %66 : vector<1x16x128xbf16> to vector<16x128xbf16>
    %68 = vector.shape_cast %64 : vector<16x128xbf16> to vector<1x16x128xbf16>
    tpu.vector_store %arg10[%65, %c0_45, %c0_46], %68 {strides = array<i32>} : memref<8x16x128xbf16, #tpu.memory_space<vmem>>, vector<1x16x128xbf16>,
    %c4_i32 = arith.constant 4 : i32
    %69 = arith.index_cast %c4_i32 : i32 to index
    %c0_47 = arith.constant 0 : index
    %c0_48 = arith.constant 0 : index
    %70 = vector.load %arg11[%69, %c0_47, %c0_48] : memref<8x16x128xf32, #tpu.memory_space<vmem>>, vector<1x16x128xf32>
    %71 = vector.shape_cast %70 : vector<1x16x128xf32> to vector<16x128xf32>
    %c0_49 = arith.constant 0 : index
    %c0_50 = arith.constant 0 : index
    %c0_51 = arith.constant 0 : index
    %72 = vector.load %arg4[%c0_49, %c0_50, %c0_51] : memref<2x128x128xbf16, #tpu.memory_space<vmem>>, vector<1x128x128xbf16>
    %73 = vector.shape_cast %72 : vector<1x128x128xbf16> to vector<128x128xbf16>
    %cst_52 = arith.constant dense<0.000000e+00> : vector<16x128xf32>
    %74 = tpu.matmul %64, %73, %cst_52 {dimension_numbers = #tpu.dot_dimension_numbers<[1], [0], [0], [1], [0, 0, 1, 1], [], []>} : vector<16x128xbf16>, vector<128x128xbf16>, vector<16x128xf32> -> vector<16x128xf32>
    %75 = arith.addf %71, %74 : vector<16x128xf32>
    %76 = math.tanh %75 : vector<16x128xf32>
    %77 = arith.truncf %76 : vector<16x128xf32> to vector<16x128xbf16>
    %78 = arith.index_cast %c4_i32 : i32 to index
    %c0_53 = arith.constant 0 : index
    %c0_54 = arith.constant 0 : index
    %79 = vector.load %arg10[%78, %c0_53, %c0_54] : memref<8x16x128xbf16, #tpu.memory_space<vmem>>, vector<1x16x128xbf16>
    %80 = vector.shape_cast %79 : vector<1x16x128xbf16> to vector<16x128xbf16>
    %81 = vector.shape_cast %77 : vector<16x128xbf16> to vector<1x16x128xbf16>
    tpu.vector_store %arg10[%78, %c0_53, %c0_54], %81 {strides = array<i32>} : memref<8x16x128xbf16, #tpu.memory_space<vmem>>, vector<1x16x128xbf16>,
    %c5_i32 = arith.constant 5 : i32
    %82 = arith.index_cast %c5_i32 : i32 to index
    %c0_55 = arith.constant 0 : index
    %c0_56 = arith.constant 0 : index
    %83 = vector.load %arg11[%82, %c0_55, %c0_56] : memref<8x16x128xf32, #tpu.memory_space<vmem>>, vector<1x16x128xf32>
    %84 = vector.shape_cast %83 : vector<1x16x128xf32> to vector<16x128xf32>
    %c0_57 = arith.constant 0 : index
    %c0_58 = arith.constant 0 : index
    %c0_59 = arith.constant 0 : index
    %85 = vector.load %arg4[%c0_57, %c0_58, %c0_59] : memref<2x128x128xbf16, #tpu.memory_space<vmem>>, vector<1x128x128xbf16>
    %86 = vector.shape_cast %85 : vector<1x128x128xbf16> to vector<128x128xbf16>
    %cst_60 = arith.constant dense<0.000000e+00> : vector<16x128xf32>
    %87 = tpu.matmul %77, %86, %cst_60 {dimension_numbers = #tpu.dot_dimension_numbers<[1], [0], [0], [1], [0, 0, 1, 1], [], []>} : vector<16x128xbf16>, vector<128x128xbf16>, vector<16x128xf32> -> vector<16x128xf32>
    %88 = arith.addf %84, %87 : vector<16x128xf32>
    %89 = math.tanh %88 : vector<16x128xf32>
    %90 = arith.truncf %89 : vector<16x128xf32> to vector<16x128xbf16>
    %91 = arith.index_cast %c5_i32 : i32 to index
    %c0_61 = arith.constant 0 : index
    %c0_62 = arith.constant 0 : index
    %92 = vector.load %arg10[%91, %c0_61, %c0_62] : memref<8x16x128xbf16, #tpu.memory_space<vmem>>, vector<1x16x128xbf16>
    %93 = vector.shape_cast %92 : vector<1x16x128xbf16> to vector<16x128xbf16>
    %94 = vector.shape_cast %90 : vector<16x128xbf16> to vector<1x16x128xbf16>
    tpu.vector_store %arg10[%91, %c0_61, %c0_62], %94 {strides = array<i32>} : memref<8x16x128xbf16, #tpu.memory_space<vmem>>, vector<1x16x128xbf16>,
    %c6_i32 = arith.constant 6 : i32
    %95 = arith.index_cast %c6_i32 : i32 to index
    %c0_63 = arith.constant 0 : index
    %c0_64 = arith.constant 0 : index
    %96 = vector.load %arg11[%95, %c0_63, %c0_64] : memref<8x16x128xf32, #tpu.memory_space<vmem>>, vector<1x16x128xf32>
    %97 = vector.shape_cast %96 : vector<1x16x128xf32> to vector<16x128xf32>
    %c0_65 = arith.constant 0 : index
    %c0_66 = arith.constant 0 : index
    %c0_67 = arith.constant 0 : index
    %98 = vector.load %arg4[%c0_65, %c0_66, %c0_67] : memref<2x128x128xbf16, #tpu.memory_space<vmem>>, vector<1x128x128xbf16>
    %99 = vector.shape_cast %98 : vector<1x128x128xbf16> to vector<128x128xbf16>
    %cst_68 = arith.constant dense<0.000000e+00> : vector<16x128xf32>
    %100 = tpu.matmul %90, %99, %cst_68 {dimension_numbers = #tpu.dot_dimension_numbers<[1], [0], [0], [1], [0, 0, 1, 1], [], []>} : vector<16x128xbf16>, vector<128x128xbf16>, vector<16x128xf32> -> vector<16x128xf32>
    %101 = arith.addf %97, %100 : vector<16x128xf32>
    %102 = math.tanh %101 : vector<16x128xf32>
    %103 = arith.truncf %102 : vector<16x128xf32> to vector<16x128xbf16>
    %104 = arith.index_cast %c6_i32 : i32 to index
    %c0_69 = arith.constant 0 : index
    %c0_70 = arith.constant 0 : index
    %105 = vector.load %arg10[%104, %c0_69, %c0_70] : memref<8x16x128xbf16, #tpu.memory_space<vmem>>, vector<1x16x128xbf16>
    %106 = vector.shape_cast %105 : vector<1x16x128xbf16> to vector<16x128xbf16>
    %107 = vector.shape_cast %103 : vector<16x128xbf16> to vector<1x16x128xbf16>
    tpu.vector_store %arg10[%104, %c0_69, %c0_70], %107 {strides = array<i32>} : memref<8x16x128xbf16, #tpu.memory_space<vmem>>, vector<1x16x128xbf16>,
    %c7_i32 = arith.constant 7 : i32
    %108 = arith.index_cast %c7_i32 : i32 to index
    %c0_71 = arith.constant 0 : index
    %c0_72 = arith.constant 0 : index
    %109 = vector.load %arg11[%108, %c0_71, %c0_72] : memref<8x16x128xf32, #tpu.memory_space<vmem>>, vector<1x16x128xf32>
    %110 = vector.shape_cast %109 : vector<1x16x128xf32> to vector<16x128xf32>
    %c0_73 = arith.constant 0 : index
    %c0_74 = arith.constant 0 : index
    %c0_75 = arith.constant 0 : index
    %111 = vector.load %arg4[%c0_73, %c0_74, %c0_75] : memref<2x128x128xbf16, #tpu.memory_space<vmem>>, vector<1x128x128xbf16>
    %112 = vector.shape_cast %111 : vector<1x128x128xbf16> to vector<128x128xbf16>
    %cst_76 = arith.constant dense<0.000000e+00> : vector<16x128xf32>
    %113 = tpu.matmul %103, %112, %cst_76 {dimension_numbers = #tpu.dot_dimension_numbers<[1], [0], [0], [1], [0, 0, 1, 1], [], []>} : vector<16x128xbf16>, vector<128x128xbf16>, vector<16x128xf32> -> vector<16x128xf32>
    %114 = arith.addf %110, %113 : vector<16x128xf32>
    %115 = math.tanh %114 : vector<16x128xf32>
    %116 = arith.truncf %115 : vector<16x128xf32> to vector<16x128xbf16>
    %117 = arith.index_cast %c7_i32 : i32 to index
    %c0_77 = arith.constant 0 : index
    %c0_78 = arith.constant 0 : index
    %118 = vector.load %arg10[%117, %c0_77, %c0_78] : memref<8x16x128xbf16, #tpu.memory_space<vmem>>, vector<1x16x128xbf16>
    %119 = vector.shape_cast %118 : vector<1x16x128xbf16> to vector<16x128xbf16>
    %120 = vector.shape_cast %116 : vector<16x128xbf16> to vector<1x16x128xbf16>
    tpu.vector_store %arg10[%117, %c0_77, %c0_78], %120 {strides = array<i32>} : memref<8x16x128xbf16, #tpu.memory_space<vmem>>, vector<1x16x128xbf16>,
    %c8_i32 = arith.constant 8 : i32
    %c0_79 = arith.constant 0 : index
    %c0_80 = arith.constant 0 : index
    %c0_81 = arith.constant 0 : index
    %121 = vector.load %arg9[%c0_79, %c0_80, %c0_81] : memref<2x16x128xf32, #tpu.memory_space<vmem>>, vector<1x16x128xf32>
    %122 = vector.shape_cast %121 : vector<1x16x128xf32> to vector<16x128xf32>
    %123 = vector.shape_cast %115 : vector<16x128xf32> to vector<1x16x128xf32>
    tpu.vector_store %arg9[%c0_79, %c0_80, %c0_81], %123 {strides = array<i32>} : memref<2x16x128xf32, #tpu.memory_space<vmem>>, vector<1x16x128xf32>,
    %c0_82 = arith.constant 0 : index
    %c0_83 = arith.constant 0 : index
    %c0_84 = arith.constant 0 : index
    %124 = vector.load %arg10[%c0_82, %c0_83, %c0_84] : memref<8x16x128xbf16, #tpu.memory_space<vmem>>, vector<8x16x128xbf16>
    %125 = vector.shape_cast %124 : vector<8x16x128xbf16> to vector<128x128xbf16>
    %c0_85 = arith.constant 0 : index
    %c0_86 = arith.constant 0 : index
    %c0_87 = arith.constant 0 : index
    %126 = vector.load %arg3[%c0_85, %c0_86, %c0_87] : memref<1x128x128xbf16, #tpu.memory_space<vmem>>, vector<1x128x128xbf16>
    %127 = vector.shape_cast %126 : vector<1x128x128xbf16> to vector<128x128xbf16>
    %cst_88 = arith.constant dense<0.000000e+00> : vector<128x128xf32>
    %128 = tpu.matmul %125, %127, %cst_88 {dimension_numbers = #tpu.dot_dimension_numbers<[1], [0], [0], [1], [0, 0, 1, 1], [], []>} : vector<128x128xbf16>, vector<128x128xbf16>, vector<128x128xf32> -> vector<128x128xf32>
    %129 = vector.shape_cast %128 : vector<128x128xf32> to vector<8x16x128xf32>
    %c1 = arith.constant 1 : index
    %c0_89 = arith.constant 0 : index
    %c0_90 = arith.constant 0 : index
    %130 = vector.load %arg5[%c1, %c0_89, %c0_90] : memref<2x1x128xf32, #tpu.memory_space<vmem>>, vector<1x1x128xf32>
    %131 = vector.shape_cast %130 : vector<1x1x128xf32> to vector<1x128xf32>
    %132 = vector.shape_cast %131 : vector<1x128xf32> to vector<1x1x128xf32>
    %133 = vector.broadcast %132 : vector<1x1x128xf32> to vector<8x16x128xf32>
    %134 = arith.addf %129, %133 : vector<8x16x128xf32>
    %c0_91 = arith.constant 0 : index
    %c0_92 = arith.constant 0 : index
    %c0_93 = arith.constant 0 : index
    %135 = vector.load %arg11[%c0_91, %c0_92, %c0_93] : memref<8x16x128xf32, #tpu.memory_space<vmem>>, vector<8x16x128xf32>
    tpu.vector_store %arg11[%c0_91, %c0_92, %c0_93], %134 {strides = array<i32>} : memref<8x16x128xf32, #tpu.memory_space<vmem>>, vector<8x16x128xf32>,
    %c1_94 = arith.constant 1 : index
    %c0_95 = arith.constant 0 : index
    %c0_96 = arith.constant 0 : index
    %136 = vector.load %arg9[%c1_94, %c0_95, %c0_96] : memref<2x16x128xf32, #tpu.memory_space<vmem>>, vector<1x16x128xf32>
    %137 = vector.shape_cast %136 : vector<1x16x128xf32> to vector<16x128xf32>
    %138 = arith.truncf %137 : vector<16x128xf32> to vector<16x128xbf16>
    %c0_i32_97 = arith.constant 0 : i32
    %139 = arith.index_cast %c0_i32_97 : i32 to index
    %c0_98 = arith.constant 0 : index
    %c0_99 = arith.constant 0 : index
    %140 = vector.load %arg11[%139, %c0_98, %c0_99] : memref<8x16x128xf32, #tpu.memory_space<vmem>>, vector<1x16x128xf32>
    %141 = vector.shape_cast %140 : vector<1x16x128xf32> to vector<16x128xf32>
    %c1_100 = arith.constant 1 : index
    %c0_101 = arith.constant 0 : index
    %c0_102 = arith.constant 0 : index
    %142 = vector.load %arg4[%c1_100, %c0_101, %c0_102] : memref<2x128x128xbf16, #tpu.memory_space<vmem>>, vector<1x128x128xbf16>
    %143 = vector.shape_cast %142 : vector<1x128x128xbf16> to vector<128x128xbf16>
    %cst_103 = arith.constant dense<0.000000e+00> : vector<16x128xf32>
    %144 = tpu.matmul %138, %143, %cst_103 {dimension_numbers = #tpu.dot_dimension_numbers<[1], [0], [0], [1], [0, 0, 1, 1], [], []>} : vector<16x128xbf16>, vector<128x128xbf16>, vector<16x128xf32> -> vector<16x128xf32>
    %145 = arith.addf %141, %144 : vector<16x128xf32>
    %146 = math.tanh %145 : vector<16x128xf32>
    %147 = arith.truncf %146 : vector<16x128xf32> to vector<16x128xbf16>
    %148 = arith.index_cast %c0_i32_97 : i32 to index
    %c0_104 = arith.constant 0 : index
    %c0_105 = arith.constant 0 : index
    %149 = vector.load %arg7[%148, %c0_104, %c0_105] : memref<8x16x128xbf16, #tpu.memory_space<vmem>>, vector<1x16x128xbf16>
    %150 = vector.shape_cast %149 : vector<1x16x128xbf16> to vector<16x128xbf16>
    %151 = vector.shape_cast %147 : vector<16x128xbf16> to vector<1x16x128xbf16>
    tpu.vector_store %arg7[%148, %c0_104, %c0_105], %151 {strides = array<i32>} : memref<8x16x128xbf16, #tpu.memory_space<vmem>>, vector<1x16x128xbf16>,
    %c1_i32_106 = arith.constant 1 : i32
    %152 = arith.index_cast %c1_i32_106 : i32 to index
    %c0_107 = arith.constant 0 : index
    %c0_108 = arith.constant 0 : index
    %153 = vector.load %arg11[%152, %c0_107, %c0_108] : memref<8x16x128xf32, #tpu.memory_space<vmem>>, vector<1x16x128xf32>
    %154 = vector.shape_cast %153 : vector<1x16x128xf32> to vector<16x128xf32>
    %c1_109 = arith.constant 1 : index
    %c0_110 = arith.constant 0 : index
    %c0_111 = arith.constant 0 : index
    %155 = vector.load %arg4[%c1_109, %c0_110, %c0_111] : memref<2x128x128xbf16, #tpu.memory_space<vmem>>, vector<1x128x128xbf16>
    %156 = vector.shape_cast %155 : vector<1x128x128xbf16> to vector<128x128xbf16>
    %cst_112 = arith.constant dense<0.000000e+00> : vector<16x128xf32>
    %157 = tpu.matmul %147, %156, %cst_112 {dimension_numbers = #tpu.dot_dimension_numbers<[1], [0], [0], [1], [0, 0, 1, 1], [], []>} : vector<16x128xbf16>, vector<128x128xbf16>, vector<16x128xf32> -> vector<16x128xf32>
    %158 = arith.addf %154, %157 : vector<16x128xf32>
    %159 = math.tanh %158 : vector<16x128xf32>
    %160 = arith.truncf %159 : vector<16x128xf32> to vector<16x128xbf16>
    %161 = arith.index_cast %c1_i32_106 : i32 to index
    %c0_113 = arith.constant 0 : index
    %c0_114 = arith.constant 0 : index
    %162 = vector.load %arg7[%161, %c0_113, %c0_114] : memref<8x16x128xbf16, #tpu.memory_space<vmem>>, vector<1x16x128xbf16>
    %163 = vector.shape_cast %162 : vector<1x16x128xbf16> to vector<16x128xbf16>
    %164 = vector.shape_cast %160 : vector<16x128xbf16> to vector<1x16x128xbf16>
    tpu.vector_store %arg7[%161, %c0_113, %c0_114], %164 {strides = array<i32>} : memref<8x16x128xbf16, #tpu.memory_space<vmem>>, vector<1x16x128xbf16>,
    %c2_i32_115 = arith.constant 2 : i32
    %165 = arith.index_cast %c2_i32_115 : i32 to index
    %c0_116 = arith.constant 0 : index
    %c0_117 = arith.constant 0 : index
    %166 = vector.load %arg11[%165, %c0_116, %c0_117] : memref<8x16x128xf32, #tpu.memory_space<vmem>>, vector<1x16x128xf32>
    %167 = vector.shape_cast %166 : vector<1x16x128xf32> to vector<16x128xf32>
    %c1_118 = arith.constant 1 : index
    %c0_119 = arith.constant 0 : index
    %c0_120 = arith.constant 0 : index
    %168 = vector.load %arg4[%c1_118, %c0_119, %c0_120] : memref<2x128x128xbf16, #tpu.memory_space<vmem>>, vector<1x128x128xbf16>
    %169 = vector.shape_cast %168 : vector<1x128x128xbf16> to vector<128x128xbf16>
    %cst_121 = arith.constant dense<0.000000e+00> : vector<16x128xf32>
    %170 = tpu.matmul %160, %169, %cst_121 {dimension_numbers = #tpu.dot_dimension_numbers<[1], [0], [0], [1], [0, 0, 1, 1], [], []>} : vector<16x128xbf16>, vector<128x128xbf16>, vector<16x128xf32> -> vector<16x128xf32>
    %171 = arith.addf %167, %170 : vector<16x128xf32>
    %172 = math.tanh %171 : vector<16x128xf32>
    %173 = arith.truncf %172 : vector<16x128xf32> to vector<16x128xbf16>
    %174 = arith.index_cast %c2_i32_115 : i32 to index
    %c0_122 = arith.constant 0 : index
    %c0_123 = arith.constant 0 : index
    %175 = vector.load %arg7[%174, %c0_122, %c0_123] : memref<8x16x128xbf16, #tpu.memory_space<vmem>>, vector<1x16x128xbf16>
    %176 = vector.shape_cast %175 : vector<1x16x128xbf16> to vector<16x128xbf16>
    %177 = vector.shape_cast %173 : vector<16x128xbf16> to vector<1x16x128xbf16>
    tpu.vector_store %arg7[%174, %c0_122, %c0_123], %177 {strides = array<i32>} : memref<8x16x128xbf16, #tpu.memory_space<vmem>>, vector<1x16x128xbf16>,
    %c3_i32_124 = arith.constant 3 : i32
    %178 = arith.index_cast %c3_i32_124 : i32 to index
    %c0_125 = arith.constant 0 : index
    %c0_126 = arith.constant 0 : index
    %179 = vector.load %arg11[%178, %c0_125, %c0_126] : memref<8x16x128xf32, #tpu.memory_space<vmem>>, vector<1x16x128xf32>
    %180 = vector.shape_cast %179 : vector<1x16x128xf32> to vector<16x128xf32>
    %c1_127 = arith.constant 1 : index
    %c0_128 = arith.constant 0 : index
    %c0_129 = arith.constant 0 : index
    %181 = vector.load %arg4[%c1_127, %c0_128, %c0_129] : memref<2x128x128xbf16, #tpu.memory_space<vmem>>, vector<1x128x128xbf16>
    %182 = vector.shape_cast %181 : vector<1x128x128xbf16> to vector<128x128xbf16>
    %cst_130 = arith.constant dense<0.000000e+00> : vector<16x128xf32>
    %183 = tpu.matmul %173, %182, %cst_130 {dimension_numbers = #tpu.dot_dimension_numbers<[1], [0], [0], [1], [0, 0, 1, 1], [], []>} : vector<16x128xbf16>, vector<128x128xbf16>, vector<16x128xf32> -> vector<16x128xf32>
    %184 = arith.addf %180, %183 : vector<16x128xf32>
    %185 = math.tanh %184 : vector<16x128xf32>
    %186 = arith.truncf %185 : vector<16x128xf32> to vector<16x128xbf16>
    %187 = arith.index_cast %c3_i32_124 : i32 to index
    %c0_131 = arith.constant 0 : index
    %c0_132 = arith.constant 0 : index
    %188 = vector.load %arg7[%187, %c0_131, %c0_132] : memref<8x16x128xbf16, #tpu.memory_space<vmem>>, vector<1x16x128xbf16>
    %189 = vector.shape_cast %188 : vector<1x16x128xbf16> to vector<16x128xbf16>
    %190 = vector.shape_cast %186 : vector<16x128xbf16> to vector<1x16x128xbf16>
    tpu.vector_store %arg7[%187, %c0_131, %c0_132], %190 {strides = array<i32>} : memref<8x16x128xbf16, #tpu.memory_space<vmem>>, vector<1x16x128xbf16>,
    %c4_i32_133 = arith.constant 4 : i32
    %191 = arith.index_cast %c4_i32_133 : i32 to index
    %c0_134 = arith.constant 0 : index
    %c0_135 = arith.constant 0 : index
    %192 = vector.load %arg11[%191, %c0_134, %c0_135] : memref<8x16x128xf32, #tpu.memory_space<vmem>>, vector<1x16x128xf32>
    %193 = vector.shape_cast %192 : vector<1x16x128xf32> to vector<16x128xf32>
    %c1_136 = arith.constant 1 : index
    %c0_137 = arith.constant 0 : index
    %c0_138 = arith.constant 0 : index
    %194 = vector.load %arg4[%c1_136, %c0_137, %c0_138] : memref<2x128x128xbf16, #tpu.memory_space<vmem>>, vector<1x128x128xbf16>
    %195 = vector.shape_cast %194 : vector<1x128x128xbf16> to vector<128x128xbf16>
    %cst_139 = arith.constant dense<0.000000e+00> : vector<16x128xf32>
    %196 = tpu.matmul %186, %195, %cst_139 {dimension_numbers = #tpu.dot_dimension_numbers<[1], [0], [0], [1], [0, 0, 1, 1], [], []>} : vector<16x128xbf16>, vector<128x128xbf16>, vector<16x128xf32> -> vector<16x128xf32>
    %197 = arith.addf %193, %196 : vector<16x128xf32>
    %198 = math.tanh %197 : vector<16x128xf32>
    %199 = arith.truncf %198 : vector<16x128xf32> to vector<16x128xbf16>
    %200 = arith.index_cast %c4_i32_133 : i32 to index
    %c0_140 = arith.constant 0 : index
    %c0_141 = arith.constant 0 : index
    %201 = vector.load %arg7[%200, %c0_140, %c0_141] : memref<8x16x128xbf16, #tpu.memory_space<vmem>>, vector<1x16x128xbf16>
    %202 = vector.shape_cast %201 : vector<1x16x128xbf16> to vector<16x128xbf16>
    %203 = vector.shape_cast %199 : vector<16x128xbf16> to vector<1x16x128xbf16>
    tpu.vector_store %arg7[%200, %c0_140, %c0_141], %203 {strides = array<i32>} : memref<8x16x128xbf16, #tpu.memory_space<vmem>>, vector<1x16x128xbf16>,
    %c5_i32_142 = arith.constant 5 : i32
    %204 = arith.index_cast %c5_i32_142 : i32 to index
    %c0_143 = arith.constant 0 : index
    %c0_144 = arith.constant 0 : index
    %205 = vector.load %arg11[%204, %c0_143, %c0_144] : memref<8x16x128xf32, #tpu.memory_space<vmem>>, vector<1x16x128xf32>
    %206 = vector.shape_cast %205 : vector<1x16x128xf32> to vector<16x128xf32>
    %c1_145 = arith.constant 1 : index
    %c0_146 = arith.constant 0 : index
    %c0_147 = arith.constant 0 : index
    %207 = vector.load %arg4[%c1_145, %c0_146, %c0_147] : memref<2x128x128xbf16, #tpu.memory_space<vmem>>, vector<1x128x128xbf16>
    %208 = vector.shape_cast %207 : vector<1x128x128xbf16> to vector<128x128xbf16>
    %cst_148 = arith.constant dense<0.000000e+00> : vector<16x128xf32>
    %209 = tpu.matmul %199, %208, %cst_148 {dimension_numbers = #tpu.dot_dimension_numbers<[1], [0], [0], [1], [0, 0, 1, 1], [], []>} : vector<16x128xbf16>, vector<128x128xbf16>, vector<16x128xf32> -> vector<16x128xf32>
    %210 = arith.addf %206, %209 : vector<16x128xf32>
    %211 = math.tanh %210 : vector<16x128xf32>
    %212 = arith.truncf %211 : vector<16x128xf32> to vector<16x128xbf16>
    %213 = arith.index_cast %c5_i32_142 : i32 to index
    %c0_149 = arith.constant 0 : index
    %c0_150 = arith.constant 0 : index
    %214 = vector.load %arg7[%213, %c0_149, %c0_150] : memref<8x16x128xbf16, #tpu.memory_space<vmem>>, vector<1x16x128xbf16>
    %215 = vector.shape_cast %214 : vector<1x16x128xbf16> to vector<16x128xbf16>
    %216 = vector.shape_cast %212 : vector<16x128xbf16> to vector<1x16x128xbf16>
    tpu.vector_store %arg7[%213, %c0_149, %c0_150], %216 {strides = array<i32>} : memref<8x16x128xbf16, #tpu.memory_space<vmem>>, vector<1x16x128xbf16>,
    %c6_i32_151 = arith.constant 6 : i32
    %217 = arith.index_cast %c6_i32_151 : i32 to index
    %c0_152 = arith.constant 0 : index
    %c0_153 = arith.constant 0 : index
    %218 = vector.load %arg11[%217, %c0_152, %c0_153] : memref<8x16x128xf32, #tpu.memory_space<vmem>>, vector<1x16x128xf32>
    %219 = vector.shape_cast %218 : vector<1x16x128xf32> to vector<16x128xf32>
    %c1_154 = arith.constant 1 : index
    %c0_155 = arith.constant 0 : index
    %c0_156 = arith.constant 0 : index
    %220 = vector.load %arg4[%c1_154, %c0_155, %c0_156] : memref<2x128x128xbf16, #tpu.memory_space<vmem>>, vector<1x128x128xbf16>
    %221 = vector.shape_cast %220 : vector<1x128x128xbf16> to vector<128x128xbf16>
    %cst_157 = arith.constant dense<0.000000e+00> : vector<16x128xf32>
    %222 = tpu.matmul %212, %221, %cst_157 {dimension_numbers = #tpu.dot_dimension_numbers<[1], [0], [0], [1], [0, 0, 1, 1], [], []>} : vector<16x128xbf16>, vector<128x128xbf16>, vector<16x128xf32> -> vector<16x128xf32>
    %223 = arith.addf %219, %222 : vector<16x128xf32>
    %224 = math.tanh %223 : vector<16x128xf32>
    %225 = arith.truncf %224 : vector<16x128xf32> to vector<16x128xbf16>
    %226 = arith.index_cast %c6_i32_151 : i32 to index
    %c0_158 = arith.constant 0 : index
    %c0_159 = arith.constant 0 : index
    %227 = vector.load %arg7[%226, %c0_158, %c0_159] : memref<8x16x128xbf16, #tpu.memory_space<vmem>>, vector<1x16x128xbf16>
    %228 = vector.shape_cast %227 : vector<1x16x128xbf16> to vector<16x128xbf16>
    %229 = vector.shape_cast %225 : vector<16x128xbf16> to vector<1x16x128xbf16>
    tpu.vector_store %arg7[%226, %c0_158, %c0_159], %229 {strides = array<i32>} : memref<8x16x128xbf16, #tpu.memory_space<vmem>>, vector<1x16x128xbf16>,
    %c7_i32_160 = arith.constant 7 : i32
    %230 = arith.index_cast %c7_i32_160 : i32 to index
    %c0_161 = arith.constant 0 : index
    %c0_162 = arith.constant 0 : index
    %231 = vector.load %arg11[%230, %c0_161, %c0_162] : memref<8x16x128xf32, #tpu.memory_space<vmem>>, vector<1x16x128xf32>
    %232 = vector.shape_cast %231 : vector<1x16x128xf32> to vector<16x128xf32>
    %c1_163 = arith.constant 1 : index
    %c0_164 = arith.constant 0 : index
    %c0_165 = arith.constant 0 : index
    %233 = vector.load %arg4[%c1_163, %c0_164, %c0_165] : memref<2x128x128xbf16, #tpu.memory_space<vmem>>, vector<1x128x128xbf16>
    %234 = vector.shape_cast %233 : vector<1x128x128xbf16> to vector<128x128xbf16>
    %cst_166 = arith.constant dense<0.000000e+00> : vector<16x128xf32>
    %235 = tpu.matmul %225, %234, %cst_166 {dimension_numbers = #tpu.dot_dimension_numbers<[1], [0], [0], [1], [0, 0, 1, 1], [], []>} : vector<16x128xbf16>, vector<128x128xbf16>, vector<16x128xf32> -> vector<16x128xf32>
    %236 = arith.addf %232, %235 : vector<16x128xf32>
    %237 = math.tanh %236 : vector<16x128xf32>
    %238 = arith.truncf %237 : vector<16x128xf32> to vector<16x128xbf16>
    %239 = arith.index_cast %c7_i32_160 : i32 to index
    %c0_167 = arith.constant 0 : index
    %c0_168 = arith.constant 0 : index
    %240 = vector.load %arg7[%239, %c0_167, %c0_168] : memref<8x16x128xbf16, #tpu.memory_space<vmem>>, vector<1x16x128xbf16>
    %241 = vector.shape_cast %240 : vector<1x16x128xbf16> to vector<16x128xbf16>
    %242 = vector.shape_cast %238 : vector<16x128xbf16> to vector<1x16x128xbf16>
    tpu.vector_store %arg7[%239, %c0_167, %c0_168], %242 {strides = array<i32>} : memref<8x16x128xbf16, #tpu.memory_space<vmem>>, vector<1x16x128xbf16>,
    %c8_i32_169 = arith.constant 8 : i32
    %c1_170 = arith.constant 1 : index
    %c0_171 = arith.constant 0 : index
    %c0_172 = arith.constant 0 : index
    %243 = vector.load %arg9[%c1_170, %c0_171, %c0_172] : memref<2x16x128xf32, #tpu.memory_space<vmem>>, vector<1x16x128xf32>
    %244 = vector.shape_cast %243 : vector<1x16x128xf32> to vector<16x128xf32>
    %245 = vector.shape_cast %237 : vector<16x128xf32> to vector<1x16x128xf32>
    tpu.vector_store %arg9[%c1_170, %c0_171, %c0_172], %245 {strides = array<i32>} : memref<2x16x128xf32, #tpu.memory_space<vmem>>, vector<1x16x128xf32>,
    %c0_i32_173 = arith.constant 0 : i32
    %246 = arith.cmpi eq, %arg0, %c0_i32_173 : i32
    %247 = arith.extui %246 : i1 to i32
    %c0_i32_174 = arith.constant 0 : i32
    %248 = arith.cmpi ne, %247, %c0_i32_174 : i32
    scf.if %248 {
      %c0_175 = arith.constant 0 : index
      %c0_176 = arith.constant 0 : index
      %c0_177 = arith.constant 0 : index
      %249 = vector.load %arg9[%c0_175, %c0_176, %c0_177] : memref<2x16x128xf32, #tpu.memory_space<vmem>>, vector<2x16x128xf32>
      %c0_178 = arith.constant 0 : index
      %c0_179 = arith.constant 0 : index
      %c0_180 = arith.constant 0 : index
      %250 = vector.load %arg8[%c0_178, %c0_179, %c0_180] : memref<2x16x128xf32, #tpu.memory_space<vmem>>, vector<2x16x128xf32>
      tpu.vector_store %arg8[%c0_178, %c0_179, %c0_180], %249 {strides = array<i32>} : memref<2x16x128xf32, #tpu.memory_space<vmem>>, vector<2x16x128xf32>,
    } else {
    }
    return
  }
  func.func @transform_0(%arg0: i32) -> (i32, i32, i32) {
    %c0_i32 = arith.constant 0 : i32
    %c0_i32_0 = arith.constant 0 : i32
    %c0_i32_1 = arith.constant 0 : i32
    return %arg0, %c0_i32, %c0_i32_0 : i32, i32, i32
  }
  func.func @transform_1(%arg0: i32) -> (i32, i32) {
    %c0_i32 = arith.constant 0 : i32
    %c0_i32_0 = arith.constant 0 : i32
    %c0_i32_1 = arith.constant 0 : i32
    return %c0_i32, %c0_i32_0 : i32, i32
  }
  func.func @transform_2(%arg0: i32) -> (i32, i32, i32) {
    %c0_i32 = arith.constant 0 : i32
    %c0_i32_0 = arith.constant 0 : i32
    %c0_i32_1 = arith.constant 0 : i32
    %c0_i32_2 = arith.constant 0 : i32
    return %c0_i32, %c0_i32_0, %c0_i32_1 : i32, i32, i32
  }
  func.func @transform_3(%arg0: i32) -> (i32, i32, i32) {
    %c0_i32 = arith.constant 0 : i32
    %c0_i32_0 = arith.constant 0 : i32
    %c0_i32_1 = arith.constant 0 : i32
    %c0_i32_2 = arith.constant 0 : i32
    return %c0_i32, %c0_i32_0, %c0_i32_1 : i32, i32, i32
  }
  func.func @transform_4(%arg0: i32) -> (i32, i32, i32) {
    %c0_i32 = arith.constant 0 : i32
    %c0_i32_0 = arith.constant 0 : i32
    %c0_i32_1 = arith.constant 0 : i32
    %c0_i32_2 = arith.constant 0 : i32
    return %c0_i32, %c0_i32_0, %c0_i32_1 : i32, i32, i32
  }
  func.func @transform_5(%arg0: i32) -> (i32, i32, i32) {
    %c0_i32 = arith.constant 0 : i32
    %c0_i32_0 = arith.constant 0 : i32
    %c0_i32_1 = arith.constant 0 : i32
    %c0_i32_2 = arith.constant 0 : i32
    return %c0_i32, %c0_i32_0, %c0_i32_1 : i32, i32, i32
  }
  func.func @transform_6(%arg0: i32) -> (i32, i32, i32) {
    %c0_i32 = arith.constant 0 : i32
    %c0_i32_0 = arith.constant 0 : i32
    %c0_i32_1 = arith.constant 0 : i32
    return %arg0, %c0_i32, %c0_i32_0 : i32, i32, i32
  }
  func.func @transform_7(%arg0: i32) -> (i32, i32, i32) {
    %c0_i32 = arith.constant 0 : i32
    %c0_i32_0 = arith.constant 0 : i32
    %c0_i32_1 = arith.constant 0 : i32
    %c0_i32_2 = arith.constant 0 : i32
    return %c0_i32, %c0_i32_0, %c0_i32_1 : i32, i32, i32
  }
}

</mosaic_0001>

<llo_original>
// kernel: rnn_lm_forward.3
$region0: #{rnn_lm_forward.3}
  #allocation0 [shape = 'u32[]', space=smem, size = 0x4, offset = 0x4, fixed_abs, tag = 'smem constant byte address 0x4 - core index']
  #allocation1 [shape = 'u32[144,128]{1,0:T(1,128)}', space=vmem, size = 0x12000, scoped, tag = 'internal scratch']
  %s0 = inlined_call_operand.vmem [shape: bf16[128,128], index: 0, kind: input, shape index: {}]
  %s1 = inlined_call_operand.vmem [shape: bf16[128,128], index: 1, kind: input, shape index: {}]
  %s2 = inlined_call_operand.vmem [shape: f32[1,128], index: 2, kind: input, shape index: {}]
  %s3 = inlined_call_operand.vmem [shape: f32[128,128], index: 3, kind: output, shape index: {}]
  %s4 = sld [smem:[#allocation0]]
  $region22: #{rnn_lm_forward.3} parent=0
    _
  %s6 = ssub.s32 1, %s4
  %s7 = scalar_select 0, %s6, %s4
  // Predicated region
  $region2: #{rnn_lm_forward.3} parent=0 // pred_check
    _
  $region3: #{rnn_lm_forward.3} parent=0 // pred_check_branch
    %9 = sbr.rel (0) target = $region5
  $region4: #{rnn_lm_forward.3} parent=0 // pred_region
    _
  $region5: #{rnn_lm_forward.3} parent=0 // pred_fallthru
    _
  // Predicated region
  $region6: #{rnn_lm_forward.3} parent=0 // pred_check
    _
  $region7: #{rnn_lm_forward.3} parent=0 // pred_check_branch
    %11 = sbr.rel (0) target = $region9
  $region8: #{rnn_lm_forward.3} parent=0 // pred_region
    _
  $region9: #{rnn_lm_forward.3} parent=0 // pred_fallthru
    _
  // Predicated region
  $region10: #{rnn_lm_forward.3} parent=0 // pred_check
    _
  $region11: #{rnn_lm_forward.3} parent=0 // pred_check_branch
    %13 = sbr.rel (0) target = $region13
  $region12: #{rnn_lm_forward.3} parent=0 // pred_region
    _
  $region13: #{rnn_lm_forward.3} parent=0 // pred_fallthru
    _
  %v15 = vld [vmem:[%s0] sm:$0xf]
  %v16 = vld [vmem:[%s0 + $0x4] sm:$0xf]
  %v17 = vld [vmem:[%s0 + $0x8] sm:$0xf]
  %v18 = vld [vmem:[%s0 + $0xc] sm:$0xf]
  %v19 = vld [vmem:[%s0 + $0x10] sm:$0xf]
  %v20 = vld [vmem:[%s0 + $0x14] sm:$0xf]
  %v21 = vld [vmem:[%s0 + $0x18] sm:$0xf]
  %v22 = vld [vmem:[%s0 + $0x1c] sm:$0xf]
  %v23 = vld [vmem:[%s0 + $0x20] sm:$0xf]
  %v24 = vld [vmem:[%s0 + $0x24] sm:$0xf]
  %v25 = vld [vmem:[%s0 + $0x28] sm:$0xf]
  %v26 = vld [vmem:[%s0 + $0x2c] sm:$0xf]
  %v27 = vld [vmem:[%s0 + $0x30] sm:$0xf]
  %v28 = vld [vmem:[%s0 + $0x34] sm:$0xf]
  %v29 = vld [vmem:[%s0 + $0x38] sm:$0xf]
  %v30 = vld [vmem:[%s0 + $0x3c] sm:$0xf]
  %v31 = vld [vmem:[%s1] sm:$0xf]
  %v32 = vld [vmem:[%s1 + $0x4] sm:$0xf]
  %v33 = vld [vmem:[%s1 + $0x8] sm:$0xf]
  %v34 = vld [vmem:[%s1 + $0xc] sm:$0xf]
  %v35 = vld [vmem:[%s1 + $0x10] sm:$0xf]
  %v36 = vld [vmem:[%s1 + $0x14] sm:$0xf]
  %v37 = vld [vmem:[%s1 + $0x18] sm:$0xf]
  %v38 = vld [vmem:[%s1 + $0x1c] sm:$0xf]
  %v39 = vld [vmem:[%s1 + $0x20] sm:$0xf]
  %v40 = vld [vmem:[%s1 + $0x24] sm:$0xf]
  %v41 = vld [vmem:[%s1 + $0x28] sm:$0xf]
  %v42 = vld [vmem:[%s1 + $0x2c] sm:$0xf]
  %v43 = vld [vmem:[%s1 + $0x30] sm:$0xf]
  %v44 = vld [vmem:[%s1 + $0x34] sm:$0xf]
  %v45 = vld [vmem:[%s1 + $0x38] sm:$0xf]
  %v46 = vld [vmem:[%s1 + $0x3c] sm:$0xf]
  %v47 = vld [vmem:[%s2] sm:$0x1]
  %v49 = vlaneseq
  %v50 = vshrl.u32 %v49, 7
  %v51 = vsub.s32 0, %v50
  %v52 = vrot.slane %v47, %v51
  %v70 = vunpack.c.l.b16 %v15
  %v71 = vunpack.c.l.b16 %v16
  %v72 = vunpack.c.l.b16 %v17
  %v73 = vunpack.c.l.b16 %v18
  %v74 = vunpack.c.l.b16 %v19
  %v75 = vunpack.c.l.b16 %v20
  %v76 = vunpack.c.l.b16 %v21
  %v77 = vunpack.c.l.b16 %v22
  %v78 = vunpack.c.l.b16 %v23
  %v79 = vunpack.c.l.b16 %v24
  %v80 = vunpack.c.l.b16 %v25
  %v81 = vunpack.c.l.b16 %v26
  %v82 = vunpack.c.l.b16 %v27
  %v83 = vunpack.c.l.b16 %v28
  %v84 = vunpack.c.l.b16 %v29
  %v85 = vunpack.c.l.b16 %v30
  %v86 = vpack.c.b16 %v71, %v70
  %v87 = vpack.c.b16 %v73, %v72
  %v88 = vpack.c.b16 %v75, %v74
  %v89 = vpack.c.b16 %v77, %v76
  %v90 = vpack.c.b16 %v79, %v78
  %v91 = vpack.c.b16 %v81, %v80
  %v92 = vpack.c.b16 %v83, %v82
  %v93 = vpack.c.b16 %v85, %v84
  %v118 = vunpack.c.l.b16 %v31
  %v119 = vunpack.c.l.b16 %v32
  %v120 = vunpack.c.l.b16 %v33
  %v121 = vunpack.c.l.b16 %v34
  %v122 = vunpack.c.l.b16 %v35
  %v123 = vunpack.c.l.b16 %v36
  %v124 = vunpack.c.l.b16 %v37
  %v125 = vunpack.c.l.b16 %v38
  %v126 = vunpack.c.l.b16 %v39
  %v127 = vunpack.c.l.b16 %v40
  %v128 = vunpack.c.l.b16 %v41
  %v129 = vunpack.c.l.b16 %v42
  %v130 = vunpack.c.l.b16 %v43
  %v131 = vunpack.c.l.b16 %v44
  %v132 = vunpack.c.l.b16 %v45
  %v133 = vunpack.c.l.b16 %v46
  %v134 = vpack.c.b16 %v119, %v118
  %v135 = vpack.c.b16 %v121, %v120
  %v136 = vpack.c.b16 %v123, %v122
  %v137 = vpack.c.b16 %v125, %v124
  %v138 = vpack.c.b16 %v127, %v126
  %v139 = vpack.c.b16 %v129, %v128
  %v140 = vpack.c.b16 %v131, %v130
  %v141 = vpack.c.b16 %v133, %v132
  %150 = vmatprep.subr.bf16.mxu0 0
  %151 = vmatpush1.bf16.msra.mxu0 %v141
  %152 = vmatprep.subr.bf16.mxu0 0
  %153 = vmatpush1.bf16.msra.mxu0 %v140
  %154 = vmatprep.subr.bf16.mxu0 0
  %155 = vmatpush1.bf16.msra.mxu0 %v139
  %156 = vmatprep.subr.bf16.mxu0 0
  %157 = vmatpush1.bf16.msra.mxu0 %v138
  %158 = vmatprep.subr.bf16.mxu0 0
  %159 = vmatpush1.bf16.msra.mxu0 %v137
  %160 = vmatprep.subr.bf16.mxu0 0
  %161 = vmatpush1.bf16.msra.mxu0 %v136
  %162 = vmatprep.subr.bf16.mxu0 0
  %163 = vmatpush1.bf16.msra.mxu0 %v135
  %164 = vmatprep.subr.bf16.mxu0 0
  %165 = vmatpush1.bf16.msra.mxu0 %v134
  %166 = vmatprep.subr.bf16.mxu0 0
  %167 = vmatpush2.bf16.msra.mxu0 0
  %168 = vmatprep.subr.bf16.mxu0 0
  %169 = vmatpush2.bf16.msra.mxu0 0
  %170 = vmatprep.subr.bf16.mxu0 0
  %171 = vmatpush2.bf16.msra.mxu0 0
  %172 = vmatprep.subr.bf16.mxu0 0
  %173 = vmatpush2.bf16.msra.mxu0 0
  %174 = vmatprep.subr.bf16.mxu0 0
  %175 = vmatpush2.bf16.msra.mxu0 0
  %176 = vmatprep.subr.bf16.mxu0 0
  %177 = vmatpush2.bf16.msra.mxu0 0
  %178 = vmatprep.subr.bf16.mxu0 0
  %179 = vmatpush2.bf16.msra.mxu0 0
  %180 = vmatprep.subr.bf16.mxu0 0
  %181 = vmatpush2.bf16.msra.mxu0 0
  %182 = vmatprep.mubr.bf16.mxu0 0
  %183 = vmatmul.mubr.bf16.gmra.mxu0 %v86
  %v184 = vpop.f32.mrf.mxu0
  %v185 = vadd.f32 %v52, %v184
  %v186 = vpop.f32.mrf.mxu0
  %v187 = vpop.f32.mrf.mxu0
  %v188 = vadd.f32 %v52, %v187
  %v189 = vpop.f32.mrf.mxu0
  %190 = vmatprep.mubr.bf16.mxu0 0
  %191 = vmatmul.mubr.bf16.gmra.mxu0 %v87
  %v192 = vpop.f32.mrf.mxu0
  %v193 = vadd.f32 %v52, %v192
  %v194 = vpop.f32.mrf.mxu0
  %v195 = vpop.f32.mrf.mxu0
  %v196 = vadd.f32 %v52, %v195
  %v197 = vpop.f32.mrf.mxu0
  %198 = vmatprep.mubr.bf16.mxu0 0
  %199 = vmatmul.mubr.bf16.gmra.mxu0 %v88
  %v200 = vpop.f32.mrf.mxu0
  %v201 = vadd.f32 %v52, %v200
  %v202 = vpop.f32.mrf.mxu0
  %v203 = vpop.f32.mrf.mxu0
  %v204 = vadd.f32 %v52, %v203
  %v205 = vpop.f32.mrf.mxu0
  %206 = vmatprep.mubr.bf16.mxu0 0
  %207 = vmatmul.mubr.bf16.gmra.mxu0 %v89
  %v208 = vpop.f32.mrf.mxu0
  %v209 = vadd.f32 %v52, %v208
  %v210 = vpop.f32.mrf.mxu0
  %v211 = vpop.f32.mrf.mxu0
  %v212 = vadd.f32 %v52, %v211
  %v213 = vpop.f32.mrf.mxu0
  %214 = vmatprep.mubr.bf16.mxu0 0
  %215 = vmatmul.mubr.bf16.gmra.mxu0 %v90
  %v216 = vpop.f32.mrf.mxu0
  %v217 = vadd.f32 %v52, %v216
  %v218 = vpop.f32.mrf.mxu0
  %v219 = vpop.f32.mrf.mxu0
  %v220 = vadd.f32 %v52, %v219
  %v221 = vpop.f32.mrf.mxu0
  %222 = vmatprep.mubr.bf16.mxu0 0
  %223 = vmatmul.mubr.bf16.gmra.mxu0 %v91
  %v224 = vpop.f32.mrf.mxu0
  %v225 = vadd.f32 %v52, %v224
  %v226 = vpop.f32.mrf.mxu0
  %v227 = vpop.f32.mrf.mxu0
  %v228 = vadd.f32 %v52, %v227
  %v229 = vpop.f32.mrf.mxu0
  %230 = vmatprep.mubr.bf16.mxu0 0
  %231 = vmatmul.mubr.bf16.gmra.mxu0 %v92
  %v232 = vpop.f32.mrf.mxu0
  %v233 = vadd.f32 %v52, %v232
  %v234 = vpop.f32.mrf.mxu0
  %v235 = vpop.f32.mrf.mxu0
  %v236 = vadd.f32 %v52, %v235
  %v237 = vpop.f32.mrf.mxu0
  %238 = vmatprep.mubr.bf16.mxu0 0
  %239 = vmatmul.mubr.bf16.gmra.mxu0 %v93
  %v240 = vpop.f32.mrf.mxu0
  %v241 = vadd.f32 %v52, %v240
  %v242 = vpop.f32.mrf.mxu0
  %v243 = vpop.f32.mrf.mxu0
  %v244 = vadd.f32 %v52, %v243
  %v245 = vpop.f32.mrf.mxu0
  %246 = vdwg.mxu0
  %247 = vst [vmem:[%s3] sm:$0xff] %v185
  %248 = vst [vmem:[%s3 + $0x8] sm:$0xff] %v188
  %249 = vst [vmem:[%s3 + $0x10] sm:$0xff] %v193
  %250 = vst [vmem:[%s3 + $0x18] sm:$0xff] %v196
  %251 = vst [vmem:[%s3 + $0x20] sm:$0xff] %v201
  %252 = vst [vmem:[%s3 + $0x28] sm:$0xff] %v204
  %253 = vst [vmem:[%s3 + $0x30] sm:$0xff] %v209
  %254 = vst [vmem:[%s3 + $0x38] sm:$0xff] %v212
  %255 = vst [vmem:[%s3 + $0x40] sm:$0xff] %v217
  %256 = vst [vmem:[%s3 + $0x48] sm:$0xff] %v220
  %257 = vst [vmem:[%s3 + $0x50] sm:$0xff] %v225
  %258 = vst [vmem:[%s3 + $0x58] sm:$0xff] %v228
  %259 = vst [vmem:[%s3 + $0x60] sm:$0xff] %v233
  %260 = vst [vmem:[%s3 + $0x68] sm:$0xff] %v236
  %261 = vst [vmem:[%s3 + $0x70] sm:$0xff] %v241
  %262 = vst [vmem:[%s3 + $0x78] sm:$0xff] %v244
  // Predicated region
  $region14: #{rnn_lm_forward.3} parent=0 // pred_check
    _
  $region15: #{rnn_lm_forward.3} parent=0 // pred_check_branch
    %264 = sbr.rel (0) target = $region17
  $region16: #{rnn_lm_forward.3} parent=0 // pred_region
    _
  $region17: #{rnn_lm_forward.3} parent=0 // pred_fallthru
    _
  // Predicated region
  $region18: #{rnn_lm_forward.3} parent=0 // pred_check
    _
  $region19: #{rnn_lm_forward.3} parent=0 // pred_check_branch
    %266 = sbr.rel (0) target = $region21
  $region20: #{rnn_lm_forward.3} parent=0 // pred_region
    _
  $region21: #{rnn_lm_forward.3} parent=0 // pred_fallthru
    _

// kernel: rnn_lm_forward.2
$region0: #{rnn_lm_forward.2}
  #allocation0 [shape = 'u32[]', space=smem, size = 0x4, offset = 0x4, fixed_abs, tag = 'smem constant byte address 0x4 - core index']
  #allocation1 [shape = 'u32[144,128]{1,0:T(1,128)}', space=vmem, size = 0x12000, scoped, tag = 'internal scratch']
  #allocation2 [shape = 'f32[2,16,128]{2,1,0:T(8,128)}', space=vmem, size = 0x4000, scoped, tag = 'scratch operand']
  #allocation3 [shape = 'bf16[8,16,128]{2,1,0:T(8,128)(2,1)}', space=vmem, size = 0x8000, scoped, tag = 'scratch operand']
  #allocation4 [shape = 'f32[8,16,128]{2,1,0:T(8,128)}', space=vmem, size = 0x10000, scoped, tag = 'scratch operand']
  %s0 = inlined_call_operand.vmem [shape: bf16[8,16,128], index: 0, kind: input, shape index: {}]
  %s1 = inlined_call_operand.vmem [shape: bf16[128,128], index: 1, kind: input, shape index: {}]
  %s2 = inlined_call_operand.hbm [shape: bf16[1,128,128], index: 2, kind: input, shape index: {}]
  %s3 = inlined_call_operand.vmem [shape: bf16[2,128,128], index: 3, kind: input, shape index: {}]
  %s4 = inlined_call_operand.vmem [shape: f32[2,1,128], index: 4, kind: input, shape index: {}]
  %s5 = inlined_call_operand.vmem [shape: f32[2,16,128], index: 5, kind: input, shape index: {}]
  %s6 = inlined_call_operand.vmem [shape: bf16[8,16,128], index: 6, kind: output, shape index: {0}]
  %s7 = inlined_call_operand.vmem [shape: f32[2,16,128], index: 7, kind: output, shape index: {1}]
  %8 = xla_tuple %s6, %s7
  %s9 = sld [smem:[#allocation0]]
  $region54: #{rnn_lm_forward.2} parent=0
    _
  %s11 = ssub.s32 1, %s9
  %s12 = scalar_select 0, %s11, %s9
  $region1: #{rnn_lm_forward.2} parent=0
    #allocation5 [shape = 'u8[32768]{0}', space=vmem, size = 0x8000, scoped, tag = 'input window, operand 2, single buffered']
    #allocation6 [shape = 's32[1]{0}', space=sflag, size = 0x4, scoped, tag = 'scoped memory for rnn_lm_forward.2']
    %13 = vsyncpa [#allocation6], 0
    // Predicated region
    $region2: #{rnn_lm_forward.2} parent=1 // pred_check
      _
    $region3: #{rnn_lm_forward.2} parent=1 // pred_check_branch
      %15 = sbr.rel (0) target = $region5
    $region4: #{rnn_lm_forward.2} parent=1 // pred_region
      _
    $region5: #{rnn_lm_forward.2} parent=1 // pred_fallthru
      _
    // Predicated region
    $region6: #{rnn_lm_forward.2} parent=1 // pred_check
      _
    $region7: #{rnn_lm_forward.2} parent=1 // pred_check_branch
      %17 = sbr.rel (0) target = $region9
    $region8: #{rnn_lm_forward.2} parent=1 // pred_region
      _
    $region9: #{rnn_lm_forward.2} parent=1 // pred_fallthru
      _
    // Predicated region
    $region10: #{rnn_lm_forward.2} parent=1 // pred_check
      _
    $region11: #{rnn_lm_forward.2} parent=1 // pred_check_branch
      %19 = sbr.rel (0) target = $region13
    $region12: #{rnn_lm_forward.2} parent=1 // pred_region
      %s21 = ssub.s32 1024, 1024
      %22 = vsyncadd [#allocation6], %s21
      %s23 = sshll.u32 [#allocation5], 4
      %s24 = int_to_ptr.vmem [resolvable:$true] %s23
      %29 = dma.hbm_to_vmem [thread:$0]  %s2, 1024, %s24, [#allocation6], 64, 64, 4
    $region13: #{rnn_lm_forward.2} parent=1 // pred_fallthru
      _
    // Predicated region
    $region14: #{rnn_lm_forward.2} parent=1 // pred_check
      _
    $region15: #{rnn_lm_forward.2} parent=1 // pred_check_branch
      %31 = sbr.rel (0) target = $region17
    $region16: #{rnn_lm_forward.2} parent=1 // pred_region
      _
    $region17: #{rnn_lm_forward.2} parent=1 // pred_fallthru
      _
    // Predicated region
    $region18: #{rnn_lm_forward.2} parent=1 // pred_check
      _
    $region19: #{rnn_lm_forward.2} parent=1 // pred_check_branch
      %33 = sbr.rel (0) target = $region21
    $region20: #{rnn_lm_forward.2} parent=1 // pred_region
      _
    $region21: #{rnn_lm_forward.2} parent=1 // pred_fallthru
      _
    // Predicated region
    $region22: #{rnn_lm_forward.2} parent=1 // pred_check
      _
    $region23: #{rnn_lm_forward.2} parent=1 // pred_check_branch
      %35 = sbr.rel (0) target = $region25
    $region24: #{rnn_lm_forward.2} parent=1 // pred_region
      _
    $region25: #{rnn_lm_forward.2} parent=1 // pred_fallthru
      _
    // Predicated region
    $region26: #{rnn_lm_forward.2} parent=1 // pred_check
      _
    $region27: #{rnn_lm_forward.2} parent=1 // pred_check_branch
      %37 = sbr.rel (0) target = $region29
    $region28: #{rnn_lm_forward.2} parent=1 // pred_region
      %38 = dma.done [#allocation6], 1024
    $region29: #{rnn_lm_forward.2} parent=1 // pred_fallthru
      _
    %p40 = scmp.eq.s32.totalorder 0, 0
    // Predicated region
    $region30: #{rnn_lm_forward.2} parent=1 // pred_check
      %p41 = pneg %p40
    $region31: #{rnn_lm_forward.2} parent=1 // pred_check_branch
      %43 = sbr.rel (%p41) target = $region33
    $region32: #{rnn_lm_forward.2} parent=1 // pred_region
      %v44 = vld [vmem:[%s5] sm:$0xff]
      %v45 = vld [vmem:[%s5 + $0x8] sm:$0xff]
      %v46 = vld [vmem:[%s5 + $0x10] sm:$0xff]
      %v47 = vld [vmem:[%s5 + $0x18] sm:$0xff]
      %48 = vst [vmem:[#allocation2] sm:$0xff] %v44
      %49 = vst [vmem:[#allocation2 + $0x8] sm:$0xff] %v45
      %50 = vst [vmem:[#allocation2 + $0x10] sm:$0xff] %v46
      %51 = vst [vmem:[#allocation2 + $0x18] sm:$0xff] %v47
    $region33: #{rnn_lm_forward.2} parent=1 // pred_fallthru
      _
    %v52 = vld [vmem:[%s0] sm:$0xf]
    %v53 = vld [vmem:[%s0 + $0x4] sm:$0xf]
    %v54 = vld [vmem:[%s0 + $0x8] sm:$0xf]
    %v55 = vld [vmem:[%s0 + $0xc] sm:$0xf]
    %v56 = vld [vmem:[%s0 + $0x10] sm:$0xf]
    %v57 = vld [vmem:[%s0 + $0x14] sm:$0xf]
    %v58 = vld [vmem:[%s0 + $0x18] sm:$0xf]
    %v59 = vld [vmem:[%s0 + $0x1c] sm:$0xf]
    %v60 = vld [vmem:[%s0 + $0x20] sm:$0xf]
    %v61 = vld [vmem:[%s0 + $0x24] sm:$0xf]
    %v62 = vld [vmem:[%s0 + $0x28] sm:$0xf]
    %v63 = vld [vmem:[%s0 + $0x2c] sm:$0xf]
    %v64 = vld [vmem:[%s0 + $0x30] sm:$0xf]
    %v65 = vld [vmem:[%s0 + $0x34] sm:$0xf]
    %v66 = vld [vmem:[%s0 + $0x38] sm:$0xf]
    %v67 = vld [vmem:[%s0 + $0x3c] sm:$0xf]
    %v68 = vld [vmem:[%s1] sm:$0xf]
    %v69 = vld [vmem:[%s1 + $0x4] sm:$0xf]
    %v70 = vld [vmem:[%s1 + $0x8] sm:$0xf]
    %v71 = vld [vmem:[%s1 + $0xc] sm:$0xf]
    %v72 = vld [vmem:[%s1 + $0x10] sm:$0xf]
    %v73 = vld [vmem:[%s1 + $0x14] sm:$0xf]
    %v74 = vld [vmem:[%s1 + $0x18] sm:$0xf]
    %v75 = vld [vmem:[%s1 + $0x1c] sm:$0xf]
    %v76 = vld [vmem:[%s1 + $0x20] sm:$0xf]
    %v77 = vld [vmem:[%s1 + $0x24] sm:$0xf]
    %v78 = vld [vmem:[%s1 + $0x28] sm:$0xf]
    %v79 = vld [vmem:[%s1 + $0x2c] sm:$0xf]
    %v80 = vld [vmem:[%s1 + $0x30] sm:$0xf]
    %v81 = vld [vmem:[%s1 + $0x34] sm:$0xf]
    %v82 = vld [vmem:[%s1 + $0x38] sm:$0xf]
    %v83 = vld [vmem:[%s1 + $0x3c] sm:$0xf]
    %v100 = vunpack.c.l.b16 %v52
    %v101 = vunpack.c.l.b16 %v53
    %v102 = vunpack.c.l.b16 %v54
    %v103 = vunpack.c.l.b16 %v55
    %v104 = vunpack.c.l.b16 %v56
    %v105 = vunpack.c.l.b16 %v57
    %v106 = vunpack.c.l.b16 %v58
    %v107 = vunpack.c.l.b16 %v59
    %v108 = vunpack.c.l.b16 %v60
    %v109 = vunpack.c.l.b16 %v61
    %v110 = vunpack.c.l.b16 %v62
    %v111 = vunpack.c.l.b16 %v63
    %v112 = vunpack.c.l.b16 %v64
    %v113 = vunpack.c.l.b16 %v65
    %v114 = vunpack.c.l.b16 %v66
    %v115 = vunpack.c.l.b16 %v67
    %v116 = vpack.c.b16 %v101, %v100
    %v117 = vpack.c.b16 %v103, %v102
    %v118 = vpack.c.b16 %v105, %v104
    %v119 = vpack.c.b16 %v107, %v106
    %v120 = vpack.c.b16 %v109, %v108
    %v121 = vpack.c.b16 %v111, %v110
    %v122 = vpack.c.b16 %v113, %v112
    %v123 = vpack.c.b16 %v115, %v114
    %v148 = vunpack.c.l.b16 %v68
    %v149 = vunpack.c.l.b16 %v69
    %v150 = vunpack.c.l.b16 %v70
    %v151 = vunpack.c.l.b16 %v71
    %v152 = vunpack.c.l.b16 %v72
    %v153 = vunpack.c.l.b16 %v73
    %v154 = vunpack.c.l.b16 %v74
    %v155 = vunpack.c.l.b16 %v75
    %v156 = vunpack.c.l.b16 %v76
    %v157 = vunpack.c.l.b16 %v77
    %v158 = vunpack.c.l.b16 %v78
    %v159 = vunpack.c.l.b16 %v79
    %v160 = vunpack.c.l.b16 %v80
    %v161 = vunpack.c.l.b16 %v81
    %v162 = vunpack.c.l.b16 %v82
    %v163 = vunpack.c.l.b16 %v83
    %v164 = vpack.c.b16 %v149, %v148
    %v165 = vpack.c.b16 %v151, %v150
    %v166 = vpack.c.b16 %v153, %v152
    %v167 = vpack.c.b16 %v155, %v154
    %v168 = vpack.c.b16 %v157, %v156
    %v169 = vpack.c.b16 %v159, %v158
    %v170 = vpack.c.b16 %v161, %v160
    %v171 = vpack.c.b16 %v163, %v162
    %180 = vmatprep.subr.bf16.mxu0 0
    %181 = vmatpush1.bf16.msra.mxu0 %v171
    %182 = vmatprep.subr.bf16.mxu0 0
    %183 = vmatpush1.bf16.msra.mxu0 %v170
    %184 = vmatprep.subr.bf16.mxu0 0
    %185 = vmatpush1.bf16.msra.mxu0 %v169
    %186 = vmatprep.subr.bf16.mxu0 0
    %187 = vmatpush1.bf16.msra.mxu0 %v168
    %188 = vmatprep.subr.bf16.mxu0 0
    %189 = vmatpush1.bf16.msra.mxu0 %v167
    %190 = vmatprep.subr.bf16.mxu0 0
    %191 = vmatpush1.bf16.msra.mxu0 %v166
    %192 = vmatprep.subr.bf16.mxu0 0
    %193 = vmatpush1.bf16.msra.mxu0 %v165
    %194 = vmatprep.subr.bf16.mxu0 0
    %195 = vmatpush1.bf16.msra.mxu0 %v164
    %196 = vmatprep.subr.bf16.mxu0 0
    %197 = vmatpush2.bf16.msra.mxu0 0
    %198 = vmatprep.subr.bf16.mxu0 0
    %199 = vmatpush2.bf16.msra.mxu0 0
    %200 = vmatprep.subr.bf16.mxu0 0
    %201 = vmatpush2.bf16.msra.mxu0 0
    %202 = vmatprep.subr.bf16.mxu0 0
    %203 = vmatpush2.bf16.msra.mxu0 0
    %204 = vmatprep.subr.bf16.mxu0 0
    %205 = vmatpush2.bf16.msra.mxu0 0
    %206 = vmatprep.subr.bf16.mxu0 0
    %207 = vmatpush2.bf16.msra.mxu0 0
    %208 = vmatprep.subr.bf16.mxu0 0
    %209 = vmatpush2.bf16.msra.mxu0 0
    %210 = vmatprep.subr.bf16.mxu0 0
    %211 = vmatpush2.bf16.msra.mxu0 0
    %212 = vmatprep.mubr.bf16.mxu0 0
    %213 = vmatmul.mubr.bf16.gmra.mxu0 %v116
    %v214 = vpop.f32.mrf.mxu0
    %v215 = vadd.f32 0.0, %v214
    %v216 = vpop.f32.mrf.mxu0
    %v217 = vpop.f32.mrf.mxu0
    %v218 = vadd.f32 0.0, %v217
    %v219 = vpop.f32.mrf.mxu0
    %220 = vmatprep.mubr.bf16.mxu0 0
    %221 = vmatmul.mubr.bf16.gmra.mxu0 %v117
    %v222 = vpop.f32.mrf.mxu0
    %v223 = vadd.f32 0.0, %v222
    %v224 = vpop.f32.mrf.mxu0
    %v225 = vpop.f32.mrf.mxu0
    %v226 = vadd.f32 0.0, %v225
    %v227 = vpop.f32.mrf.mxu0
    %228 = vmatprep.mubr.bf16.mxu0 0
    %229 = vmatmul.mubr.bf16.gmra.mxu0 %v118
    %v230 = vpop.f32.mrf.mxu0
    %v231 = vadd.f32 0.0, %v230
    %v232 = vpop.f32.mrf.mxu0
    %v233 = vpop.f32.mrf.mxu0
    %v234 = vadd.f32 0.0, %v233
    %v235 = vpop.f32.mrf.mxu0
    %236 = vmatprep.mubr.bf16.mxu0 0
    %237 = vmatmul.mubr.bf16.gmra.mxu0 %v119
    %v238 = vpop.f32.mrf.mxu0
    %v239 = vadd.f32 0.0, %v238
    %v240 = vpop.f32.mrf.mxu0
    %v241 = vpop.f32.mrf.mxu0
    %v242 = vadd.f32 0.0, %v241
    %v243 = vpop.f32.mrf.mxu0
    %244 = vmatprep.mubr.bf16.mxu0 0
    %245 = vmatmul.mubr.bf16.gmra.mxu0 %v120
    %v246 = vpop.f32.mrf.mxu0
    %v247 = vadd.f32 0.0, %v246
    %v248 = vpop.f32.mrf.mxu0
    %v249 = vpop.f32.mrf.mxu0
    %v250 = vadd.f32 0.0, %v249
    %v251 = vpop.f32.mrf.mxu0
    %252 = vmatprep.mubr.bf16.mxu0 0
    %253 = vmatmul.mubr.bf16.gmra.mxu0 %v121
    %v254 = vpop.f32.mrf.mxu0
    %v255 = vadd.f32 0.0, %v254
    %v256 = vpop.f32.mrf.mxu0
    %v257 = vpop.f32.mrf.mxu0
    %v258 = vadd.f32 0.0, %v257
    %v259 = vpop.f32.mrf.mxu0
    %260 = vmatprep.mubr.bf16.mxu0 0
    %261 = vmatmul.mubr.bf16.gmra.mxu0 %v122
    %v262 = vpop.f32.mrf.mxu0
    %v263 = vadd.f32 0.0, %v262
    %v264 = vpop.f32.mrf.mxu0
    %v265 = vpop.f32.mrf.mxu0
    %v266 = vadd.f32 0.0, %v265
    %v267 = vpop.f32.mrf.mxu0
    %268 = vmatprep.mubr.bf16.mxu0 0
    %269 = vmatmul.mubr.bf16.gmra.mxu0 %v123
    %v270 = vpop.f32.mrf.mxu0
    %v271 = vadd.f32 0.0, %v270
    %v272 = vpop.f32.mrf.mxu0
    %v273 = vpop.f32.mrf.mxu0
    %v274 = vadd.f32 0.0, %v273
    %v275 = vpop.f32.mrf.mxu0
    %276 = vdwg.mxu0
    %v277 = vld [vmem:[%s4] sm:$0x1]
    %v279 = vlaneseq
    %v280 = vshrl.u32 %v279, 7
    %v281 = vsub.s32 0, %v280
    %v282 = vrot.slane %v277, %v281
    %v284 = vadd.f32 %v215, %v282
    %v285 = vadd.f32 %v218, %v282
    %v286 = vadd.f32 %v223, %v282
    %v287 = vadd.f32 %v226, %v282
    %v288 = vadd.f32 %v231, %v282
    %v289 = vadd.f32 %v234, %v282
    %v290 = vadd.f32 %v239, %v282
    %v291 = vadd.f32 %v242, %v282
    %v292 = vadd.f32 %v247, %v282
    %v293 = vadd.f32 %v250, %v282
    %v294 = vadd.f32 %v255, %v282
    %v295 = vadd.f32 %v258, %v282
    %v296 = vadd.f32 %v263, %v282
    %v297 = vadd.f32 %v266, %v282
    %v298 = vadd.f32 %v271, %v282
    %v299 = vadd.f32 %v274, %v282
    %300 = vst [vmem:[#allocation4] sm:$0xff] %v284
    %301 = vst [vmem:[#allocation4 + $0x8] sm:$0xff] %v285
    %302 = vst [vmem:[#allocation4 + $0x10] sm:$0xff] %v286
    %303 = vst [vmem:[#allocation4 + $0x18] sm:$0xff] %v287
    %304 = vst [vmem:[#allocation4 + $0x20] sm:$0xff] %v288
    %305 = vst [vmem:[#allocation4 + $0x28] sm:$0xff] %v289
    %306 = vst [vmem:[#allocation4 + $0x30] sm:$0xff] %v290
    %307 = vst [vmem:[#allocation4 + $0x38] sm:$0xff] %v291
    %308 = vst [vmem:[#allocation4 + $0x40] sm:$0xff] %v292
    %309 = vst [vmem:[#allocation4 + $0x48] sm:$0xff] %v293
    %310 = vst [vmem:[#allocation4 + $0x50] sm:$0xff] %v294
    %311 = vst [vmem:[#allocation4 + $0x58] sm:$0xff] %v295
    %312 = vst [vmem:[#allocation4 + $0x60] sm:$0xff] %v296
    %313 = vst [vmem:[#allocation4 + $0x68] sm:$0xff] %v297
    %314 = vst [vmem:[#allocation4 + $0x70] sm:$0xff] %v298
    %315 = vst [vmem:[#allocation4 + $0x78] sm:$0xff] %v299
    %v316 = vld [vmem:[#allocation2] sm:$0xff]
    %v317 = vld [vmem:[#allocation2 + $0x8] sm:$0xff]
    %v318 = vpack.c.bf16 %v317, %v316
    %v319 = vld [vmem:[#allocation4] sm:$0xff]
    %v320 = vld [vmem:[#allocation4 + $0x8] sm:$0xff]
    %v321 = vld [vmem:[%s3] sm:$0xf]
    %v322 = vld [vmem:[%s3 + $0x4] sm:$0xf]
    %v323 = vld [vmem:[%s3 + $0x8] sm:$0xf]
    %v324 = vld [vmem:[%s3 + $0xc] sm:$0xf]
    %v325 = vld [vmem:[%s3 + $0x10] sm:$0xf]
    %v326 = vld [vmem:[%s3 + $0x14] sm:$0xf]
    %v327 = vld [vmem:[%s3 + $0x18] sm:$0xf]
    %v328 = vld [vmem:[%s3 + $0x1c] sm:$0xf]
    %v329 = vld [vmem:[%s3 + $0x20] sm:$0xf]
    %v330 = vld [vmem:[%s3 + $0x24] sm:$0xf]
    %v331 = vld [vmem:[%s3 + $0x28] sm:$0xf]
    %v332 = vld [vmem:[%s3 + $0x2c] sm:$0xf]
    %v333 = vld [vmem:[%s3 + $0x30] sm:$0xf]
    %v334 = vld [vmem:[%s3 + $0x34] sm:$0xf]
    %v335 = vld [vmem:[%s3 + $0x38] sm:$0xf]
    %v336 = vld [vmem:[%s3 + $0x3c] sm:$0xf]
    %v353 = vunpack.c.l.b16 %v321
    %v354 = vunpack.c.l.b16 %v322
    %v355 = vunpack.c.l.b16 %v323
    %v356 = vunpack.c.l.b16 %v324
    %v357 = vunpack.c.l.b16 %v325
    %v358 = vunpack.c.l.b16 %v326
    %v359 = vunpack.c.l.b16 %v327
    %v360 = vunpack.c.l.b16 %v328
    %v361 = vunpack.c.l.b16 %v329
    %v362 = vunpack.c.l.b16 %v330
    %v363 = vunpack.c.l.b16 %v331
    %v364 = vunpack.c.l.b16 %v332
    %v365 = vunpack.c.l.b16 %v333
    %v366 = vunpack.c.l.b16 %v334
    %v367 = vunpack.c.l.b16 %v335
    %v368 = vunpack.c.l.b16 %v336
    %v369 = vpack.c.b16 %v354, %v353
    %v370 = vpack.c.b16 %v356, %v355
    %v371 = vpack.c.b16 %v358, %v357
    %v372 = vpack.c.b16 %v360, %v359
    %v373 = vpack.c.b16 %v362, %v361
    %v374 = vpack.c.b16 %v364, %v363
    %v375 = vpack.c.b16 %v366, %v365
    %v376 = vpack.c.b16 %v368, %v367
    %385 = vmatprep.subr.bf16.mxu0 0
    %386 = vmatpush1.bf16.msra.mxu0 %v376
    %387 = vmatprep.subr.bf16.mxu0 0
    %388 = vmatpush1.bf16.msra.mxu0 %v375
    %389 = vmatprep.subr.bf16.mxu0 0
    %390 = vmatpush1.bf16.msra.mxu0 %v374
    %391 = vmatprep.subr.bf16.mxu0 0
    %392 = vmatpush1.bf16.msra.mxu0 %v373
    %393 = vmatprep.subr.bf16.mxu0 0
    %394 = vmatpush1.bf16.msra.mxu0 %v372
    %395 = vmatprep.subr.bf16.mxu0 0
    %396 = vmatpush1.bf16.msra.mxu0 %v371
    %397 = vmatprep.subr.bf16.mxu0 0
    %398 = vmatpush1.bf16.msra.mxu0 %v370
    %399 = vmatprep.subr.bf16.mxu0 0
    %400 = vmatpush1.bf16.msra.mxu0 %v369
    %401 = vmatprep.subr.bf16.mxu0 0
    %402 = vmatpush2.bf16.msra.mxu0 0
    %403 = vmatprep.subr.bf16.mxu0 0
    %404 = vmatpush2.bf16.msra.mxu0 0
    %405 = vmatprep.subr.bf16.mxu0 0
    %406 = vmatpush2.bf16.msra.mxu0 0
    %407 = vmatprep.subr.bf16.mxu0 0
    %408 = vmatpush2.bf16.msra.mxu0 0
    %409 = vmatprep.subr.bf16.mxu0 0
    %410 = vmatpush2.bf16.msra.mxu0 0
    %411 = vmatprep.subr.bf16.mxu0 0
    %412 = vmatpush2.bf16.msra.mxu0 0
    %413 = vmatprep.subr.bf16.mxu0 0
    %414 = vmatpush2.bf16.msra.mxu0 0
    %415 = vmatprep.subr.bf16.mxu0 0
    %416 = vmatpush2.bf16.msra.mxu0 0
    %417 = vmatprep.mubr.bf16.mxu0 0
    %418 = vmatmul.mubr.bf16.gmra.mxu0 %v318
    %v419 = vpop.f32.mrf.mxu0
    %v420 = vadd.f32 0.0, %v419
    %v421 = vpop.f32.mrf.mxu0
    %v422 = vpop.f32.mrf.mxu0
    %v423 = vadd.f32 0.0, %v422
    %v424 = vpop.f32.mrf.mxu0
    %425 = vdwg.mxu0
    %v426 = vadd.f32 %v319, %v420
    %v427 = vadd.f32 %v320, %v423
    %v428 = vtanh.pop %v426
    %v429 = vtanh.pop %v427
    %v430 = vpack.c.bf16 %v429, %v428
    %v432 = vunpack.c.l.b16 %v430
    %v433 = vunpack.c.h.b16 %v430
    %v434 = vpack.c.b16 %v432, %v432
    %v435 = vpack.c.b16 %v433, %v433
    %438 = vst [vmem:[#allocation3] sm:$0xf] %v434
    %439 = vst [vmem:[#allocation3 + $0x4] sm:$0xf] %v435
    %s440 = scalar_lea.vmem [#allocation4], 16
    %v441 = vld [vmem:[%s440] sm:$0xff]
    %v442 = vld [vmem:[%s440 + $0x8] sm:$0xff]
    %v443 = vld [vmem:[%s3] sm:$0xf]
    %v444 = vld [vmem:[%s3 + $0x4] sm:$0xf]
    %v445 = vld [vmem:[%s3 + $0x8] sm:$0xf]
    %v446 = vld [vmem:[%s3 + $0xc] sm:$0xf]
    %v447 = vld [vmem:[%s3 + $0x10] sm:$0xf]
    %v448 = vld [vmem:[%s3 + $0x14] sm:$0xf]
    %v449 = vld [vmem:[%s3 + $0x18] sm:$0xf]
    %v450 = vld [vmem:[%s3 + $0x1c] sm:$0xf]
    %v451 = vld [vmem:[%s3 + $0x20] sm:$0xf]
    %v452 = vld [vmem:[%s3 + $0x24] sm:$0xf]
    %v453 = vld [vmem:[%s3 + $0x28] sm:$0xf]
    %v454 = vld [vmem:[%s3 + $0x2c] sm:$0xf]
    %v455 = vld [vmem:[%s3 + $0x30] sm:$0xf]
    %v456 = vld [vmem:[%s3 + $0x34] sm:$0xf]
    %v457 = vld [vmem:[%s3 + $0x38] sm:$0xf]
    %v458 = vld [vmem:[%s3 + $0x3c] sm:$0xf]
    %v475 = vunpack.c.l.b16 %v443
    %v476 = vunpack.c.l.b16 %v444
    %v477 = vunpack.c.l.b16 %v445
    %v478 = vunpack.c.l.b16 %v446
    %v479 = vunpack.c.l.b16 %v447
    %v480 = vunpack.c.l.b16 %v448
    %v481 = vunpack.c.l.b16 %v449
    %v482 = vunpack.c.l.b16 %v450
    %v483 = vunpack.c.l.b16 %v451
    %v484 = vunpack.c.l.b16 %v452
    %v485 = vunpack.c.l.b16 %v453
    %v486 = vunpack.c.l.b16 %v454
    %v487 = vunpack.c.l.b16 %v455
    %v488 = vunpack.c.l.b16 %v456
    %v489 = vunpack.c.l.b16 %v457
    %v490 = vunpack.c.l.b16 %v458
    %v491 = vpack.c.b16 %v476, %v475
    %v492 = vpack.c.b16 %v478, %v477
    %v493 = vpack.c.b16 %v480, %v479
    %v494 = vpack.c.b16 %v482, %v481
    %v495 = vpack.c.b16 %v484, %v483
    %v496 = vpack.c.b16 %v486, %v485
    %v497 = vpack.c.b16 %v488, %v487
    %v498 = vpack.c.b16 %v490, %v489
    %507 = vmatprep.subr.bf16.mxu0 0
    %508 = vmatpush1.bf16.msra.mxu0 %v498
    %509 = vmatprep.subr.bf16.mxu0 0
    %510 = vmatpush1.bf16.msra.mxu0 %v497
    %511 = vmatprep.subr.bf16.mxu0 0
    %512 = vmatpush1.bf16.msra.mxu0 %v496
    %513 = vmatprep.subr.bf16.mxu0 0
    %514 = vmatpush1.bf16.msra.mxu0 %v495
    %515 = vmatprep.subr.bf16.mxu0 0
    %516 = vmatpush1.bf16.msra.mxu0 %v494
    %517 = vmatprep.subr.bf16.mxu0 0
    %518 = vmatpush1.bf16.msra.mxu0 %v493
    %519 = vmatprep.subr.bf16.mxu0 0
    %520 = vmatpush1.bf16.msra.mxu0 %v492
    %521 = vmatprep.subr.bf16.mxu0 0
    %522 = vmatpush1.bf16.msra.mxu0 %v491
    %523 = vmatprep.subr.bf16.mxu0 0
    %524 = vmatpush2.bf16.msra.mxu0 0
    %525 = vmatprep.subr.bf16.mxu0 0
    %526 = vmatpush2.bf16.msra.mxu0 0
    %527 = vmatprep.subr.bf16.mxu0 0
    %528 = vmatpush2.bf16.msra.mxu0 0
    %529 = vmatprep.subr.bf16.mxu0 0
    %530 = vmatpush2.bf16.msra.mxu0 0
    %531 = vmatprep.subr.bf16.mxu0 0
    %532 = vmatpush2.bf16.msra.mxu0 0
    %533 = vmatprep.subr.bf16.mxu0 0
    %534 = vmatpush2.bf16.msra.mxu0 0
    %535 = vmatprep.subr.bf16.mxu0 0
    %536 = vmatpush2.bf16.msra.mxu0 0
    %537 = vmatprep.subr.bf16.mxu0 0
    %538 = vmatpush2.bf16.msra.mxu0 0
    %539 = vmatprep.mubr.bf16.mxu0 0
    %540 = vmatmul.mubr.bf16.gmra.mxu0 %v430
    %v541 = vpop.f32.mrf.mxu0
    %v542 = vadd.f32 0.0, %v541
    %v543 = vpop.f32.mrf.mxu0
    %v544 = vpop.f32.mrf.mxu0
    %v545 = vadd.f32 0.0, %v544
    %v546 = vpop.f32.mrf.mxu0
    %547 = vdwg.mxu0
    %v548 = vadd.f32 %v441, %v542
    %v549 = vadd.f32 %v442, %v545
    %v550 = vtanh.pop %v548
    %v551 = vtanh.pop %v549
    %v552 = vpack.c.bf16 %v551, %v550
    %v554 = vunpack.c.l.b16 %v552
    %v555 = vunpack.c.h.b16 %v552
    %v556 = vpack.c.b16 %v554, %v554
    %v557 = vpack.c.b16 %v555, %v555
    %s560 = scalar_lea.vmem [#allocation3], 8
    %561 = vst [vmem:[%s560] sm:$0xf] %v556
    %562 = vst [vmem:[%s560 + $0x4] sm:$0xf] %v557
    %s563 = scalar_lea.vmem [#allocation4], 32
    %v564 = vld [vmem:[%s563] sm:$0xff]
    %v565 = vld [vmem:[%s563 + $0x8] sm:$0xff]
    %v566 = vld [vmem:[%s3] sm:$0xf]
    %v567 = vld [vmem:[%s3 + $0x4] sm:$0xf]
    %v568 = vld [vmem:[%s3 + $0x8] sm:$0xf]
    %v569 = vld [vmem:[%s3 + $0xc] sm:$0xf]
    %v570 = vld [vmem:[%s3 + $0x10] sm:$0xf]
    %v571 = vld [vmem:[%s3 + $0x14] sm:$0xf]
    %v572 = vld [vmem:[%s3 + $0x18] sm:$0xf]
    %v573 = vld [vmem:[%s3 + $0x1c] sm:$0xf]
    %v574 = vld [vmem:[%s3 + $0x20] sm:$0xf]
    %v575 = vld [vmem:[%s3 + $0x24] sm:$0xf]
    %v576 = vld [vmem:[%s3 + $0x28] sm:$0xf]
    %v577 = vld [vmem:[%s3 + $0x2c] sm:$0xf]
    %v578 = vld [vmem:[%s3 + $0x30] sm:$0xf]
    %v579 = vld [vmem:[%s3 + $0x34] sm:$0xf]
    %v580 = vld [vmem:[%s3 + $0x38] sm:$0xf]
    %v581 = vld [vmem:[%s3 + $0x3c] sm:$0xf]
    %v598 = vunpack.c.l.b16 %v566
    %v599 = vunpack.c.l.b16 %v567
    %v600 = vunpack.c.l.b16 %v568
    %v601 = vunpack.c.l.b16 %v569
    %v602 = vunpack.c.l.b16 %v570
    %v603 = vunpack.c.l.b16 %v571
    %v604 = vunpack.c.l.b16 %v572
    %v605 = vunpack.c.l.b16 %v573
    %v606 = vunpack.c.l.b16 %v574
    %v607 = vunpack.c.l.b16 %v575
    %v608 = vunpack.c.l.b16 %v576
    %v609 = vunpack.c.l.b16 %v577
    %v610 = vunpack.c.l.b16 %v578
    %v611 = vunpack.c.l.b16 %v579
    %v612 = vunpack.c.l.b16 %v580
    %v613 = vunpack.c.l.b16 %v581
    %v614 = vpack.c.b16 %v599, %v598
    %v615 = vpack.c.b16 %v601, %v600
    %v616 = vpack.c.b16 %v603, %v602
    %v617 = vpack.c.b16 %v605, %v604
    %v618 = vpack.c.b16 %v607, %v606
    %v619 = vpack.c.b16 %v609, %v608
    %v620 = vpack.c.b16 %v611, %v610
    %v621 = vpack.c.b16 %v613, %v612
    %630 = vmatprep.subr.bf16.mxu0 0
    %631 = vmatpush1.bf16.msra.mxu0 %v621
    %632 = vmatprep.subr.bf16.mxu0 0
    %633 = vmatpush1.bf16.msra.mxu0 %v620
    %634 = vmatprep.subr.bf16.mxu0 0
    %635 = vmatpush1.bf16.msra.mxu0 %v619
    %636 = vmatprep.subr.bf16.mxu0 0
    %637 = vmatpush1.bf16.msra.mxu0 %v618
    %638 = vmatprep.subr.bf16.mxu0 0
    %639 = vmatpush1.bf16.msra.mxu0 %v617
    %640 = vmatprep.subr.bf16.mxu0 0
    %641 = vmatpush1.bf16.msra.mxu0 %v616
    %642 = vmatprep.subr.bf16.mxu0 0
    %643 = vmatpush1.bf16.msra.mxu0 %v615
    %644 = vmatprep.subr.bf16.mxu0 0
    %645 = vmatpush1.bf16.msra.mxu0 %v614
    %646 = vmatprep.subr.bf16.mxu0 0
    %647 = vmatpush2.bf16.msra.mxu0 0
    %648 = vmatprep.subr.bf16.mxu0 0
    %649 = vmatpush2.bf16.msra.mxu0 0
    %650 = vmatprep.subr.bf16.mxu0 0
    %651 = vmatpush2.bf16.msra.mxu0 0
    %652 = vmatprep.subr.bf16.mxu0 0
    %653 = vmatpush2.bf16.msra.mxu0 0
    %654 = vmatprep.subr.bf16.mxu0 0
    %655 = vmatpush2.bf16.msra.mxu0 0
    %656 = vmatprep.subr.bf16.mxu0 0
    %657 = vmatpush2.bf16.msra.mxu0 0
    %658 = vmatprep.subr.bf16.mxu0 0
    %659 = vmatpush2.bf16.msra.mxu0 0
    %660 = vmatprep.subr.bf16.mxu0 0
    %661 = vmatpush2.bf16.msra.mxu0 0
    %662 = vmatprep.mubr.bf16.mxu0 0
    %663 = vmatmul.mubr.bf16.gmra.mxu0 %v552
    %v664 = vpop.f32.mrf.mxu0
    %v665 = vadd.f32 0.0, %v664
    %v666 = vpop.f32.mrf.mxu0
    %v667 = vpop.f32.mrf.mxu0
    %v668 = vadd.f32 0.0, %v667
    %v669 = vpop.f32.mrf.mxu0
    %670 = vdwg.mxu0
    %v671 = vadd.f32 %v564, %v665
    %v672 = vadd.f32 %v565, %v668
    %v673 = vtanh.pop %v671
    %v674 = vtanh.pop %v672
    %v675 = vpack.c.bf16 %v674, %v673
    %v677 = vunpack.c.l.b16 %v675
    %v678 = vunpack.c.h.b16 %v675
    %v679 = vpack.c.b16 %v677, %v677
    %v680 = vpack.c.b16 %v678, %v678
    %s683 = scalar_lea.vmem [#allocation3], 16
    %684 = vst [vmem:[%s683] sm:$0xf] %v679
    %685 = vst [vmem:[%s683 + $0x4] sm:$0xf] %v680
    %s686 = scalar_lea.vmem [#allocation4], 48
    %v687 = vld [vmem:[%s686] sm:$0xff]
    %v688 = vld [vmem:[%s686 + $0x8] sm:$0xff]
    %v689 = vld [vmem:[%s3] sm:$0xf]
    %v690 = vld [vmem:[%s3 + $0x4] sm:$0xf]
    %v691 = vld [vmem:[%s3 + $0x8] sm:$0xf]
    %v692 = vld [vmem:[%s3 + $0xc] sm:$0xf]
    %v693 = vld [vmem:[%s3 + $0x10] sm:$0xf]
    %v694 = vld [vmem:[%s3 + $0x14] sm:$0xf]
    %v695 = vld [vmem:[%s3 + $0x18] sm:$0xf]
    %v696 = vld [vmem:[%s3 + $0x1c] sm:$0xf]
    %v697 = vld [vmem:[%s3 + $0x20] sm:$0xf]
    %v698 = vld [vmem:[%s3 + $0x24] sm:$0xf]
    %v699 = vld [vmem:[%s3 + $0x28] sm:$0xf]
    %v700 = vld [vmem:[%s3 + $0x2c] sm:$0xf]
    %v701 = vld [vmem:[%s3 + $0x30] sm:$0xf]
    %v702 = vld [vmem:[%s3 + $0x34] sm:$0xf]
    %v703 = vld [vmem:[%s3 + $0x38] sm:$0xf]
    %v704 = vld [vmem:[%s3 + $0x3c] sm:$0xf]
    %v721 = vunpack.c.l.b16 %v689
    %v722 = vunpack.c.l.b16 %v690
    %v723 = vunpack.c.l.b16 %v691
    %v724 = vunpack.c.l.b16 %v692
    %v725 = vunpack.c.l.b16 %v693
    %v726 = vunpack.c.l.b16 %v694
    %v727 = vunpack.c.l.b16 %v695
    %v728 = vunpack.c.l.b16 %v696
    %v729 = vunpack.c.l.b16 %v697
    %v730 = vunpack.c.l.b16 %v698
    %v731 = vunpack.c.l.b16 %v699
    %v732 = vunpack.c.l.b16 %v700
    %v733 = vunpack.c.l.b16 %v701
    %v734 = vunpack.c.l.b16 %v702
    %v735 = vunpack.c.l.b16 %v703
    %v736 = vunpack.c.l.b16 %v704
    %v737 = vpack.c.b16 %v722, %v721
    %v738 = vpack.c.b16 %v724, %v723
    %v739 = vpack.c.b16 %v726, %v725
    %v740 = vpack.c.b16 %v728, %v727
    %v741 = vpack.c.b16 %v730, %v729
    %v742 = vpack.c.b16 %v732, %v731
    %v743 = vpack.c.b16 %v734, %v733
    %v744 = vpack.c.b16 %v736, %v735
    %753 = vmatprep.subr.bf16.mxu0 0
    %754 = vmatpush1.bf16.msra.mxu0 %v744
    %755 = vmatprep.subr.bf16.mxu0 0
    %756 = vmatpush1.bf16.msra.mxu0 %v743
    %757 = vmatprep.subr.bf16.mxu0 0
    %758 = vmatpush1.bf16.msra.mxu0 %v742
    %759 = vmatprep.subr.bf16.mxu0 0
    %760 = vmatpush1.bf16.msra.mxu0 %v741
    %761 = vmatprep.subr.bf16.mxu0 0
    %762 = vmatpush1.bf16.msra.mxu0 %v740
    %763 = vmatprep.subr.bf16.mxu0 0
    %764 = vmatpush1.bf16.msra.mxu0 %v739
    %765 = vmatprep.subr.bf16.mxu0 0
    %766 = vmatpush1.bf16.msra.mxu0 %v738
    %767 = vmatprep.subr.bf16.mxu0 0
    %768 = vmatpush1.bf16.msra.mxu0 %v737
    %769 = vmatprep.subr.bf16.mxu0 0
    %770 = vmatpush2.bf16.msra.mxu0 0
    %771 = vmatprep.subr.bf16.mxu0 0
    %772 = vmatpush2.bf16.msra.mxu0 0
    %773 = vmatprep.subr.bf16.mxu0 0
    %774 = vmatpush2.bf16.msra.mxu0 0
    %775 = vmatprep.subr.bf16.mxu0 0
    %776 = vmatpush2.bf16.msra.mxu0 0
    %777 = vmatprep.subr.bf16.mxu0 0
    %778 = vmatpush2.bf16.msra.mxu0 0
    %779 = vmatprep.subr.bf16.mxu0 0
    %780 = vmatpush2.bf16.msra.mxu0 0
    %781 = vmatprep.subr.bf16.mxu0 0
    %782 = vmatpush2.bf16.msra.mxu0 0
    %783 = vmatprep.subr.bf16.mxu0 0
    %784 = vmatpush2.bf16.msra.mxu0 0
    %785 = vmatprep.mubr.bf16.mxu0 0
    %786 = vmatmul.mubr.bf16.gmra.mxu0 %v675
    %v787 = vpop.f32.mrf.mxu0
    %v788 = vadd.f32 0.0, %v787
    %v789 = vpop.f32.mrf.mxu0
    %v790 = vpop.f32.mrf.mxu0
    %v791 = vadd.f32 0.0, %v790
    %v792 = vpop.f32.mrf.mxu0
    %793 = vdwg.mxu0
    %v794 = vadd.f32 %v687, %v788
    %v795 = vadd.f32 %v688, %v791
    %v796 = vtanh.pop %v794
    %v797 = vtanh.pop %v795
    %v798 = vpack.c.bf16 %v797, %v796
    %v800 = vunpack.c.l.b16 %v798
    %v801 = vunpack.c.h.b16 %v798
    %v802 = vpack.c.b16 %v800, %v800
    %v803 = vpack.c.b16 %v801, %v801
    %s806 = scalar_lea.vmem [#allocation3], 24
    %807 = vst [vmem:[%s806] sm:$0xf] %v802
    %808 = vst [vmem:[%s806 + $0x4] sm:$0xf] %v803
    %s809 = scalar_lea.vmem [#allocation4], 64
    %v810 = vld [vmem:[%s809] sm:$0xff]
    %v811 = vld [vmem:[%s809 + $0x8] sm:$0xff]
    %v812 = vld [vmem:[%s3] sm:$0xf]
    %v813 = vld [vmem:[%s3 + $0x4] sm:$0xf]
    %v814 = vld [vmem:[%s3 + $0x8] sm:$0xf]
    %v815 = vld [vmem:[%s3 + $0xc] sm:$0xf]
    %v816 = vld [vmem:[%s3 + $0x10] sm:$0xf]
    %v817 = vld [vmem:[%s3 + $0x14] sm:$0xf]
    %v818 = vld [vmem:[%s3 + $0x18] sm:$0xf]
    %v819 = vld [vmem:[%s3 + $0x1c] sm:$0xf]
    %v820 = vld [vmem:[%s3 + $0x20] sm:$0xf]
    %v821 = vld [vmem:[%s3 + $0x24] sm:$0xf]
    %v822 = vld [vmem:[%s3 + $0x28] sm:$0xf]
    %v823 = vld [vmem:[%s3 + $0x2c] sm:$0xf]
    %v824 = vld [vmem:[%s3 + $0x30] sm:$0xf]
    %v825 = vld [vmem:[%s3 + $0x34] sm:$0xf]
    %v826 = vld [vmem:[%s3 + $0x38] sm:$0xf]
    %v827 = vld [vmem:[%s3 + $0x3c] sm:$0xf]
    %v844 = vunpack.c.l.b16 %v812
    %v845 = vunpack.c.l.b16 %v813
    %v846 = vunpack.c.l.b16 %v814
    %v847 = vunpack.c.l.b16 %v815
    %v848 = vunpack.c.l.b16 %v816
    %v849 = vunpack.c.l.b16 %v817
    %v850 = vunpack.c.l.b16 %v818
    %v851 = vunpack.c.l.b16 %v819
    %v852 = vunpack.c.l.b16 %v820
    %v853 = vunpack.c.l.b16 %v821
    %v854 = vunpack.c.l.b16 %v822
    %v855 = vunpack.c.l.b16 %v823
    %v856 = vunpack.c.l.b16 %v824
    %v857 = vunpack.c.l.b16 %v825
    %v858 = vunpack.c.l.b16 %v826
    %v859 = vunpack.c.l.b16 %v827
    %v860 = vpack.c.b16 %v845, %v844
    %v861 = vpack.c.b16 %v847, %v846
    %v862 = vpack.c.b16 %v849, %v848
    %v863 = vpack.c.b16 %v851, %v850
    %v864 = vpack.c.b16 %v853, %v852
    %v865 = vpack.c.b16 %v855, %v854
    %v866 = vpack.c.b16 %v857, %v856
    %v867 = vpack.c.b16 %v859, %v858
    %876 = vmatprep.subr.bf16.mxu0 0
    %877 = vmatpush1.bf16.msra.mxu0 %v867
    %878 = vmatprep.subr.bf16.mxu0 0
    %879 = vmatpush1.bf16.msra.mxu0 %v866
    %880 = vmatprep.subr.bf16.mxu0 0
    %881 = vmatpush1.bf16.msra.mxu0 %v865
    %882 = vmatprep.subr.bf16.mxu0 0
    %883 = vmatpush1.bf16.msra.mxu0 %v864
    %884 = vmatprep.subr.bf16.mxu0 0
    %885 = vmatpush1.bf16.msra.mxu0 %v863
    %886 = vmatprep.subr.bf16.mxu0 0
    %887 = vmatpush1.bf16.msra.mxu0 %v862
    %888 = vmatprep.subr.bf16.mxu0 0
    %889 = vmatpush1.bf16.msra.mxu0 %v861
    %890 = vmatprep.subr.bf16.mxu0 0
    %891 = vmatpush1.bf16.msra.mxu0 %v860
    %892 = vmatprep.subr.bf16.mxu0 0
    %893 = vmatpush2.bf16.msra.mxu0 0
    %894 = vmatprep.subr.bf16.mxu0 0
    %895 = vmatpush2.bf16.msra.mxu0 0
    %896 = vmatprep.subr.bf16.mxu0 0
    %897 = vmatpush2.bf16.msra.mxu0 0
    %898 = vmatprep.subr.bf16.mxu0 0
    %899 = vmatpush2.bf16.msra.mxu0 0
    %900 = vmatprep.subr.bf16.mxu0 0
    %901 = vmatpush2.bf16.msra.mxu0 0
    %902 = vmatprep.subr.bf16.mxu0 0
    %903 = vmatpush2.bf16.msra.mxu0 0
    %904 = vmatprep.subr.bf16.mxu0 0
    %905 = vmatpush2.bf16.msra.mxu0 0
    %906 = vmatprep.subr.bf16.mxu0 0
    %907 = vmatpush2.bf16.msra.mxu0 0
    %908 = vmatprep.mubr.bf16.mxu0 0
    %909 = vmatmul.mubr.bf16.gmra.mxu0 %v798
    %v910 = vpop.f32.mrf.mxu0
    %v911 = vadd.f32 0.0, %v910
    %v912 = vpop.f32.mrf.mxu0
    %v913 = vpop.f32.mrf.mxu0
    %v914 = vadd.f32 0.0, %v913
    %v915 = vpop.f32.mrf.mxu0
    %916 = vdwg.mxu0
    %v917 = vadd.f32 %v810, %v911
    %v918 = vadd.f32 %v811, %v914
    %v919 = vtanh.pop %v917
    %v920 = vtanh.pop %v918
    %v921 = vpack.c.bf16 %v920, %v919
    %v923 = vunpack.c.l.b16 %v921
    %v924 = vunpack.c.h.b16 %v921
    %v925 = vpack.c.b16 %v923, %v923
    %v926 = vpack.c.b16 %v924, %v924
    %s929 = scalar_lea.vmem [#allocation3], 32
    %930 = vst [vmem:[%s929] sm:$0xf] %v925
    %931 = vst [vmem:[%s929 + $0x4] sm:$0xf] %v926
    %s932 = scalar_lea.vmem [#allocation4], 80
    %v933 = vld [vmem:[%s932] sm:$0xff]
    %v934 = vld [vmem:[%s932 + $0x8] sm:$0xff]
    %v935 = vld [vmem:[%s3] sm:$0xf]
    %v936 = vld [vmem:[%s3 + $0x4] sm:$0xf]
    %v937 = vld [vmem:[%s3 + $0x8] sm:$0xf]
    %v938 = vld [vmem:[%s3 + $0xc] sm:$0xf]
    %v939 = vld [vmem:[%s3 + $0x10] sm:$0xf]
    %v940 = vld [vmem:[%s3 + $0x14] sm:$0xf]
    %v941 = vld [vmem:[%s3 + $0x18] sm:$0xf]
    %v942 = vld [vmem:[%s3 + $0x1c] sm:$0xf]
    %v943 = vld [vmem:[%s3 + $0x20] sm:$0xf]
    %v944 = vld [vmem:[%s3 + $0x24] sm:$0xf]
    %v945 = vld [vmem:[%s3 + $0x28] sm:$0xf]
    %v946 = vld [vmem:[%s3 + $0x2c] sm:$0xf]
    %v947 = vld [vmem:[%s3 + $0x30] sm:$0xf]
    %v948 = vld [vmem:[%s3 + $0x34] sm:$0xf]
    %v949 = vld [vmem:[%s3 + $0x38] sm:$0xf]
    %v950 = vld [vmem:[%s3 + $0x3c] sm:$0xf]
    %v967 = vunpack.c.l.b16 %v935
    %v968 = vunpack.c.l.b16 %v936
    %v969 = vunpack.c.l.b16 %v937
    %v970 = vunpack.c.l.b16 %v938
    %v971 = vunpack.c.l.b16 %v939
    %v972 = vunpack.c.l.b16 %v940
    %v973 = vunpack.c.l.b16 %v941
    %v974 = vunpack.c.l.b16 %v942
    %v975 = vunpack.c.l.b16 %v943
    %v976 = vunpack.c.l.b16 %v944
    %v977 = vunpack.c.l.b16 %v945
    %v978 = vunpack.c.l.b16 %v946
    %v979 = vunpack.c.l.b16 %v947
    %v980 = vunpack.c.l.b16 %v948
    %v981 = vunpack.c.l.b16 %v949
    %v982 = vunpack.c.l.b16 %v950
    %v983 = vpack.c.b16 %v968, %v967
    %v984 = vpack.c.b16 %v970, %v969
    %v985 = vpack.c.b16 %v972, %v971
    %v986 = vpack.c.b16 %v974, %v973
    %v987 = vpack.c.b16 %v976, %v975
    %v988 = vpack.c.b16 %v978, %v977
    %v989 = vpack.c.b16 %v980, %v979
    %v990 = vpack.c.b16 %v982, %v981
    %999 = vmatprep.subr.bf16.mxu0 0
    %1000 = vmatpush1.bf16.msra.mxu0 %v990
    %1001 = vmatprep.subr.bf16.mxu0 0
    %1002 = vmatpush1.bf16.msra.mxu0 %v989
    %1003 = vmatprep.subr.bf16.mxu0 0
    %1004 = vmatpush1.bf16.msra.mxu0 %v988
    %1005 = vmatprep.subr.bf16.mxu0 0
    %1006 = vmatpush1.bf16.msra.mxu0 %v987
    %1007 = vmatprep.subr.bf16.mxu0 0
    %1008 = vmatpush1.bf16.msra.mxu0 %v986
    %1009 = vmatprep.subr.bf16.mxu0 0
    %1010 = vmatpush1.bf16.msra.mxu0 %v985
    %1011 = vmatprep.subr.bf16.mxu0 0
    %1012 = vmatpush1.bf16.msra.mxu0 %v984
    %1013 = vmatprep.subr.bf16.mxu0 0
    %1014 = vmatpush1.bf16.msra.mxu0 %v983
    %1015 = vmatprep.subr.bf16.mxu0 0
    %1016 = vmatpush2.bf16.msra.mxu0 0
    %1017 = vmatprep.subr.bf16.mxu0 0
    %1018 = vmatpush2.bf16.msra.mxu0 0
    %1019 = vmatprep.subr.bf16.mxu0 0
    %1020 = vmatpush2.bf16.msra.mxu0 0
    %1021 = vmatprep.subr.bf16.mxu0 0
    %1022 = vmatpush2.bf16.msra.mxu0 0
    %1023 = vmatprep.subr.bf16.mxu0 0
    %1024 = vmatpush2.bf16.msra.mxu0 0
    %1025 = vmatprep.subr.bf16.mxu0 0
    %1026 = vmatpush2.bf16.msra.mxu0 0
    %1027 = vmatprep.subr.bf16.mxu0 0
    %1028 = vmatpush2.bf16.msra.mxu0 0
    %1029 = vmatprep.subr.bf16.mxu0 0
    %1030 = vmatpush2.bf16.msra.mxu0 0
    %1031 = vmatprep.mubr.bf16.mxu0 0
    %1032 = vmatmul.mubr.bf16.gmra.mxu0 %v921
    %v1033 = vpop.f32.mrf.mxu0
    %v1034 = vadd.f32 0.0, %v1033
    %v1035 = vpop.f32.mrf.mxu0
    %v1036 = vpop.f32.mrf.mxu0
    %v1037 = vadd.f32 0.0, %v1036
    %v1038 = vpop.f32.mrf.mxu0
    %1039 = vdwg.mxu0
    %v1040 = vadd.f32 %v933, %v1034
    %v1041 = vadd.f32 %v934, %v1037
    %v1042 = vtanh.pop %v1040
    %v1043 = vtanh.pop %v1041
    %v1044 = vpack.c.bf16 %v1043, %v1042
    %v1046 = vunpack.c.l.b16 %v1044
    %v1047 = vunpack.c.h.b16 %v1044
    %v1048 = vpack.c.b16 %v1046, %v1046
    %v1049 = vpack.c.b16 %v1047, %v1047
    %s1052 = scalar_lea.vmem [#allocation3], 40
    %1053 = vst [vmem:[%s1052] sm:$0xf] %v1048
    %1054 = vst [vmem:[%s1052 + $0x4] sm:$0xf] %v1049
    %s1055 = scalar_lea.vmem [#allocation4], 96
    %v1056 = vld [vmem:[%s1055] sm:$0xff]
    %v1057 = vld [vmem:[%s1055 + $0x8] sm:$0xff]
    %v1058 = vld [vmem:[%s3] sm:$0xf]
    %v1059 = vld [vmem:[%s3 + $0x4] sm:$0xf]
    %v1060 = vld [vmem:[%s3 + $0x8] sm:$0xf]
    %v1061 = vld [vmem:[%s3 + $0xc] sm:$0xf]
    %v1062 = vld [vmem:[%s3 + $0x10] sm:$0xf]
    %v1063 = vld [vmem:[%s3 + $0x14] sm:$0xf]
    %v1064 = vld [vmem:[%s3 + $0x18] sm:$0xf]
    %v1065 = vld [vmem:[%s3 + $0x1c] sm:$0xf]
    %v1066 = vld [vmem:[%s3 + $0x20] sm:$0xf]
    %v1067 = vld [vmem:[%s3 + $0x24] sm:$0xf]
    %v1068 = vld [vmem:[%s3 + $0x28] sm:$0xf]
    %v1069 = vld [vmem:[%s3 + $0x2c] sm:$0xf]
    %v1070 = vld [vmem:[%s3 + $0x30] sm:$0xf]
    %v1071 = vld [vmem:[%s3 + $0x34] sm:$0xf]
    %v1072 = vld [vmem:[%s3 + $0x38] sm:$0xf]
    %v1073 = vld [vmem:[%s3 + $0x3c] sm:$0xf]
    %v1090 = vunpack.c.l.b16 %v1058
    %v1091 = vunpack.c.l.b16 %v1059
    %v1092 = vunpack.c.l.b16 %v1060
    %v1093 = vunpack.c.l.b16 %v1061
    %v1094 = vunpack.c.l.b16 %v1062
    %v1095 = vunpack.c.l.b16 %v1063
    %v1096 = vunpack.c.l.b16 %v1064
    %v1097 = vunpack.c.l.b16 %v1065
    %v1098 = vunpack.c.l.b16 %v1066
    %v1099 = vunpack.c.l.b16 %v1067
    %v1100 = vunpack.c.l.b16 %v1068
    %v1101 = vunpack.c.l.b16 %v1069
    %v1102 = vunpack.c.l.b16 %v1070
    %v1103 = vunpack.c.l.b16 %v1071
    %v1104 = vunpack.c.l.b16 %v1072
    %v1105 = vunpack.c.l.b16 %v1073
    %v1106 = vpack.c.b16 %v1091, %v1090
    %v1107 = vpack.c.b16 %v1093, %v1092
    %v1108 = vpack.c.b16 %v1095, %v1094
    %v1109 = vpack.c.b16 %v1097, %v1096
    %v1110 = vpack.c.b16 %v1099, %v1098
    %v1111 = vpack.c.b16 %v1101, %v1100
    %v1112 = vpack.c.b16 %v1103, %v1102
    %v1113 = vpack.c.b16 %v1105, %v1104
    %1122 = vmatprep.subr.bf16.mxu0 0
    %1123 = vmatpush1.bf16.msra.mxu0 %v1113
    %1124 = vmatprep.subr.bf16.mxu0 0
    %1125 = vmatpush1.bf16.msra.mxu0 %v1112
    %1126 = vmatprep.subr.bf16.mxu0 0
    %1127 = vmatpush1.bf16.msra.mxu0 %v1111
    %1128 = vmatprep.subr.bf16.mxu0 0
    %1129 = vmatpush1.bf16.msra.mxu0 %v1110
    %1130 = vmatprep.subr.bf16.mxu0 0
    %1131 = vmatpush1.bf16.msra.mxu0 %v1109
    %1132 = vmatprep.subr.bf16.mxu0 0
    %1133 = vmatpush1.bf16.msra.mxu0 %v1108
    %1134 = vmatprep.subr.bf16.mxu0 0
    %1135 = vmatpush1.bf16.msra.mxu0 %v1107
    %1136 = vmatprep.subr.bf16.mxu0 0
    %1137 = vmatpush1.bf16.msra.mxu0 %v1106
    %1138 = vmatprep.subr.bf16.mxu0 0
    %1139 = vmatpush2.bf16.msra.mxu0 0
    %1140 = vmatprep.subr.bf16.mxu0 0
    %1141 = vmatpush2.bf16.msra.mxu0 0
    %1142 = vmatprep.subr.bf16.mxu0 0
    %1143 = vmatpush2.bf16.msra.mxu0 0
    %1144 = vmatprep.subr.bf16.mxu0 0
    %1145 = vmatpush2.bf16.msra.mxu0 0
    %1146 = vmatprep.subr.bf16.mxu0 0
    %1147 = vmatpush2.bf16.msra.mxu0 0
    %1148 = vmatprep.subr.bf16.mxu0 0
    %1149 = vmatpush2.bf16.msra.mxu0 0
    %1150 = vmatprep.subr.bf16.mxu0 0
    %1151 = vmatpush2.bf16.msra.mxu0 0
    %1152 = vmatprep.subr.bf16.mxu0 0
    %1153 = vmatpush2.bf16.msra.mxu0 0
    %1154 = vmatprep.mubr.bf16.mxu0 0
    %1155 = vmatmul.mubr.bf16.gmra.mxu0 %v1044
    %v1156 = vpop.f32.mrf.mxu0
    %v1157 = vadd.f32 0.0, %v1156
    %v1158 = vpop.f32.mrf.mxu0
    %v1159 = vpop.f32.mrf.mxu0
    %v1160 = vadd.f32 0.0, %v1159
    %v1161 = vpop.f32.mrf.mxu0
    %1162 = vdwg.mxu0
    %v1163 = vadd.f32 %v1056, %v1157
    %v1164 = vadd.f32 %v1057, %v1160
    %v1165 = vtanh.pop %v1163
    %v1166 = vtanh.pop %v1164
    %v1167 = vpack.c.bf16 %v1166, %v1165
    %v1169 = vunpack.c.l.b16 %v1167
    %v1170 = vunpack.c.h.b16 %v1167
    %v1171 = vpack.c.b16 %v1169, %v1169
    %v1172 = vpack.c.b16 %v1170, %v1170
    %s1175 = scalar_lea.vmem [#allocation3], 48
    %1176 = vst [vmem:[%s1175] sm:$0xf] %v1171
    %1177 = vst [vmem:[%s1175 + $0x4] sm:$0xf] %v1172
    %s1178 = scalar_lea.vmem [#allocation4], 112
    %v1179 = vld [vmem:[%s1178] sm:$0xff]
    %v1180 = vld [vmem:[%s1178 + $0x8] sm:$0xff]
    %v1181 = vld [vmem:[%s3] sm:$0xf]
    %v1182 = vld [vmem:[%s3 + $0x4] sm:$0xf]
    %v1183 = vld [vmem:[%s3 + $0x8] sm:$0xf]
    %v1184 = vld [vmem:[%s3 + $0xc] sm:$0xf]
    %v1185 = vld [vmem:[%s3 + $0x10] sm:$0xf]
    %v1186 = vld [vmem:[%s3 + $0x14] sm:$0xf]
    %v1187 = vld [vmem:[%s3 + $0x18] sm:$0xf]
    %v1188 = vld [vmem:[%s3 + $0x1c] sm:$0xf]
    %v1189 = vld [vmem:[%s3 + $0x20] sm:$0xf]
    %v1190 = vld [vmem:[%s3 + $0x24] sm:$0xf]
    %v1191 = vld [vmem:[%s3 + $0x28] sm:$0xf]
    %v1192 = vld [vmem:[%s3 + $0x2c] sm:$0xf]
    %v1193 = vld [vmem:[%s3 + $0x30] sm:$0xf]
    %v1194 = vld [vmem:[%s3 + $0x34] sm:$0xf]
    %v1195 = vld [vmem:[%s3 + $0x38] sm:$0xf]
    %v1196 = vld [vmem:[%s3 + $0x3c] sm:$0xf]
    %v1213 = vunpack.c.l.b16 %v1181
    %v1214 = vunpack.c.l.b16 %v1182
    %v1215 = vunpack.c.l.b16 %v1183
    %v1216 = vunpack.c.l.b16 %v1184
    %v1217 = vunpack.c.l.b16 %v1185
    %v1218 = vunpack.c.l.b16 %v1186
    %v1219 = vunpack.c.l.b16 %v1187
    %v1220 = vunpack.c.l.b16 %v1188
    %v1221 = vunpack.c.l.b16 %v1189
    %v1222 = vunpack.c.l.b16 %v1190
    %v1223 = vunpack.c.l.b16 %v1191
    %v1224 = vunpack.c.l.b16 %v1192
    %v1225 = vunpack.c.l.b16 %v1193
    %v1226 = vunpack.c.l.b16 %v1194
    %v1227 = vunpack.c.l.b16 %v1195
    %v1228 = vunpack.c.l.b16 %v1196
    %v1229 = vpack.c.b16 %v1214, %v1213
    %v1230 = vpack.c.b16 %v1216, %v1215
    %v1231 = vpack.c.b16 %v1218, %v1217
    %v1232 = vpack.c.b16 %v1220, %v1219
    %v1233 = vpack.c.b16 %v1222, %v1221
    %v1234 = vpack.c.b16 %v1224, %v1223
    %v1235 = vpack.c.b16 %v1226, %v1225
    %v1236 = vpack.c.b16 %v1228, %v1227
    %1245 = vmatprep.subr.bf16.mxu0 0
    %1246 = vmatpush1.bf16.msra.mxu0 %v1236
    %1247 = vmatprep.subr.bf16.mxu0 0
    %1248 = vmatpush1.bf16.msra.mxu0 %v1235
    %1249 = vmatprep.subr.bf16.mxu0 0
    %1250 = vmatpush1.bf16.msra.mxu0 %v1234
    %1251 = vmatprep.subr.bf16.mxu0 0
    %1252 = vmatpush1.bf16.msra.mxu0 %v1233
    %1253 = vmatprep.subr.bf16.mxu0 0
    %1254 = vmatpush1.bf16.msra.mxu0 %v1232
    %1255 = vmatprep.subr.bf16.mxu0 0
    %1256 = vmatpush1.bf16.msra.mxu0 %v1231
    %1257 = vmatprep.subr.bf16.mxu0 0
    %1258 = vmatpush1.bf16.msra.mxu0 %v1230
    %1259 = vmatprep.subr.bf16.mxu0 0
    %1260 = vmatpush1.bf16.msra.mxu0 %v1229
    %1261 = vmatprep.subr.bf16.mxu0 0
    %1262 = vmatpush2.bf16.msra.mxu0 0
    %1263 = vmatprep.subr.bf16.mxu0 0
    %1264 = vmatpush2.bf16.msra.mxu0 0
    %1265 = vmatprep.subr.bf16.mxu0 0
    %1266 = vmatpush2.bf16.msra.mxu0 0
    %1267 = vmatprep.subr.bf16.mxu0 0
    %1268 = vmatpush2.bf16.msra.mxu0 0
    %1269 = vmatprep.subr.bf16.mxu0 0
    %1270 = vmatpush2.bf16.msra.mxu0 0
    %1271 = vmatprep.subr.bf16.mxu0 0
    %1272 = vmatpush2.bf16.msra.mxu0 0
    %1273 = vmatprep.subr.bf16.mxu0 0
    %1274 = vmatpush2.bf16.msra.mxu0 0
    %1275 = vmatprep.subr.bf16.mxu0 0
    %1276 = vmatpush2.bf16.msra.mxu0 0
    %1277 = vmatprep.mubr.bf16.mxu0 0
    %1278 = vmatmul.mubr.bf16.gmra.mxu0 %v1167
    %v1279 = vpop.f32.mrf.mxu0
    %v1280 = vadd.f32 0.0, %v1279
    %v1281 = vpop.f32.mrf.mxu0
    %v1282 = vpop.f32.mrf.mxu0
    %v1283 = vadd.f32 0.0, %v1282
    %v1284 = vpop.f32.mrf.mxu0
    %1285 = vdwg.mxu0
    %v1286 = vadd.f32 %v1179, %v1280
    %v1287 = vadd.f32 %v1180, %v1283
    %v1288 = vtanh.pop %v1286
    %v1289 = vtanh.pop %v1287
    %v1290 = vpack.c.bf16 %v1289, %v1288
    %v1292 = vunpack.c.l.b16 %v1290
    %v1293 = vunpack.c.h.b16 %v1290
    %v1294 = vpack.c.b16 %v1292, %v1292
    %v1295 = vpack.c.b16 %v1293, %v1293
    %s1298 = scalar_lea.vmem [#allocation3], 56
    %1299 = vst [vmem:[%s1298] sm:$0xf] %v1294
    %1300 = vst [vmem:[%s1298 + $0x4] sm:$0xf] %v1295
    %1301 = vst [vmem:[#allocation2] sm:$0xff] %v1288
    %1302 = vst [vmem:[#allocation2 + $0x8] sm:$0xff] %v1289
    %v1303 = vld [vmem:[#allocation3] sm:$0xf]
    %v1304 = vld [vmem:[#allocation3 + $0x4] sm:$0xf]
    %v1305 = vld [vmem:[#allocation3 + $0x8] sm:$0xf]
    %v1306 = vld [vmem:[#allocation3 + $0xc] sm:$0xf]
    %v1307 = vld [vmem:[#allocation3 + $0x10] sm:$0xf]
    %v1308 = vld [vmem:[#allocation3 + $0x14] sm:$0xf]
    %v1309 = vld [vmem:[#allocation3 + $0x18] sm:$0xf]
    %v1310 = vld [vmem:[#allocation3 + $0x1c] sm:$0xf]
    %v1311 = vld [vmem:[#allocation3 + $0x20] sm:$0xf]
    %v1312 = vld [vmem:[#allocation3 + $0x24] sm:$0xf]
    %v1313 = vld [vmem:[#allocation3 + $0x28] sm:$0xf]
    %v1314 = vld [vmem:[#allocation3 + $0x2c] sm:$0xf]
    %v1315 = vld [vmem:[#allocation3 + $0x30] sm:$0xf]
    %v1316 = vld [vmem:[#allocation3 + $0x34] sm:$0xf]
    %v1317 = vld [vmem:[#allocation3 + $0x38] sm:$0xf]
    %v1318 = vld [vmem:[#allocation3 + $0x3c] sm:$0xf]
    %v1319 = vld [vmem:[#allocation5] sm:$0xf]
    %v1320 = vld [vmem:[#allocation5 + $0x4] sm:$0xf]
    %v1321 = vld [vmem:[#allocation5 + $0x8] sm:$0xf]
    %v1322 = vld [vmem:[#allocation5 + $0xc] sm:$0xf]
    %v1323 = vld [vmem:[#allocation5 + $0x10] sm:$0xf]
    %v1324 = vld [vmem:[#allocation5 + $0x14] sm:$0xf]
    %v1325 = vld [vmem:[#allocation5 + $0x18] sm:$0xf]
    %v1326 = vld [vmem:[#allocation5 + $0x1c] sm:$0xf]
    %v1327 = vld [vmem:[#allocation5 + $0x20] sm:$0xf]
    %v1328 = vld [vmem:[#allocation5 + $0x24] sm:$0xf]
    %v1329 = vld [vmem:[#allocation5 + $0x28] sm:$0xf]
    %v1330 = vld [vmem:[#allocation5 + $0x2c] sm:$0xf]
    %v1331 = vld [vmem:[#allocation5 + $0x30] sm:$0xf]
    %v1332 = vld [vmem:[#allocation5 + $0x34] sm:$0xf]
    %v1333 = vld [vmem:[#allocation5 + $0x38] sm:$0xf]
    %v1334 = vld [vmem:[#allocation5 + $0x3c] sm:$0xf]
    %v1351 = vunpack.c.l.b16 %v1303
    %v1352 = vunpack.c.l.b16 %v1304
    %v1353 = vunpack.c.l.b16 %v1305
    %v1354 = vunpack.c.l.b16 %v1306
    %v1355 = vunpack.c.l.b16 %v1307
    %v1356 = vunpack.c.l.b16 %v1308
    %v1357 = vunpack.c.l.b16 %v1309
    %v1358 = vunpack.c.l.b16 %v1310
    %v1359 = vunpack.c.l.b16 %v1311
    %v1360 = vunpack.c.l.b16 %v1312
    %v1361 = vunpack.c.l.b16 %v1313
    %v1362 = vunpack.c.l.b16 %v1314
    %v1363 = vunpack.c.l.b16 %v1315
    %v1364 = vunpack.c.l.b16 %v1316
    %v1365 = vunpack.c.l.b16 %v1317
    %v1366 = vunpack.c.l.b16 %v1318
    %v1367 = vpack.c.b16 %v1352, %v1351
    %v1368 = vpack.c.b16 %v1354, %v1353
    %v1369 = vpack.c.b16 %v1356, %v1355
    %v1370 = vpack.c.b16 %v1358, %v1357
    %v1371 = vpack.c.b16 %v1360, %v1359
    %v1372 = vpack.c.b16 %v1362, %v1361
    %v1373 = vpack.c.b16 %v1364, %v1363
    %v1374 = vpack.c.b16 %v1366, %v1365
    %v1399 = vunpack.c.l.b16 %v1319
    %v1400 = vunpack.c.l.b16 %v1320
    %v1401 = vunpack.c.l.b16 %v1321
    %v1402 = vunpack.c.l.b16 %v1322
    %v1403 = vunpack.c.l.b16 %v1323
    %v1404 = vunpack.c.l.b16 %v1324
    %v1405 = vunpack.c.l.b16 %v1325
    %v1406 = vunpack.c.l.b16 %v1326
    %v1407 = vunpack.c.l.b16 %v1327
    %v1408 = vunpack.c.l.b16 %v1328
    %v1409 = vunpack.c.l.b16 %v1329
    %v1410 = vunpack.c.l.b16 %v1330
    %v1411 = vunpack.c.l.b16 %v1331
    %v1412 = vunpack.c.l.b16 %v1332
    %v1413 = vunpack.c.l.b16 %v1333
    %v1414 = vunpack.c.l.b16 %v1334
    %v1415 = vpack.c.b16 %v1400, %v1399
    %v1416 = vpack.c.b16 %v1402, %v1401
    %v1417 = vpack.c.b16 %v1404, %v1403
    %v1418 = vpack.c.b16 %v1406, %v1405
    %v1419 = vpack.c.b16 %v1408, %v1407
    %v1420 = vpack.c.b16 %v1410, %v1409
    %v1421 = vpack.c.b16 %v1412, %v1411
    %v1422 = vpack.c.b16 %v1414, %v1413
    %1431 = vmatprep.subr.bf16.mxu0 0
    %1432 = vmatpush1.bf16.msra.mxu0 %v1422
    %1433 = vmatprep.subr.bf16.mxu0 0
    %1434 = vmatpush1.bf16.msra.mxu0 %v1421
    %1435 = vmatprep.subr.bf16.mxu0 0
    %1436 = vmatpush1.bf16.msra.mxu0 %v1420
    %1437 = vmatprep.subr.bf16.mxu0 0
    %1438 = vmatpush1.bf16.msra.mxu0 %v1419
    %1439 = vmatprep.subr.bf16.mxu0 0
    %1440 = vmatpush1.bf16.msra.mxu0 %v1418
    %1441 = vmatprep.subr.bf16.mxu0 0
    %1442 = vmatpush1.bf16.msra.mxu0 %v1417
    %1443 = vmatprep.subr.bf16.mxu0 0
    %1444 = vmatpush1.bf16.msra.mxu0 %v1416
    %1445 = vmatprep.subr.bf16.mxu0 0
    %1446 = vmatpush1.bf16.msra.mxu0 %v1415
    %1447 = vmatprep.subr.bf16.mxu0 0
    %1448 = vmatpush2.bf16.msra.mxu0 0
    %1449 = vmatprep.subr.bf16.mxu0 0
    %1450 = vmatpush2.bf16.msra.mxu0 0
    %1451 = vmatprep.subr.bf16.mxu0 0
    %1452 = vmatpush2.bf16.msra.mxu0 0
    %1453 = vmatprep.subr.bf16.mxu0 0
    %1454 = vmatpush2.bf16.msra.mxu0 0
    %1455 = vmatprep.subr.bf16.mxu0 0
    %1456 = vmatpush2.bf16.msra.mxu0 0
    %1457 = vmatprep.subr.bf16.mxu0 0
    %1458 = vmatpush2.bf16.msra.mxu0 0
    %1459 = vmatprep.subr.bf16.mxu0 0
    %1460 = vmatpush2.bf16.msra.mxu0 0
    %1461 = vmatprep.subr.bf16.mxu0 0
    %1462 = vmatpush2.bf16.msra.mxu0 0
    %1463 = vmatprep.mubr.bf16.mxu0 0
    %1464 = vmatmul.mubr.bf16.gmra.mxu0 %v1367
    %v1465 = vpop.f32.mrf.mxu0
    %v1466 = vadd.f32 0.0, %v1465
    %v1467 = vpop.f32.mrf.mxu0
    %v1468 = vpop.f32.mrf.mxu0
    %v1469 = vadd.f32 0.0, %v1468
    %v1470 = vpop.f32.mrf.mxu0
    %1471 = vmatprep.mubr.bf16.mxu0 0
    %1472 = vmatmul.mubr.bf16.gmra.mxu0 %v1368
    %v1473 = vpop.f32.mrf.mxu0
    %v1474 = vadd.f32 0.0, %v1473
    %v1475 = vpop.f32.mrf.mxu0
    %v1476 = vpop.f32.mrf.mxu0
    %v1477 = vadd.f32 0.0, %v1476
    %v1478 = vpop.f32.mrf.mxu0
    %1479 = vmatprep.mubr.bf16.mxu0 0
    %1480 = vmatmul.mubr.bf16.gmra.mxu0 %v1369
    %v1481 = vpop.f32.mrf.mxu0
    %v1482 = vadd.f32 0.0, %v1481
    %v1483 = vpop.f32.mrf.mxu0
    %v1484 = vpop.f32.mrf.mxu0
    %v1485 = vadd.f32 0.0, %v1484
    %v1486 = vpop.f32.mrf.mxu0
    %1487 = vmatprep.mubr.bf16.mxu0 0
    %1488 = vmatmul.mubr.bf16.gmra.mxu0 %v1370
    %v1489 = vpop.f32.mrf.mxu0
    %v1490 = vadd.f32 0.0, %v1489
    %v1491 = vpop.f32.mrf.mxu0
    %v1492 = vpop.f32.mrf.mxu0
    %v1493 = vadd.f32 0.0, %v1492
    %v1494 = vpop.f32.mrf.mxu0
    %1495 = vmatprep.mubr.bf16.mxu0 0
    %1496 = vmatmul.mubr.bf16.gmra.mxu0 %v1371
    %v1497 = vpop.f32.mrf.mxu0
    %v1498 = vadd.f32 0.0, %v1497
    %v1499 = vpop.f32.mrf.mxu0
    %v1500 = vpop.f32.mrf.mxu0
    %v1501 = vadd.f32 0.0, %v1500
    %v1502 = vpop.f32.mrf.mxu0
    %1503 = vmatprep.mubr.bf16.mxu0 0
    %1504 = vmatmul.mubr.bf16.gmra.mxu0 %v1372
    %v1505 = vpop.f32.mrf.mxu0
    %v1506 = vadd.f32 0.0, %v1505
    %v1507 = vpop.f32.mrf.mxu0
    %v1508 = vpop.f32.mrf.mxu0
    %v1509 = vadd.f32 0.0, %v1508
    %v1510 = vpop.f32.mrf.mxu0
    %1511 = vmatprep.mubr.bf16.mxu0 0
    %1512 = vmatmul.mubr.bf16.gmra.mxu0 %v1373
    %v1513 = vpop.f32.mrf.mxu0
    %v1514 = vadd.f32 0.0, %v1513
    %v1515 = vpop.f32.mrf.mxu0
    %v1516 = vpop.f32.mrf.mxu0
    %v1517 = vadd.f32 0.0, %v1516
    %v1518 = vpop.f32.mrf.mxu0
    %1519 = vmatprep.mubr.bf16.mxu0 0
    %1520 = vmatmul.mubr.bf16.gmra.mxu0 %v1374
    %v1521 = vpop.f32.mrf.mxu0
    %v1522 = vadd.f32 0.0, %v1521
    %v1523 = vpop.f32.mrf.mxu0
    %v1524 = vpop.f32.mrf.mxu0
    %v1525 = vadd.f32 0.0, %v1524
    %v1526 = vpop.f32.mrf.mxu0
    %1527 = vdwg.mxu0
    %s1528 = scalar_lea.vmem %s4, 1
    %v1529 = vld [vmem:[%s1528] sm:$0x1]
    %v1531 = vlaneseq
    %v1532 = vshrl.u32 %v1531, 7
    %v1533 = vsub.s32 0, %v1532
    %v1534 = vrot.slane %v1529, %v1533
    %v1536 = vadd.f32 %v1466, %v1534
    %v1537 = vadd.f32 %v1469, %v1534
    %v1538 = vadd.f32 %v1474, %v1534
    %v1539 = vadd.f32 %v1477, %v1534
    %v1540 = vadd.f32 %v1482, %v1534
    %v1541 = vadd.f32 %v1485, %v1534
    %v1542 = vadd.f32 %v1490, %v1534
    %v1543 = vadd.f32 %v1493, %v1534
    %v1544 = vadd.f32 %v1498, %v1534
    %v1545 = vadd.f32 %v1501, %v1534
    %v1546 = vadd.f32 %v1506, %v1534
    %v1547 = vadd.f32 %v1509, %v1534
    %v1548 = vadd.f32 %v1514, %v1534
    %v1549 = vadd.f32 %v1517, %v1534
    %v1550 = vadd.f32 %v1522, %v1534
    %v1551 = vadd.f32 %v1525, %v1534
    %1552 = vst [vmem:[#allocation4] sm:$0xff] %v1536
    %1553 = vst [vmem:[#allocation4 + $0x8] sm:$0xff] %v1537
    %1554 = vst [vmem:[#allocation4 + $0x10] sm:$0xff] %v1538
    %1555 = vst [vmem:[#allocation4 + $0x18] sm:$0xff] %v1539
    %1556 = vst [vmem:[#allocation4 + $0x20] sm:$0xff] %v1540
    %1557 = vst [vmem:[#allocation4 + $0x28] sm:$0xff] %v1541
    %1558 = vst [vmem:[#allocation4 + $0x30] sm:$0xff] %v1542
    %1559 = vst [vmem:[#allocation4 + $0x38] sm:$0xff] %v1543
    %1560 = vst [vmem:[#allocation4 + $0x40] sm:$0xff] %v1544
    %1561 = vst [vmem:[#allocation4 + $0x48] sm:$0xff] %v1545
    %1562 = vst [vmem:[#allocation4 + $0x50] sm:$0xff] %v1546
    %1563 = vst [vmem:[#allocation4 + $0x58] sm:$0xff] %v1547
    %1564 = vst [vmem:[#allocation4 + $0x60] sm:$0xff] %v1548
    %1565 = vst [vmem:[#allocation4 + $0x68] sm:$0xff] %v1549
    %1566 = vst [vmem:[#allocation4 + $0x70] sm:$0xff] %v1550
    %1567 = vst [vmem:[#allocation4 + $0x78] sm:$0xff] %v1551
    %s1568 = scalar_lea.vmem [#allocation2], 16
    %v1569 = vld [vmem:[%s1568] sm:$0xff]
    %v1570 = vld [vmem:[%s1568 + $0x8] sm:$0xff]
    %v1571 = vpack.c.bf16 %v1570, %v1569
    %v1572 = vld [vmem:[#allocation4] sm:$0xff]
    %v1573 = vld [vmem:[#allocation4 + $0x8] sm:$0xff]
    %s1574 = scalar_lea.vmem %s3, 64
    %v1575 = vld [vmem:[%s1574] sm:$0xf]
    %v1576 = vld [vmem:[%s1574 + $0x4] sm:$0xf]
    %v1577 = vld [vmem:[%s1574 + $0x8] sm:$0xf]
    %v1578 = vld [vmem:[%s1574 + $0xc] sm:$0xf]
    %v1579 = vld [vmem:[%s1574 + $0x10] sm:$0xf]
    %v1580 = vld [vmem:[%s1574 + $0x14] sm:$0xf]
    %v1581 = vld [vmem:[%s1574 + $0x18] sm:$0xf]
    %v1582 = vld [vmem:[%s1574 + $0x1c] sm:$0xf]
    %v1583 = vld [vmem:[%s1574 + $0x20] sm:$0xf]
    %v1584 = vld [vmem:[%s1574 + $0x24] sm:$0xf]
    %v1585 = vld [vmem:[%s1574 + $0x28] sm:$0xf]
    %v1586 = vld [vmem:[%s1574 + $0x2c] sm:$0xf]
    %v1587 = vld [vmem:[%s1574 + $0x30] sm:$0xf]
    %v1588 = vld [vmem:[%s1574 + $0x34] sm:$0xf]
    %v1589 = vld [vmem:[%s1574 + $0x38] sm:$0xf]
    %v1590 = vld [vmem:[%s1574 + $0x3c] sm:$0xf]
    %v1607 = vunpack.c.l.b16 %v1575
    %v1608 = vunpack.c.l.b16 %v1576
    %v1609 = vunpack.c.l.b16 %v1577
    %v1610 = vunpack.c.l.b16 %v1578
    %v1611 = vunpack.c.l.b16 %v1579
    %v1612 = vunpack.c.l.b16 %v1580
    %v1613 = vunpack.c.l.b16 %v1581
    %v1614 = vunpack.c.l.b16 %v1582
    %v1615 = vunpack.c.l.b16 %v1583
    %v1616 = vunpack.c.l.b16 %v1584
    %v1617 = vunpack.c.l.b16 %v1585
    %v1618 = vunpack.c.l.b16 %v1586
    %v1619 = vunpack.c.l.b16 %v1587
    %v1620 = vunpack.c.l.b16 %v1588
    %v1621 = vunpack.c.l.b16 %v1589
    %v1622 = vunpack.c.l.b16 %v1590
    %v1623 = vpack.c.b16 %v1608, %v1607
    %v1624 = vpack.c.b16 %v1610, %v1609
    %v1625 = vpack.c.b16 %v1612, %v1611
    %v1626 = vpack.c.b16 %v1614, %v1613
    %v1627 = vpack.c.b16 %v1616, %v1615
    %v1628 = vpack.c.b16 %v1618, %v1617
    %v1629 = vpack.c.b16 %v1620, %v1619
    %v1630 = vpack.c.b16 %v1622, %v1621
    %1639 = vmatprep.subr.bf16.mxu0 0
    %1640 = vmatpush1.bf16.msra.mxu0 %v1630
    %1641 = vmatprep.subr.bf16.mxu0 0
    %1642 = vmatpush1.bf16.msra.mxu0 %v1629
    %1643 = vmatprep.subr.bf16.mxu0 0
    %1644 = vmatpush1.bf16.msra.mxu0 %v1628
    %1645 = vmatprep.subr.bf16.mxu0 0
    %1646 = vmatpush1.bf16.msra.mxu0 %v1627
    %1647 = vmatprep.subr.bf16.mxu0 0
    %1648 = vmatpush1.bf16.msra.mxu0 %v1626
    %1649 = vmatprep.subr.bf16.mxu0 0
    %1650 = vmatpush1.bf16.msra.mxu0 %v1625
    %1651 = vmatprep.subr.bf16.mxu0 0
    %1652 = vmatpush1.bf16.msra.mxu0 %v1624
    %1653 = vmatprep.subr.bf16.mxu0 0
    %1654 = vmatpush1.bf16.msra.mxu0 %v1623
    %1655 = vmatprep.subr.bf16.mxu0 0
    %1656 = vmatpush2.bf16.msra.mxu0 0
    %1657 = vmatprep.subr.bf16.mxu0 0
    %1658 = vmatpush2.bf16.msra.mxu0 0
    %1659 = vmatprep.subr.bf16.mxu0 0
    %1660 = vmatpush2.bf16.msra.mxu0 0
    %1661 = vmatprep.subr.bf16.mxu0 0
    %1662 = vmatpush2.bf16.msra.mxu0 0
    %1663 = vmatprep.subr.bf16.mxu0 0
    %1664 = vmatpush2.bf16.msra.mxu0 0
    %1665 = vmatprep.subr.bf16.mxu0 0
    %1666 = vmatpush2.bf16.msra.mxu0 0
    %1667 = vmatprep.subr.bf16.mxu0 0
    %1668 = vmatpush2.bf16.msra.mxu0 0
    %1669 = vmatprep.subr.bf16.mxu0 0
    %1670 = vmatpush2.bf16.msra.mxu0 0
    %1671 = vmatprep.mubr.bf16.mxu0 0
    %1672 = vmatmul.mubr.bf16.gmra.mxu0 %v1571
    %v1673 = vpop.f32.mrf.mxu0
    %v1674 = vadd.f32 0.0, %v1673
    %v1675 = vpop.f32.mrf.mxu0
    %v1676 = vpop.f32.mrf.mxu0
    %v1677 = vadd.f32 0.0, %v1676
    %v1678 = vpop.f32.mrf.mxu0
    %1679 = vdwg.mxu0
    %v1680 = vadd.f32 %v1572, %v1674
    %v1681 = vadd.f32 %v1573, %v1677
    %v1682 = vtanh.pop %v1680
    %v1683 = vtanh.pop %v1681
    %v1684 = vpack.c.bf16 %v1683, %v1682
    %v1686 = vunpack.c.l.b16 %v1684
    %v1687 = vunpack.c.h.b16 %v1684
    %v1688 = vpack.c.b16 %v1686, %v1686
    %v1689 = vpack.c.b16 %v1687, %v1687
    %1692 = vst [vmem:[%s6] sm:$0xf] %v1688
    %1693 = vst [vmem:[%s6 + $0x4] sm:$0xf] %v1689
    %v1694 = vld [vmem:[%s440] sm:$0xff]
    %v1695 = vld [vmem:[%s440 + $0x8] sm:$0xff]
    %v1696 = vld [vmem:[%s1574] sm:$0xf]
    %v1697 = vld [vmem:[%s1574 + $0x4] sm:$0xf]
    %v1698 = vld [vmem:[%s1574 + $0x8] sm:$0xf]
    %v1699 = vld [vmem:[%s1574 + $0xc] sm:$0xf]
    %v1700 = vld [vmem:[%s1574 + $0x10] sm:$0xf]
    %v1701 = vld [vmem:[%s1574 + $0x14] sm:$0xf]
    %v1702 = vld [vmem:[%s1574 + $0x18] sm:$0xf]
    %v1703 = vld [vmem:[%s1574 + $0x1c] sm:$0xf]
    %v1704 = vld [vmem:[%s1574 + $0x20] sm:$0xf]
    %v1705 = vld [vmem:[%s1574 + $0x24] sm:$0xf]
    %v1706 = vld [vmem:[%s1574 + $0x28] sm:$0xf]
    %v1707 = vld [vmem:[%s1574 + $0x2c] sm:$0xf]
    %v1708 = vld [vmem:[%s1574 + $0x30] sm:$0xf]
    %v1709 = vld [vmem:[%s1574 + $0x34] sm:$0xf]
    %v1710 = vld [vmem:[%s1574 + $0x38] sm:$0xf]
    %v1711 = vld [vmem:[%s1574 + $0x3c] sm:$0xf]
    %v1728 = vunpack.c.l.b16 %v1696
    %v1729 = vunpack.c.l.b16 %v1697
    %v1730 = vunpack.c.l.b16 %v1698
    %v1731 = vunpack.c.l.b16 %v1699
    %v1732 = vunpack.c.l.b16 %v1700
    %v1733 = vunpack.c.l.b16 %v1701
    %v1734 = vunpack.c.l.b16 %v1702
    %v1735 = vunpack.c.l.b16 %v1703
    %v1736 = vunpack.c.l.b16 %v1704
    %v1737 = vunpack.c.l.b16 %v1705
    %v1738 = vunpack.c.l.b16 %v1706
    %v1739 = vunpack.c.l.b16 %v1707
    %v1740 = vunpack.c.l.b16 %v1708
    %v1741 = vunpack.c.l.b16 %v1709
    %v1742 = vunpack.c.l.b16 %v1710
    %v1743 = vunpack.c.l.b16 %v1711
    %v1744 = vpack.c.b16 %v1729, %v1728
    %v1745 = vpack.c.b16 %v1731, %v1730
    %v1746 = vpack.c.b16 %v1733, %v1732
    %v1747 = vpack.c.b16 %v1735, %v1734
    %v1748 = vpack.c.b16 %v1737, %v1736
    %v1749 = vpack.c.b16 %v1739, %v1738
    %v1750 = vpack.c.b16 %v1741, %v1740
    %v1751 = vpack.c.b16 %v1743, %v1742
    %1760 = vmatprep.subr.bf16.mxu0 0
    %1761 = vmatpush1.bf16.msra.mxu0 %v1751
    %1762 = vmatprep.subr.bf16.mxu0 0
    %1763 = vmatpush1.bf16.msra.mxu0 %v1750
    %1764 = vmatprep.subr.bf16.mxu0 0
    %1765 = vmatpush1.bf16.msra.mxu0 %v1749
    %1766 = vmatprep.subr.bf16.mxu0 0
    %1767 = vmatpush1.bf16.msra.mxu0 %v1748
    %1768 = vmatprep.subr.bf16.mxu0 0
    %1769 = vmatpush1.bf16.msra.mxu0 %v1747
    %1770 = vmatprep.subr.bf16.mxu0 0
    %1771 = vmatpush1.bf16.msra.mxu0 %v1746
    %1772 = vmatprep.subr.bf16.mxu0 0
    %1773 = vmatpush1.bf16.msra.mxu0 %v1745
    %1774 = vmatprep.subr.bf16.mxu0 0
    %1775 = vmatpush1.bf16.msra.mxu0 %v1744
    %1776 = vmatprep.subr.bf16.mxu0 0
    %1777 = vmatpush2.bf16.msra.mxu0 0
    %1778 = vmatprep.subr.bf16.mxu0 0
    %1779 = vmatpush2.bf16.msra.mxu0 0
    %1780 = vmatprep.subr.bf16.mxu0 0
    %1781 = vmatpush2.bf16.msra.mxu0 0
    %1782 = vmatprep.subr.bf16.mxu0 0
    %1783 = vmatpush2.bf16.msra.mxu0 0
    %1784 = vmatprep.subr.bf16.mxu0 0
    %1785 = vmatpush2.bf16.msra.mxu0 0
    %1786 = vmatprep.subr.bf16.mxu0 0
    %1787 = vmatpush2.bf16.msra.mxu0 0
    %1788 = vmatprep.subr.bf16.mxu0 0
    %1789 = vmatpush2.bf16.msra.mxu0 0
    %1790 = vmatprep.subr.bf16.mxu0 0
    %1791 = vmatpush2.bf16.msra.mxu0 0
    %1792 = vmatprep.mubr.bf16.mxu0 0
    %1793 = vmatmul.mubr.bf16.gmra.mxu0 %v1684
    %v1794 = vpop.f32.mrf.mxu0
    %v1795 = vadd.f32 0.0, %v1794
    %v1796 = vpop.f32.mrf.mxu0
    %v1797 = vpop.f32.mrf.mxu0
    %v1798 = vadd.f32 0.0, %v1797
    %v1799 = vpop.f32.mrf.mxu0
    %1800 = vdwg.mxu0
    %v1801 = vadd.f32 %v1694, %v1795
    %v1802 = vadd.f32 %v1695, %v1798
    %v1803 = vtanh.pop %v1801
    %v1804 = vtanh.pop %v1802
    %v1805 = vpack.c.bf16 %v1804, %v1803
    %v1807 = vunpack.c.l.b16 %v1805
    %v1808 = vunpack.c.h.b16 %v1805
    %v1809 = vpack.c.b16 %v1807, %v1807
    %v1810 = vpack.c.b16 %v1808, %v1808
    %s1813 = scalar_lea.vmem %s6, 8
    %1814 = vst [vmem:[%s1813] sm:$0xf] %v1809
    %1815 = vst [vmem:[%s1813 + $0x4] sm:$0xf] %v1810
    %v1816 = vld [vmem:[%s563] sm:$0xff]
    %v1817 = vld [vmem:[%s563 + $0x8] sm:$0xff]
    %v1818 = vld [vmem:[%s1574] sm:$0xf]
    %v1819 = vld [vmem:[%s1574 + $0x4] sm:$0xf]
    %v1820 = vld [vmem:[%s1574 + $0x8] sm:$0xf]
    %v1821 = vld [vmem:[%s1574 + $0xc] sm:$0xf]
    %v1822 = vld [vmem:[%s1574 + $0x10] sm:$0xf]
    %v1823 = vld [vmem:[%s1574 + $0x14] sm:$0xf]
    %v1824 = vld [vmem:[%s1574 + $0x18] sm:$0xf]
    %v1825 = vld [vmem:[%s1574 + $0x1c] sm:$0xf]
    %v1826 = vld [vmem:[%s1574 + $0x20] sm:$0xf]
    %v1827 = vld [vmem:[%s1574 + $0x24] sm:$0xf]
    %v1828 = vld [vmem:[%s1574 + $0x28] sm:$0xf]
    %v1829 = vld [vmem:[%s1574 + $0x2c] sm:$0xf]
    %v1830 = vld [vmem:[%s1574 + $0x30] sm:$0xf]
    %v1831 = vld [vmem:[%s1574 + $0x34] sm:$0xf]
    %v1832 = vld [vmem:[%s1574 + $0x38] sm:$0xf]
    %v1833 = vld [vmem:[%s1574 + $0x3c] sm:$0xf]
    %v1850 = vunpack.c.l.b16 %v1818
    %v1851 = vunpack.c.l.b16 %v1819
    %v1852 = vunpack.c.l.b16 %v1820
    %v1853 = vunpack.c.l.b16 %v1821
    %v1854 = vunpack.c.l.b16 %v1822
    %v1855 = vunpack.c.l.b16 %v1823
    %v1856 = vunpack.c.l.b16 %v1824
    %v1857 = vunpack.c.l.b16 %v1825
    %v1858 = vunpack.c.l.b16 %v1826
    %v1859 = vunpack.c.l.b16 %v1827
    %v1860 = vunpack.c.l.b16 %v1828
    %v1861 = vunpack.c.l.b16 %v1829
    %v1862 = vunpack.c.l.b16 %v1830
    %v1863 = vunpack.c.l.b16 %v1831
    %v1864 = vunpack.c.l.b16 %v1832
    %v1865 = vunpack.c.l.b16 %v1833
    %v1866 = vpack.c.b16 %v1851, %v1850
    %v1867 = vpack.c.b16 %v1853, %v1852
    %v1868 = vpack.c.b16 %v1855, %v1854
    %v1869 = vpack.c.b16 %v1857, %v1856
    %v1870 = vpack.c.b16 %v1859, %v1858
    %v1871 = vpack.c.b16 %v1861, %v1860
    %v1872 = vpack.c.b16 %v1863, %v1862
    %v1873 = vpack.c.b16 %v1865, %v1864
    %1882 = vmatprep.subr.bf16.mxu0 0
    %1883 = vmatpush1.bf16.msra.mxu0 %v1873
    %1884 = vmatprep.subr.bf16.mxu0 0
    %1885 = vmatpush1.bf16.msra.mxu0 %v1872
    %1886 = vmatprep.subr.bf16.mxu0 0
    %1887 = vmatpush1.bf16.msra.mxu0 %v1871
    %1888 = vmatprep.subr.bf16.mxu0 0
    %1889 = vmatpush1.bf16.msra.mxu0 %v1870
    %1890 = vmatprep.subr.bf16.mxu0 0
    %1891 = vmatpush1.bf16.msra.mxu0 %v1869
    %1892 = vmatprep.subr.bf16.mxu0 0
    %1893 = vmatpush1.bf16.msra.mxu0 %v1868
    %1894 = vmatprep.subr.bf16.mxu0 0
    %1895 = vmatpush1.bf16.msra.mxu0 %v1867
    %1896 = vmatprep.subr.bf16.mxu0 0
    %1897 = vmatpush1.bf16.msra.mxu0 %v1866
    %1898 = vmatprep.subr.bf16.mxu0 0
    %1899 = vmatpush2.bf16.msra.mxu0 0
    %1900 = vmatprep.subr.bf16.mxu0 0
    %1901 = vmatpush2.bf16.msra.mxu0 0
    %1902 = vmatprep.subr.bf16.mxu0 0
    %1903 = vmatpush2.bf16.msra.mxu0 0
    %1904 = vmatprep.subr.bf16.mxu0 0
    %1905 = vmatpush2.bf16.msra.mxu0 0
    %1906 = vmatprep.subr.bf16.mxu0 0
    %1907 = vmatpush2.bf16.msra.mxu0 0
    %1908 = vmatprep.subr.bf16.mxu0 0
    %1909 = vmatpush2.bf16.msra.mxu0 0
    %1910 = vmatprep.subr.bf16.mxu0 0
    %1911 = vmatpush2.bf16.msra.mxu0 0
    %1912 = vmatprep.subr.bf16.mxu0 0
    %1913 = vmatpush2.bf16.msra.mxu0 0
    %1914 = vmatprep.mubr.bf16.mxu0 0
    %1915 = vmatmul.mubr.bf16.gmra.mxu0 %v1805
    %v1916 = vpop.f32.mrf.mxu0
    %v1917 = vadd.f32 0.0, %v1916
    %v1918 = vpop.f32.mrf.mxu0
    %v1919 = vpop.f32.mrf.mxu0
    %v1920 = vadd.f32 0.0, %v1919
    %v1921 = vpop.f32.mrf.mxu0
    %1922 = vdwg.mxu0
    %v1923 = vadd.f32 %v1816, %v1917
    %v1924 = vadd.f32 %v1817, %v1920
    %v1925 = vtanh.pop %v1923
    %v1926 = vtanh.pop %v1924
    %v1927 = vpack.c.bf16 %v1926, %v1925
    %v1929 = vunpack.c.l.b16 %v1927
    %v1930 = vunpack.c.h.b16 %v1927
    %v1931 = vpack.c.b16 %v1929, %v1929
    %v1932 = vpack.c.b16 %v1930, %v1930
    %s1935 = scalar_lea.vmem %s6, 16
    %1936 = vst [vmem:[%s1935] sm:$0xf] %v1931
    %1937 = vst [vmem:[%s1935 + $0x4] sm:$0xf] %v1932
    %v1938 = vld [vmem:[%s686] sm:$0xff]
    %v1939 = vld [vmem:[%s686 + $0x8] sm:$0xff]
    %v1940 = vld [vmem:[%s1574] sm:$0xf]
    %v1941 = vld [vmem:[%s1574 + $0x4] sm:$0xf]
    %v1942 = vld [vmem:[%s1574 + $0x8] sm:$0xf]
    %v1943 = vld [vmem:[%s1574 + $0xc] sm:$0xf]
    %v1944 = vld [vmem:[%s1574 + $0x10] sm:$0xf]
    %v1945 = vld [vmem:[%s1574 + $0x14] sm:$0xf]
    %v1946 = vld [vmem:[%s1574 + $0x18] sm:$0xf]
    %v1947 = vld [vmem:[%s1574 + $0x1c] sm:$0xf]
    %v1948 = vld [vmem:[%s1574 + $0x20] sm:$0xf]
    %v1949 = vld [vmem:[%s1574 + $0x24] sm:$0xf]
    %v1950 = vld [vmem:[%s1574 + $0x28] sm:$0xf]
    %v1951 = vld [vmem:[%s1574 + $0x2c] sm:$0xf]
    %v1952 = vld [vmem:[%s1574 + $0x30] sm:$0xf]
    %v1953 = vld [vmem:[%s1574 + $0x34] sm:$0xf]
    %v1954 = vld [vmem:[%s1574 + $0x38] sm:$0xf]
    %v1955 = vld [vmem:[%s1574 + $0x3c] sm:$0xf]
    %v1972 = vunpack.c.l.b16 %v1940
    %v1973 = vunpack.c.l.b16 %v1941
    %v1974 = vunpack.c.l.b16 %v1942
    %v1975 = vunpack.c.l.b16 %v1943
    %v1976 = vunpack.c.l.b16 %v1944
    %v1977 = vunpack.c.l.b16 %v1945
    %v1978 = vunpack.c.l.b16 %v1946
    %v1979 = vunpack.c.l.b16 %v1947
    %v1980 = vunpack.c.l.b16 %v1948
    %v1981 = vunpack.c.l.b16 %v1949
    %v1982 = vunpack.c.l.b16 %v1950
    %v1983 = vunpack.c.l.b16 %v1951
    %v1984 = vunpack.c.l.b16 %v1952
    %v1985 = vunpack.c.l.b16 %v1953
    %v1986 = vunpack.c.l.b16 %v1954
    %v1987 = vunpack.c.l.b16 %v1955
    %v1988 = vpack.c.b16 %v1973, %v1972
    %v1989 = vpack.c.b16 %v1975, %v1974
    %v1990 = vpack.c.b16 %v1977, %v1976
    %v1991 = vpack.c.b16 %v1979, %v1978
    %v1992 = vpack.c.b16 %v1981, %v1980
    %v1993 = vpack.c.b16 %v1983, %v1982
    %v1994 = vpack.c.b16 %v1985, %v1984
    %v1995 = vpack.c.b16 %v1987, %v1986
    %2004 = vmatprep.subr.bf16.mxu0 0
    %2005 = vmatpush1.bf16.msra.mxu0 %v1995
    %2006 = vmatprep.subr.bf16.mxu0 0
    %2007 = vmatpush1.bf16.msra.mxu0 %v1994
    %2008 = vmatprep.subr.bf16.mxu0 0
    %2009 = vmatpush1.bf16.msra.mxu0 %v1993
    %2010 = vmatprep.subr.bf16.mxu0 0
    %2011 = vmatpush1.bf16.msra.mxu0 %v1992
    %2012 = vmatprep.subr.bf16.mxu0 0
    %2013 = vmatpush1.bf16.msra.mxu0 %v1991
    %2014 = vmatprep.subr.bf16.mxu0 0
    %2015 = vmatpush1.bf16.msra.mxu0 %v1990
    %2016 = vmatprep.subr.bf16.mxu0 0
    %2017 = vmatpush1.bf16.msra.mxu0 %v1989
    %2018 = vmatprep.subr.bf16.mxu0 0
    %2019 = vmatpush1.bf16.msra.mxu0 %v1988
    %2020 = vmatprep.subr.bf16.mxu0 0
    %2021 = vmatpush2.bf16.msra.mxu0 0
    %2022 = vmatprep.subr.bf16.mxu0 0
    %2023 = vmatpush2.bf16.msra.mxu0 0
    %2024 = vmatprep.subr.bf16.mxu0 0
    %2025 = vmatpush2.bf16.msra.mxu0 0
    %2026 = vmatprep.subr.bf16.mxu0 0
    %2027 = vmatpush2.bf16.msra.mxu0 0
    %2028 = vmatprep.subr.bf16.mxu0 0
    %2029 = vmatpush2.bf16.msra.mxu0 0
    %2030 = vmatprep.subr.bf16.mxu0 0
    %2031 = vmatpush2.bf16.msra.mxu0 0
    %2032 = vmatprep.subr.bf16.mxu0 0
    %2033 = vmatpush2.bf16.msra.mxu0 0
    %2034 = vmatprep.subr.bf16.mxu0 0
    %2035 = vmatpush2.bf16.msra.mxu0 0
    %2036 = vmatprep.mubr.bf16.mxu0 0
    %2037 = vmatmul.mubr.bf16.gmra.mxu0 %v1927
    %v2038 = vpop.f32.mrf.mxu0
    %v2039 = vadd.f32 0.0, %v2038
    %v2040 = vpop.f32.mrf.mxu0
    %v2041 = vpop.f32.mrf.mxu0
    %v2042 = vadd.f32 0.0, %v2041
    %v2043 = vpop.f32.mrf.mxu0
    %2044 = vdwg.mxu0
    %v2045 = vadd.f32 %v1938, %v2039
    %v2046 = vadd.f32 %v1939, %v2042
    %v2047 = vtanh.pop %v2045
    %v2048 = vtanh.pop %v2046
    %v2049 = vpack.c.bf16 %v2048, %v2047
    %v2051 = vunpack.c.l.b16 %v2049
    %v2052 = vunpack.c.h.b16 %v2049
    %v2053 = vpack.c.b16 %v2051, %v2051
    %v2054 = vpack.c.b16 %v2052, %v2052
    %s2057 = scalar_lea.vmem %s6, 24
    %2058 = vst [vmem:[%s2057] sm:$0xf] %v2053
    %2059 = vst [vmem:[%s2057 + $0x4] sm:$0xf] %v2054
    %v2060 = vld [vmem:[%s809] sm:$0xff]
    %v2061 = vld [vmem:[%s809 + $0x8] sm:$0xff]
    %v2062 = vld [vmem:[%s1574] sm:$0xf]
    %v2063 = vld [vmem:[%s1574 + $0x4] sm:$0xf]
    %v2064 = vld [vmem:[%s1574 + $0x8] sm:$0xf]
    %v2065 = vld [vmem:[%s1574 + $0xc] sm:$0xf]
    %v2066 = vld [vmem:[%s1574 + $0x10] sm:$0xf]
    %v2067 = vld [vmem:[%s1574 + $0x14] sm:$0xf]
    %v2068 = vld [vmem:[%s1574 + $0x18] sm:$0xf]
    %v2069 = vld [vmem:[%s1574 + $0x1c] sm:$0xf]
    %v2070 = vld [vmem:[%s1574 + $0x20] sm:$0xf]
    %v2071 = vld [vmem:[%s1574 + $0x24] sm:$0xf]
    %v2072 = vld [vmem:[%s1574 + $0x28] sm:$0xf]
    %v2073 = vld [vmem:[%s1574 + $0x2c] sm:$0xf]
    %v2074 = vld [vmem:[%s1574 + $0x30] sm:$0xf]
    %v2075 = vld [vmem:[%s1574 + $0x34] sm:$0xf]
    %v2076 = vld [vmem:[%s1574 + $0x38] sm:$0xf]
    %v2077 = vld [vmem:[%s1574 + $0x3c] sm:$0xf]
    %v2094 = vunpack.c.l.b16 %v2062
    %v2095 = vunpack.c.l.b16 %v2063
    %v2096 = vunpack.c.l.b16 %v2064
    %v2097 = vunpack.c.l.b16 %v2065
    %v2098 = vunpack.c.l.b16 %v2066
    %v2099 = vunpack.c.l.b16 %v2067
    %v2100 = vunpack.c.l.b16 %v2068
    %v2101 = vunpack.c.l.b16 %v2069
    %v2102 = vunpack.c.l.b16 %v2070
    %v2103 = vunpack.c.l.b16 %v2071
    %v2104 = vunpack.c.l.b16 %v2072
    %v2105 = vunpack.c.l.b16 %v2073
    %v2106 = vunpack.c.l.b16 %v2074
    %v2107 = vunpack.c.l.b16 %v2075
    %v2108 = vunpack.c.l.b16 %v2076
    %v2109 = vunpack.c.l.b16 %v2077
    %v2110 = vpack.c.b16 %v2095, %v2094
    %v2111 = vpack.c.b16 %v2097, %v2096
    %v2112 = vpack.c.b16 %v2099, %v2098
    %v2113 = vpack.c.b16 %v2101, %v2100
    %v2114 = vpack.c.b16 %v2103, %v2102
    %v2115 = vpack.c.b16 %v2105, %v2104
    %v2116 = vpack.c.b16 %v2107, %v2106
    %v2117 = vpack.c.b16 %v2109, %v2108
    %2126 = vmatprep.subr.bf16.mxu0 0
    %2127 = vmatpush1.bf16.msra.mxu0 %v2117
    %2128 = vmatprep.subr.bf16.mxu0 0
    %2129 = vmatpush1.bf16.msra.mxu0 %v2116
    %2130 = vmatprep.subr.bf16.mxu0 0
    %2131 = vmatpush1.bf16.msra.mxu0 %v2115
    %2132 = vmatprep.subr.bf16.mxu0 0
    %2133 = vmatpush1.bf16.msra.mxu0 %v2114
    %2134 = vmatprep.subr.bf16.mxu0 0
    %2135 = vmatpush1.bf16.msra.mxu0 %v2113
    %2136 = vmatprep.subr.bf16.mxu0 0
    %2137 = vmatpush1.bf16.msra.mxu0 %v2112
    %2138 = vmatprep.subr.bf16.mxu0 0
    %2139 = vmatpush1.bf16.msra.mxu0 %v2111
    %2140 = vmatprep.subr.bf16.mxu0 0
    %2141 = vmatpush1.bf16.msra.mxu0 %v2110
    %2142 = vmatprep.subr.bf16.mxu0 0
    %2143 = vmatpush2.bf16.msra.mxu0 0
    %2144 = vmatprep.subr.bf16.mxu0 0
    %2145 = vmatpush2.bf16.msra.mxu0 0
    %2146 = vmatprep.subr.bf16.mxu0 0
    %2147 = vmatpush2.bf16.msra.mxu0 0
    %2148 = vmatprep.subr.bf16.mxu0 0
    %2149 = vmatpush2.bf16.msra.mxu0 0
    %2150 = vmatprep.subr.bf16.mxu0 0
    %2151 = vmatpush2.bf16.msra.mxu0 0
    %2152 = vmatprep.subr.bf16.mxu0 0
    %2153 = vmatpush2.bf16.msra.mxu0 0
    %2154 = vmatprep.subr.bf16.mxu0 0
    %2155 = vmatpush2.bf16.msra.mxu0 0
    %2156 = vmatprep.subr.bf16.mxu0 0
    %2157 = vmatpush2.bf16.msra.mxu0 0
    %2158 = vmatprep.mubr.bf16.mxu0 0
    %2159 = vmatmul.mubr.bf16.gmra.mxu0 %v2049
    %v2160 = vpop.f32.mrf.mxu0
    %v2161 = vadd.f32 0.0, %v2160
    %v2162 = vpop.f32.mrf.mxu0
    %v2163 = vpop.f32.mrf.mxu0
    %v2164 = vadd.f32 0.0, %v2163
    %v2165 = vpop.f32.mrf.mxu0
    %2166 = vdwg.mxu0
    %v2167 = vadd.f32 %v2060, %v2161
    %v2168 = vadd.f32 %v2061, %v2164
    %v2169 = vtanh.pop %v2167
    %v2170 = vtanh.pop %v2168
    %v2171 = vpack.c.bf16 %v2170, %v2169
    %v2173 = vunpack.c.l.b16 %v2171
    %v2174 = vunpack.c.h.b16 %v2171
    %v2175 = vpack.c.b16 %v2173, %v2173
    %v2176 = vpack.c.b16 %v2174, %v2174
    %s2179 = scalar_lea.vmem %s6, 32
    %2180 = vst [vmem:[%s2179] sm:$0xf] %v2175
    %2181 = vst [vmem:[%s2179 + $0x4] sm:$0xf] %v2176
    %v2182 = vld [vmem:[%s932] sm:$0xff]
    %v2183 = vld [vmem:[%s932 + $0x8] sm:$0xff]
    %v2184 = vld [vmem:[%s1574] sm:$0xf]
    %v2185 = vld [vmem:[%s1574 + $0x4] sm:$0xf]
    %v2186 = vld [vmem:[%s1574 + $0x8] sm:$0xf]
    %v2187 = vld [vmem:[%s1574 + $0xc] sm:$0xf]
    %v2188 = vld [vmem:[%s1574 + $0x10] sm:$0xf]
    %v2189 = vld [vmem:[%s1574 + $0x14] sm:$0xf]
    %v2190 = vld [vmem:[%s1574 + $0x18] sm:$0xf]
    %v2191 = vld [vmem:[%s1574 + $0x1c] sm:$0xf]
    %v2192 = vld [vmem:[%s1574 + $0x20] sm:$0xf]
    %v2193 = vld [vmem:[%s1574 + $0x24] sm:$0xf]
    %v2194 = vld [vmem:[%s1574 + $0x28] sm:$0xf]
    %v2195 = vld [vmem:[%s1574 + $0x2c] sm:$0xf]
    %v2196 = vld [vmem:[%s1574 + $0x30] sm:$0xf]
    %v2197 = vld [vmem:[%s1574 + $0x34] sm:$0xf]
    %v2198 = vld [vmem:[%s1574 + $0x38] sm:$0xf]
    %v2199 = vld [vmem:[%s1574 + $0x3c] sm:$0xf]
    %v2216 = vunpack.c.l.b16 %v2184
    %v2217 = vunpack.c.l.b16 %v2185
    %v2218 = vunpack.c.l.b16 %v2186
    %v2219 = vunpack.c.l.b16 %v2187
    %v2220 = vunpack.c.l.b16 %v2188
    %v2221 = vunpack.c.l.b16 %v2189
    %v2222 = vunpack.c.l.b16 %v2190
    %v2223 = vunpack.c.l.b16 %v2191
    %v2224 = vunpack.c.l.b16 %v2192
    %v2225 = vunpack.c.l.b16 %v2193
    %v2226 = vunpack.c.l.b16 %v2194
    %v2227 = vunpack.c.l.b16 %v2195
    %v2228 = vunpack.c.l.b16 %v2196
    %v2229 = vunpack.c.l.b16 %v2197
    %v2230 = vunpack.c.l.b16 %v2198
    %v2231 = vunpack.c.l.b16 %v2199
    %v2232 = vpack.c.b16 %v2217, %v2216
    %v2233 = vpack.c.b16 %v2219, %v2218
    %v2234 = vpack.c.b16 %v2221, %v2220
    %v2235 = vpack.c.b16 %v2223, %v2222
    %v2236 = vpack.c.b16 %v2225, %v2224
    %v2237 = vpack.c.b16 %v2227, %v2226
    %v2238 = vpack.c.b16 %v2229, %v2228
    %v2239 = vpack.c.b16 %v2231, %v2230
    %2248 = vmatprep.subr.bf16.mxu0 0
    %2249 = vmatpush1.bf16.msra.mxu0 %v2239
    %2250 = vmatprep.subr.bf16.mxu0 0
    %2251 = vmatpush1.bf16.msra.mxu0 %v2238
    %2252 = vmatprep.subr.bf16.mxu0 0
    %2253 = vmatpush1.bf16.msra.mxu0 %v2237
    %2254 = vmatprep.subr.bf16.mxu0 0
    %2255 = vmatpush1.bf16.msra.mxu0 %v2236
    %2256 = vmatprep.subr.bf16.mxu0 0
    %2257 = vmatpush1.bf16.msra.mxu0 %v2235
    %2258 = vmatprep.subr.bf16.mxu0 0
    %2259 = vmatpush1.bf16.msra.mxu0 %v2234
    %2260 = vmatprep.subr.bf16.mxu0 0
    %2261 = vmatpush1.bf16.msra.mxu0 %v2233
    %2262 = vmatprep.subr.bf16.mxu0 0
    %2263 = vmatpush1.bf16.msra.mxu0 %v2232
    %2264 = vmatprep.subr.bf16.mxu0 0
    %2265 = vmatpush2.bf16.msra.mxu0 0
    %2266 = vmatprep.subr.bf16.mxu0 0
    %2267 = vmatpush2.bf16.msra.mxu0 0
    %2268 = vmatprep.subr.bf16.mxu0 0
    %2269 = vmatpush2.bf16.msra.mxu0 0
    %2270 = vmatprep.subr.bf16.mxu0 0
    %2271 = vmatpush2.bf16.msra.mxu0 0
    %2272 = vmatprep.subr.bf16.mxu0 0
    %2273 = vmatpush2.bf16.msra.mxu0 0
    %2274 = vmatprep.subr.bf16.mxu0 0
    %2275 = vmatpush2.bf16.msra.mxu0 0
    %2276 = vmatprep.subr.bf16.mxu0 0
    %2277 = vmatpush2.bf16.msra.mxu0 0
    %2278 = vmatprep.subr.bf16.mxu0 0
    %2279 = vmatpush2.bf16.msra.mxu0 0
    %2280 = vmatprep.mubr.bf16.mxu0 0
    %2281 = vmatmul.mubr.bf16.gmra.mxu0 %v2171
    %v2282 = vpop.f32.mrf.mxu0
    %v2283 = vadd.f32 0.0, %v2282
    %v2284 = vpop.f32.mrf.mxu0
    %v2285 = vpop.f32.mrf.mxu0
    %v2286 = vadd.f32 0.0, %v2285
    %v2287 = vpop.f32.mrf.mxu0
    %2288 = vdwg.mxu0
    %v2289 = vadd.f32 %v2182, %v2283
    %v2290 = vadd.f32 %v2183, %v2286
    %v2291 = vtanh.pop %v2289
    %v2292 = vtanh.pop %v2290
    %v2293 = vpack.c.bf16 %v2292, %v2291
    %v2295 = vunpack.c.l.b16 %v2293
    %v2296 = vunpack.c.h.b16 %v2293
    %v2297 = vpack.c.b16 %v2295, %v2295
    %v2298 = vpack.c.b16 %v2296, %v2296
    %s2301 = scalar_lea.vmem %s6, 40
    %2302 = vst [vmem:[%s2301] sm:$0xf] %v2297
    %2303 = vst [vmem:[%s2301 + $0x4] sm:$0xf] %v2298
    %v2304 = vld [vmem:[%s1055] sm:$0xff]
    %v2305 = vld [vmem:[%s1055 + $0x8] sm:$0xff]
    %v2306 = vld [vmem:[%s1574] sm:$0xf]
    %v2307 = vld [vmem:[%s1574 + $0x4] sm:$0xf]
    %v2308 = vld [vmem:[%s1574 + $0x8] sm:$0xf]
    %v2309 = vld [vmem:[%s1574 + $0xc] sm:$0xf]
    %v2310 = vld [vmem:[%s1574 + $0x10] sm:$0xf]
    %v2311 = vld [vmem:[%s1574 + $0x14] sm:$0xf]
    %v2312 = vld [vmem:[%s1574 + $0x18] sm:$0xf]
    %v2313 = vld [vmem:[%s1574 + $0x1c] sm:$0xf]
    %v2314 = vld [vmem:[%s1574 + $0x20] sm:$0xf]
    %v2315 = vld [vmem:[%s1574 + $0x24] sm:$0xf]
    %v2316 = vld [vmem:[%s1574 + $0x28] sm:$0xf]
    %v2317 = vld [vmem:[%s1574 + $0x2c] sm:$0xf]
    %v2318 = vld [vmem:[%s1574 + $0x30] sm:$0xf]
    %v2319 = vld [vmem:[%s1574 + $0x34] sm:$0xf]
    %v2320 = vld [vmem:[%s1574 + $0x38] sm:$0xf]
    %v2321 = vld [vmem:[%s1574 + $0x3c] sm:$0xf]
    %v2338 = vunpack.c.l.b16 %v2306
    %v2339 = vunpack.c.l.b16 %v2307
    %v2340 = vunpack.c.l.b16 %v2308
    %v2341 = vunpack.c.l.b16 %v2309
    %v2342 = vunpack.c.l.b16 %v2310
    %v2343 = vunpack.c.l.b16 %v2311
    %v2344 = vunpack.c.l.b16 %v2312
    %v2345 = vunpack.c.l.b16 %v2313
    %v2346 = vunpack.c.l.b16 %v2314
    %v2347 = vunpack.c.l.b16 %v2315
    %v2348 = vunpack.c.l.b16 %v2316
    %v2349 = vunpack.c.l.b16 %v2317
    %v2350 = vunpack.c.l.b16 %v2318
    %v2351 = vunpack.c.l.b16 %v2319
    %v2352 = vunpack.c.l.b16 %v2320
    %v2353 = vunpack.c.l.b16 %v2321
    %v2354 = vpack.c.b16 %v2339, %v2338
    %v2355 = vpack.c.b16 %v2341, %v2340
    %v2356 = vpack.c.b16 %v2343, %v2342
    %v2357 = vpack.c.b16 %v2345, %v2344
    %v2358 = vpack.c.b16 %v2347, %v2346
    %v2359 = vpack.c.b16 %v2349, %v2348
    %v2360 = vpack.c.b16 %v2351, %v2350
    %v2361 = vpack.c.b16 %v2353, %v2352
    %2370 = vmatprep.subr.bf16.mxu0 0
    %2371 = vmatpush1.bf16.msra.mxu0 %v2361
    %2372 = vmatprep.subr.bf16.mxu0 0
    %2373 = vmatpush1.bf16.msra.mxu0 %v2360
    %2374 = vmatprep.subr.bf16.mxu0 0
    %2375 = vmatpush1.bf16.msra.mxu0 %v2359
    %2376 = vmatprep.subr.bf16.mxu0 0
    %2377 = vmatpush1.bf16.msra.mxu0 %v2358
    %2378 = vmatprep.subr.bf16.mxu0 0
    %2379 = vmatpush1.bf16.msra.mxu0 %v2357
    %2380 = vmatprep.subr.bf16.mxu0 0
    %2381 = vmatpush1.bf16.msra.mxu0 %v2356
    %2382 = vmatprep.subr.bf16.mxu0 0
    %2383 = vmatpush1.bf16.msra.mxu0 %v2355
    %2384 = vmatprep.subr.bf16.mxu0 0
    %2385 = vmatpush1.bf16.msra.mxu0 %v2354
    %2386 = vmatprep.subr.bf16.mxu0 0
    %2387 = vmatpush2.bf16.msra.mxu0 0
    %2388 = vmatprep.subr.bf16.mxu0 0
    %2389 = vmatpush2.bf16.msra.mxu0 0
    %2390 = vmatprep.subr.bf16.mxu0 0
    %2391 = vmatpush2.bf16.msra.mxu0 0
    %2392 = vmatprep.subr.bf16.mxu0 0
    %2393 = vmatpush2.bf16.msra.mxu0 0
    %2394 = vmatprep.subr.bf16.mxu0 0
    %2395 = vmatpush2.bf16.msra.mxu0 0
    %2396 = vmatprep.subr.bf16.mxu0 0
    %2397 = vmatpush2.bf16.msra.mxu0 0
    %2398 = vmatprep.subr.bf16.mxu0 0
    %2399 = vmatpush2.bf16.msra.mxu0 0
    %2400 = vmatprep.subr.bf16.mxu0 0
    %2401 = vmatpush2.bf16.msra.mxu0 0
    %2402 = vmatprep.mubr.bf16.mxu0 0
    %2403 = vmatmul.mubr.bf16.gmra.mxu0 %v2293
    %v2404 = vpop.f32.mrf.mxu0
    %v2405 = vadd.f32 0.0, %v2404
    %v2406 = vpop.f32.mrf.mxu0
    %v2407 = vpop.f32.mrf.mxu0
    %v2408 = vadd.f32 0.0, %v2407
    %v2409 = vpop.f32.mrf.mxu0
    %2410 = vdwg.mxu0
    %v2411 = vadd.f32 %v2304, %v2405
    %v2412 = vadd.f32 %v2305, %v2408
    %v2413 = vtanh.pop %v2411
    %v2414 = vtanh.pop %v2412
    %v2415 = vpack.c.bf16 %v2414, %v2413
    %v2417 = vunpack.c.l.b16 %v2415
    %v2418 = vunpack.c.h.b16 %v2415
    %v2419 = vpack.c.b16 %v2417, %v2417
    %v2420 = vpack.c.b16 %v2418, %v2418
    %s2423 = scalar_lea.vmem %s6, 48
    %2424 = vst [vmem:[%s2423] sm:$0xf] %v2419
    %2425 = vst [vmem:[%s2423 + $0x4] sm:$0xf] %v2420
    %v2426 = vld [vmem:[%s1178] sm:$0xff]
    %v2427 = vld [vmem:[%s1178 + $0x8] sm:$0xff]
    %v2428 = vld [vmem:[%s1574] sm:$0xf]
    %v2429 = vld [vmem:[%s1574 + $0x4] sm:$0xf]
    %v2430 = vld [vmem:[%s1574 + $0x8] sm:$0xf]
    %v2431 = vld [vmem:[%s1574 + $0xc] sm:$0xf]
    %v2432 = vld [vmem:[%s1574 + $0x10] sm:$0xf]
    %v2433 = vld [vmem:[%s1574 + $0x14] sm:$0xf]
    %v2434 = vld [vmem:[%s1574 + $0x18] sm:$0xf]
    %v2435 = vld [vmem:[%s1574 + $0x1c] sm:$0xf]
    %v2436 = vld [vmem:[%s1574 + $0x20] sm:$0xf]
    %v2437 = vld [vmem:[%s1574 + $0x24] sm:$0xf]
    %v2438 = vld [vmem:[%s1574 + $0x28] sm:$0xf]
    %v2439 = vld [vmem:[%s1574 + $0x2c] sm:$0xf]
    %v2440 = vld [vmem:[%s1574 + $0x30] sm:$0xf]
    %v2441 = vld [vmem:[%s1574 + $0x34] sm:$0xf]
    %v2442 = vld [vmem:[%s1574 + $0x38] sm:$0xf]
    %v2443 = vld [vmem:[%s1574 + $0x3c] sm:$0xf]
    %v2460 = vunpack.c.l.b16 %v2428
    %v2461 = vunpack.c.l.b16 %v2429
    %v2462 = vunpack.c.l.b16 %v2430
    %v2463 = vunpack.c.l.b16 %v2431
    %v2464 = vunpack.c.l.b16 %v2432
    %v2465 = vunpack.c.l.b16 %v2433
    %v2466 = vunpack.c.l.b16 %v2434
    %v2467 = vunpack.c.l.b16 %v2435
    %v2468 = vunpack.c.l.b16 %v2436
    %v2469 = vunpack.c.l.b16 %v2437
    %v2470 = vunpack.c.l.b16 %v2438
    %v2471 = vunpack.c.l.b16 %v2439
    %v2472 = vunpack.c.l.b16 %v2440
    %v2473 = vunpack.c.l.b16 %v2441
    %v2474 = vunpack.c.l.b16 %v2442
    %v2475 = vunpack.c.l.b16 %v2443
    %v2476 = vpack.c.b16 %v2461, %v2460
    %v2477 = vpack.c.b16 %v2463, %v2462
    %v2478 = vpack.c.b16 %v2465, %v2464
    %v2479 = vpack.c.b16 %v2467, %v2466
    %v2480 = vpack.c.b16 %v2469, %v2468
    %v2481 = vpack.c.b16 %v2471, %v2470
    %v2482 = vpack.c.b16 %v2473, %v2472
    %v2483 = vpack.c.b16 %v2475, %v2474
    %2492 = vmatprep.subr.bf16.mxu0 0
    %2493 = vmatpush1.bf16.msra.mxu0 %v2483
    %2494 = vmatprep.subr.bf16.mxu0 0
    %2495 = vmatpush1.bf16.msra.mxu0 %v2482
    %2496 = vmatprep.subr.bf16.mxu0 0
    %2497 = vmatpush1.bf16.msra.mxu0 %v2481
    %2498 = vmatprep.subr.bf16.mxu0 0
    %2499 = vmatpush1.bf16.msra.mxu0 %v2480
    %2500 = vmatprep.subr.bf16.mxu0 0
    %2501 = vmatpush1.bf16.msra.mxu0 %v2479
    %2502 = vmatprep.subr.bf16.mxu0 0
    %2503 = vmatpush1.bf16.msra.mxu0 %v2478
    %2504 = vmatprep.subr.bf16.mxu0 0
    %2505 = vmatpush1.bf16.msra.mxu0 %v2477
    %2506 = vmatprep.subr.bf16.mxu0 0
    %2507 = vmatpush1.bf16.msra.mxu0 %v2476
    %2508 = vmatprep.subr.bf16.mxu0 0
    %2509 = vmatpush2.bf16.msra.mxu0 0
    %2510 = vmatprep.subr.bf16.mxu0 0
    %2511 = vmatpush2.bf16.msra.mxu0 0
    %2512 = vmatprep.subr.bf16.mxu0 0
    %2513 = vmatpush2.bf16.msra.mxu0 0
    %2514 = vmatprep.subr.bf16.mxu0 0
    %2515 = vmatpush2.bf16.msra.mxu0 0
    %2516 = vmatprep.subr.bf16.mxu0 0
    %2517 = vmatpush2.bf16.msra.mxu0 0
    %2518 = vmatprep.subr.bf16.mxu0 0
    %2519 = vmatpush2.bf16.msra.mxu0 0
    %2520 = vmatprep.subr.bf16.mxu0 0
    %2521 = vmatpush2.bf16.msra.mxu0 0
    %2522 = vmatprep.subr.bf16.mxu0 0
    %2523 = vmatpush2.bf16.msra.mxu0 0
    %2524 = vmatprep.mubr.bf16.mxu0 0
    %2525 = vmatmul.mubr.bf16.gmra.mxu0 %v2415
    %v2526 = vpop.f32.mrf.mxu0
    %v2527 = vadd.f32 0.0, %v2526
    %v2528 = vpop.f32.mrf.mxu0
    %v2529 = vpop.f32.mrf.mxu0
    %v2530 = vadd.f32 0.0, %v2529
    %v2531 = vpop.f32.mrf.mxu0
    %2532 = vdwg.mxu0
    %v2533 = vadd.f32 %v2426, %v2527
    %v2534 = vadd.f32 %v2427, %v2530
    %v2535 = vtanh.pop %v2533
    %v2536 = vtanh.pop %v2534
    %v2537 = vpack.c.bf16 %v2536, %v2535
    %v2539 = vunpack.c.l.b16 %v2537
    %v2540 = vunpack.c.h.b16 %v2537
    %v2541 = vpack.c.b16 %v2539, %v2539
    %v2542 = vpack.c.b16 %v2540, %v2540
    %s2545 = scalar_lea.vmem %s6, 56
    %2546 = vst [vmem:[%s2545] sm:$0xf] %v2541
    %2547 = vst [vmem:[%s2545 + $0x4] sm:$0xf] %v2542
    %2548 = vst [vmem:[%s1568] sm:$0xff] %v2535
    %2549 = vst [vmem:[%s1568 + $0x8] sm:$0xff] %v2536
    // Predicated region
    $region34: #{rnn_lm_forward.2} parent=1 // pred_check
      %p2550 = pneg %p40
    $region35: #{rnn_lm_forward.2} parent=1 // pred_check_branch
      %2552 = sbr.rel (%p2550) target = $region37
    $region36: #{rnn_lm_forward.2} parent=1 // pred_region
      %v2553 = vld [vmem:[#allocation2] sm:$0xff]
      %v2554 = vld [vmem:[#allocation2 + $0x8] sm:$0xff]
      %v2555 = vld [vmem:[#allocation2 + $0x10] sm:$0xff]
      %v2556 = vld [vmem:[#allocation2 + $0x18] sm:$0xff]
      %2557 = vst [vmem:[%s7] sm:$0xff] %v2553
      %2558 = vst [vmem:[%s7 + $0x8] sm:$0xff] %v2554
      %2559 = vst [vmem:[%s7 + $0x10] sm:$0xff] %v2555
      %2560 = vst [vmem:[%s7 + $0x18] sm:$0xff] %v2556
    $region37: #{rnn_lm_forward.2} parent=1 // pred_fallthru
      _
    // Predicated region
    $region38: #{rnn_lm_forward.2} parent=1 // pred_check
      _
    $region39: #{rnn_lm_forward.2} parent=1 // pred_check_branch
      %2562 = sbr.rel (0) target = $region41
    $region40: #{rnn_lm_forward.2} parent=1 // pred_region
      _
    $region41: #{rnn_lm_forward.2} parent=1 // pred_fallthru
      _
    // Predicated region
    $region42: #{rnn_lm_forward.2} parent=1 // pred_check
      _
    $region43: #{rnn_lm_forward.2} parent=1 // pred_check_branch
      %2564 = sbr.rel (0) target = $region45
    $region44: #{rnn_lm_forward.2} parent=1 // pred_region
      _
    $region45: #{rnn_lm_forward.2} parent=1 // pred_fallthru
      _
    // Predicated region
    $region46: #{rnn_lm_forward.2} parent=1 // pred_check
      _
    $region47: #{rnn_lm_forward.2} parent=1 // pred_check_branch
      %2566 = sbr.rel (0) target = $region49
    $region48: #{rnn_lm_forward.2} parent=1 // pred_region
      _
    $region49: #{rnn_lm_forward.2} parent=1 // pred_fallthru
      _
    // Predicated region
    $region50: #{rnn_lm_forward.2} parent=1 // pred_check
      _
    $region51: #{rnn_lm_forward.2} parent=1 // pred_check_branch
      %2568 = sbr.rel (0) target = $region53
    $region52: #{rnn_lm_forward.2} parent=1 // pred_region
      _
    $region53: #{rnn_lm_forward.2} parent=1 // pred_fallthru
      _
    %2569 = vsyncpa [#allocation6], 1

</llo_original>
